<compile_context>
chip_gen: v6e
topology: v6e:2x2x1
jax: 0.10.0
libtpu: 0.0.40
codegen_flags: <defaults>
</compile_context>

<pallas_src>
import functools
import math

import jax
import jax.numpy as jnp
from jax.experimental import pallas as pl
from jax.experimental.pallas import tpu as pltpu

EMBED = 128
HEADS = 4
DH = EMBED // HEADS
HIDDEN = 256
NUM_LAYERS = 2
LN_EPS = 1e-5
SCALE = 1.0 / math.sqrt(DH)
VROW = 3 * EMBED          # packed-vector row width (384)


# ---------------------------------------------------------------------------
# Fused kernel: embedding gather + 2 encoder layers + mean-pool + fc + sigmoid
# for BLOCK_B batch rows per grid step.
# ---------------------------------------------------------------------------
def fused_transformer_kernel(block_b, seq_len,
                             ids_ref, emb_ref, wqkv_ref, wo_ref, w1_ref,
                             w2_ref, vec_ref, fc_ref, o_ref):
    m = block_b * seq_len
    vocab_pad = emb_ref.shape[0]

    # ---- fused embedding gather: one-hot (M, Vpad) @ (Vpad, E) on the MXU --
    ids = ids_ref[...].reshape(m, 1)                            # int32 column
    iota = jax.lax.broadcasted_iota(jnp.int32, (m, vocab_pad), 1)
    onehot = (iota == ids).astype(jnp.bfloat16)
    x = jnp.dot(onehot, emb_ref[...],
                preferred_element_type=jnp.float32)             # (M, E) f32

    for layer in range(NUM_LAYERS):                 # static unroll, 2 layers
        wqkv = wqkv_ref[layer]                      # (E, 3E)  bf16, pre-T
        wo = wo_ref[layer]                          # (E, E)   bf16, pre-T
        w1 = w1_ref[layer]                          # (E, H)   bf16, pre-T
        w2 = w2_ref[layer]                          # (H, E)   bf16, pre-T
        vec = vec_ref[layer]                        # (8, 3E)  f32 packed
        bqkv = vec[0:1, :]                          # (1, 3E)
        bo = vec[1:2, :EMBED]
        b1 = vec[2:3, :HIDDEN]
        b2 = vec[3:4, :EMBED]
        ln1g = vec[4:5, :EMBED]
        ln1b = vec[5:6, :EMBED]
        ln2g = vec[6:7, :EMBED]
        ln2b = vec[7:8, :EMBED]

        # ---- multi-head self-attention ----------------------------------
        # One wide QKV projection (M x 128 x 384) on the MXU, bf16 operands.
        qkv = jnp.dot(x.astype(jnp.bfloat16), wqkv,
                      preferred_element_type=jnp.float32) + bqkv    # (M, 3E)
        q = qkv[:, 0 * EMBED:1 * EMBED]
        k = qkv[:, 1 * EMBED:2 * EMBED]
        v = qkv[:, 2 * EMBED:3 * EMBED]

        attn = jnp.zeros((m, EMBED), jnp.float32)
        for h in range(HEADS):                      # 4 static iterations
            sl = slice(h * DH, (h + 1) * DH)
            # Leading-dim reshape (M, DH) -> (BB, S, DH) is layout-free.
            qh = q[:, sl].reshape(block_b, seq_len, DH).astype(jnp.bfloat16)
            kh = k[:, sl].reshape(block_b, seq_len, DH).astype(jnp.bfloat16)
            vh = v[:, sl].reshape(block_b, seq_len, DH).astype(jnp.bfloat16)
            s = jnp.einsum('bqd,bkd->bqk', qh, kh,
                           preferred_element_type=jnp.float32) * SCALE
            s = s - jnp.max(s, axis=-1, keepdims=True)
            p = jnp.exp(s)
            p = p * pl.reciprocal(jnp.sum(p, axis=-1, keepdims=True),
                                  approx=True)
            hv = jnp.einsum('bqk,bkd->bqd', p.astype(jnp.bfloat16), vh,
                            preferred_element_type=jnp.float32)     # (BB,S,DH)
            # Fold head-concat into the out-projection: accumulate the
            # per-head slice of Wo^T (sublane-aligned, no lane concatenate).
            attn = attn + jnp.dot(hv.reshape(m, DH).astype(jnp.bfloat16),
                                  wo[sl, :],
                                  preferred_element_type=jnp.float32)
        attn = attn + bo

        # ---- residual + LayerNorm 1 (post-norm) --------------------------
        y = x + attn
        mu = jnp.mean(y, axis=-1, keepdims=True)
        var = jnp.mean(jnp.square(y - mu), axis=-1, keepdims=True)
        y = (y - mu) * jax.lax.rsqrt(var + LN_EPS) * ln1g + ln1b

        # ---- feed-forward: Linear -> ReLU -> Linear -----------------------
        h1 = jnp.dot(y.astype(jnp.bfloat16), w1,
                     preferred_element_type=jnp.float32) + b1
        h1 = jnp.maximum(h1, 0.0)
        ff = jnp.dot(h1.astype(jnp.bfloat16), w2,
                     preferred_element_type=jnp.float32) + b2

        # ---- residual + LayerNorm 2 ---------------------------------------
        z = y + ff
        mu2 = jnp.mean(z, axis=-1, keepdims=True)
        var2 = jnp.mean(jnp.square(z - mu2), axis=-1, keepdims=True)
        x = (z - mu2) * jax.lax.rsqrt(var2 + LN_EPS) * ln2g + ln2b

    # ---- classifier head: mean over seq, Linear(E,1), sigmoid -------------
    pooled = jnp.mean(x.reshape(block_b, seq_len, EMBED), axis=1)   # (BB, E)
    fc = fc_ref[...]                                                # (8, E)
    logit = (jnp.sum(pooled * fc[0:1, :], axis=-1, keepdims=True)
             + fc[1:2, 0:1])                                        # (BB, 1)
    prob = jax.nn.sigmoid(logit)
    # Lane-dense store: broadcast each row's scalar across the 128 lanes.
    o_ref[...] = jnp.broadcast_to(prob.reshape(block_b, 1, 1),
                                  (block_b, 1, EMBED))


def _pick_block_b(batch, target=32):
    """Largest divisor of batch <= target, preferring >=2 grid steps (v7x)."""
    divisors = [d for d in range(1, batch + 1) if batch % d == 0]
    good = [d for d in divisors if d <= target and batch // d >= 2]
    if good:
        return max(good)
    small = [d for d in divisors if d <= target]
    return max(small) if small else 1


def fused_encoder_classifier(input_ids, packed, block_b=None):
    B, S = input_ids.shape
    if block_b is None:
        block_b = _pick_block_b(B)
    assert B % block_b == 0
    grid_len = B // block_b

    # ids enter as (B, S, 1) so the block's last two dims are (S, 1): sublane-
    # aligned (S=8) and full-extent on the lane dim.
    ids3 = input_ids.astype(jnp.int32).reshape(B, S, 1)

    emb = packed["emb_pad"]
    wqkv_t, wo_t = packed["wqkv_t"], packed["wo_t"]
    w1_t, w2_t = packed["w1_t"], packed["w2_t"]
    vecs, fc_pack = packed["vecs"], packed["fc_pack"]

    def bcast_spec(a):
        zeros = (0,) * a.ndim            # same (full) block every grid step
        return pl.BlockSpec(a.shape, lambda b: zeros)

    out = pl.pallas_call(
        functools.partial(fused_transformer_kernel, block_b, S),
        out_shape=jax.ShapeDtypeStruct((B, 1, EMBED), jnp.float32),
        grid=(grid_len,),
        in_specs=[pl.BlockSpec((block_b, S, 1), lambda b: (b, 0, 0)),
                  bcast_spec(emb),
                  bcast_spec(wqkv_t), bcast_spec(wo_t),
                  bcast_spec(w1_t), bcast_spec(w2_t),
                  bcast_spec(vecs), bcast_spec(fc_pack)],
        out_specs=pl.BlockSpec((block_b, 1, EMBED), lambda b: (b, 0, 0)),
        compiler_params=pltpu.CompilerParams(
            dimension_semantics=("parallel",)),
    )(ids3, emb, wqkv_t, wo_t, w1_t, w2_t, vecs, fc_pack)
    return out[:, 0, 0]                              # squeeze -> (B,)


# ---------------------------------------------------------------------------
# Parameters: PyTorch-layout init + host-side packing into kernel layout.
# ---------------------------------------------------------------------------
def init_params(key, vocab_size):
    keys = iter(jax.random.split(key, 64))

    def nrm(shape, scale=0.02):
        return scale * jax.random.normal(next(keys), shape, jnp.float32)

    params = {
        "embedding": nrm((vocab_size, EMBED), 0.1),
        "fc_w": nrm((1, EMBED)),                       # fc.weight (1, E)
        "fc_b": jnp.zeros((1,), jnp.float32),          # fc.bias
        "layers": [],
    }
    for _ in range(NUM_LAYERS):
        params["layers"].append({
            "wqkv": nrm((3 * EMBED, EMBED)),           # in_proj_weight (3E, E)
            "bqkv": jnp.zeros((3 * EMBED,), jnp.float32),
            "wo":   nrm((EMBED, EMBED)),               # out_proj.weight (E, E)
            "bo":   jnp.zeros((EMBED,), jnp.float32),
            "ln1g": jnp.ones((EMBED,), jnp.float32),
            "ln1b": jnp.zeros((EMBED,), jnp.float32),
            "w1":   nrm((HIDDEN, EMBED)),              # linear1.weight (H, E)
            "b1":   jnp.zeros((HIDDEN,), jnp.float32),
            "w2":   nrm((EMBED, HIDDEN)),              # linear2.weight (E, H)
            "b2":   jnp.zeros((EMBED,), jnp.float32),
            "ln2g": jnp.ones((EMBED,), jnp.float32),
            "ln2b": jnp.zeros((EMBED,), jnp.float32),
        })
    return params


def pack_params(params):
    """Pre-transpose matmul weights (bf16), pad vocab, pack small vectors."""
    layers = params["layers"]

    def pad_row(v):
        return jnp.pad(v, (0, VROW - v.shape[0]))

    vecs = jnp.stack([
        jnp.stack([lp["bqkv"],
                   pad_row(lp["bo"]), pad_row(lp["b1"]), pad_row(lp["b2"]),
                   pad_row(lp["ln1g"]), pad_row(lp["ln1b"]),
                   pad_row(lp["ln2g"]), pad_row(lp["ln2b"])], axis=0)
        for lp in layers], axis=0).astype(jnp.float32)          # (L, 8, 3E)

    fc_pack = jnp.zeros((8, EMBED), jnp.float32)
    fc_pack = fc_pack.at[0, :].set(params["fc_w"].reshape(-1))
    fc_pack = fc_pack.at[1, 0].set(params["fc_b"][0])

    vocab_size = params["embedding"].shape[0]
    vocab_pad = max(128, ((vocab_size + 127) // 128) * 128)
    emb_pad = jnp.zeros((vocab_pad, EMBED), jnp.float32)
    emb_pad = emb_pad.at[:vocab_size, :].set(params["embedding"])
    emb_pad = emb_pad.astype(jnp.bfloat16)                      # bf16 table

    return {
        "emb_pad": emb_pad,
        "wqkv_t": jnp.stack([lp["wqkv"].T for lp in layers]).astype(jnp.bfloat16),
        "wo_t":   jnp.stack([lp["wo"].T for lp in layers]).astype(jnp.bfloat16),
        "w1_t":   jnp.stack([lp["w1"].T for lp in layers]).astype(jnp.bfloat16),
        "w2_t":   jnp.stack([lp["w2"].T for lp in layers]).astype(jnp.bfloat16),
        "vecs": vecs,
        "fc_pack": fc_pack,
    }


def transformer_classifier_forward(packed, input_ids):
    # Embedding gather, both encoder layers and the classifier head all run in
    # the single fused pallas_call (no intermediate HBM activations).
    return fused_encoder_classifier(input_ids, packed)          # (B,)


if __name__ == "__main__":
    key = jax.random.PRNGKey(0)
    pkey, dkey = jax.random.split(key)

    vocab_size = 50
    B, S = 2, 8

    params = init_params(pkey, vocab_size)
    packed = pack_params(params)
    input_ids = jax.random.randint(dkey, (B, S), 0, vocab_size, dtype=jnp.int32)

    fwd = jax.jit(transformer_classifier_forward)
    out = jax.block_until_ready(fwd(packed, input_ids))

    assert out.shape == (B,)
    assert bool(jnp.all((out >= 0.0) & (out <= 1.0)))
    print("KERNEL_OK")
</pallas_src>

<mosaic_0001>
module attributes {stable_mosaic.version = 11 : i64} {
  func.func @fused_transformer_kernel(%arg0: i32, %arg1: memref<1x8x1xi32, #tpu.memory_space<vmem>>, %arg2: memref<128x128xbf16, #tpu.memory_space<vmem>>, %arg3: memref<2x128x384xbf16, #tpu.memory_space<vmem>>, %arg4: memref<2x128x128xbf16, #tpu.memory_space<vmem>>, %arg5: memref<2x128x256xbf16, #tpu.memory_space<vmem>>, %arg6: memref<2x256x128xbf16, #tpu.memory_space<vmem>>, %arg7: memref<2x8x384xf32, #tpu.memory_space<vmem>>, %arg8: memref<8x128xf32, #tpu.memory_space<vmem>>, %arg9: memref<1x1x128xf32, #tpu.memory_space<vmem>>) attributes {dimension_semantics = [#tpu.dimension_semantics<parallel>], iteration_bounds = array<i64: 2>, scalar_prefetch = 0 : i64, scratch_operands = 0 : i64, tpu.core_type = #tpu.core_type<tc>, window_params = [{transform_indices = @transform_0, window_bounds = array<i64: 1, 8, 1>}, {pipeline_mode = #tpu.pipeline_mode<synchronous>, transform_indices = @transform_1, window_bounds = array<i64: 128, 128>}, {pipeline_mode = #tpu.pipeline_mode<synchronous>, transform_indices = @transform_2, window_bounds = array<i64: 2, 128, 384>}, {pipeline_mode = #tpu.pipeline_mode<synchronous>, transform_indices = @transform_3, window_bounds = array<i64: 2, 128, 128>}, {pipeline_mode = #tpu.pipeline_mode<synchronous>, transform_indices = @transform_4, window_bounds = array<i64: 2, 128, 256>}, {pipeline_mode = #tpu.pipeline_mode<synchronous>, transform_indices = @transform_5, window_bounds = array<i64: 2, 256, 128>}, {pipeline_mode = #tpu.pipeline_mode<synchronous>, transform_indices = @transform_6, window_bounds = array<i64: 2, 8, 384>}, {pipeline_mode = #tpu.pipeline_mode<synchronous>, transform_indices = @transform_7, window_bounds = array<i64: 8, 128>}, {transform_indices = @transform_8, window_bounds = array<i64: 1, 1, 128>}]} {
    %c0 = arith.constant 0 : index
    %c0_0 = arith.constant 0 : index
    %c0_1 = arith.constant 0 : index
    %0 = vector.load %arg1[%c0, %c0_0, %c0_1] : memref<1x8x1xi32, #tpu.memory_space<vmem>>, vector<1x8x1xi32>
    %1 = vector.shape_cast %0 : vector<1x8x1xi32> to vector<8x1xi32>
    %2 = tpu.iota {dimensions = array<i32: 1>} : vector<8x128xi32>
    %3 = vector.broadcast %1 : vector<8x1xi32> to vector<8x128xi32>
    %4 = arith.cmpi eq, %2, %3 : vector<8x128xi32>
    %5 = arith.extui %4 : vector<8x128xi1> to vector<8x128xi32>
    %6 = arith.sitofp %5 : vector<8x128xi32> to vector<8x128xf32>
    %7 = arith.truncf %6 : vector<8x128xf32> to vector<8x128xbf16>
    %c0_2 = arith.constant 0 : index
    %c0_3 = arith.constant 0 : index
    %8 = vector.load %arg2[%c0_2, %c0_3] : memref<128x128xbf16, #tpu.memory_space<vmem>>, vector<128x128xbf16>
    %cst = arith.constant dense<0.000000e+00> : vector<8x128xf32>
    %9 = tpu.matmul %7, %8, %cst {dimension_numbers = #tpu.dot_dimension_numbers<[1], [0], [0], [1], [0, 0, 1, 1], [], []>} : vector<8x128xbf16>, vector<128x128xbf16>, vector<8x128xf32> -> vector<8x128xf32>
    %c0_4 = arith.constant 0 : index
    %c0_5 = arith.constant 0 : index
    %c0_6 = arith.constant 0 : index
    %10 = vector.load %arg3[%c0_4, %c0_5, %c0_6] : memref<2x128x384xbf16, #tpu.memory_space<vmem>>, vector<1x128x384xbf16>
    %11 = vector.shape_cast %10 : vector<1x128x384xbf16> to vector<128x384xbf16>
    %c0_7 = arith.constant 0 : index
    %c0_8 = arith.constant 0 : index
    %c0_9 = arith.constant 0 : index
    %12 = vector.load %arg4[%c0_7, %c0_8, %c0_9] : memref<2x128x128xbf16, #tpu.memory_space<vmem>>, vector<1x128x128xbf16>
    %13 = vector.shape_cast %12 : vector<1x128x128xbf16> to vector<128x128xbf16>
    %c0_10 = arith.constant 0 : index
    %c0_11 = arith.constant 0 : index
    %c0_12 = arith.constant 0 : index
    %14 = vector.load %arg5[%c0_10, %c0_11, %c0_12] : memref<2x128x256xbf16, #tpu.memory_space<vmem>>, vector<1x128x256xbf16>
    %15 = vector.shape_cast %14 : vector<1x128x256xbf16> to vector<128x256xbf16>
    %c0_13 = arith.constant 0 : index
    %c0_14 = arith.constant 0 : index
    %c0_15 = arith.constant 0 : index
    %16 = vector.load %arg6[%c0_13, %c0_14, %c0_15] : memref<2x256x128xbf16, #tpu.memory_space<vmem>>, vector<1x256x128xbf16>
    %17 = vector.shape_cast %16 : vector<1x256x128xbf16> to vector<256x128xbf16>
    %c0_16 = arith.constant 0 : index
    %c0_17 = arith.constant 0 : index
    %c0_18 = arith.constant 0 : index
    %18 = vector.load %arg7[%c0_16, %c0_17, %c0_18] : memref<2x8x384xf32, #tpu.memory_space<vmem>>, vector<1x8x384xf32>
    %19 = vector.shape_cast %18 : vector<1x8x384xf32> to vector<8x384xf32>
    %20 = vector.extract_strided_slice %19 {offsets = [0, 0], sizes = [1, 384], strides = [1, 1]} : vector<8x384xf32> to vector<1x384xf32>
    %21 = vector.extract_strided_slice %19 {offsets = [1, 0], sizes = [1, 128], strides = [1, 1]} : vector<8x384xf32> to vector<1x128xf32>
    %22 = vector.extract_strided_slice %19 {offsets = [2, 0], sizes = [1, 256], strides = [1, 1]} : vector<8x384xf32> to vector<1x256xf32>
    %23 = vector.extract_strided_slice %19 {offsets = [3, 0], sizes = [1, 128], strides = [1, 1]} : vector<8x384xf32> to vector<1x128xf32>
    %24 = vector.extract_strided_slice %19 {offsets = [4, 0], sizes = [1, 128], strides = [1, 1]} : vector<8x384xf32> to vector<1x128xf32>
    %25 = vector.extract_strided_slice %19 {offsets = [5, 0], sizes = [1, 128], strides = [1, 1]} : vector<8x384xf32> to vector<1x128xf32>
    %26 = vector.extract_strided_slice %19 {offsets = [6, 0], sizes = [1, 128], strides = [1, 1]} : vector<8x384xf32> to vector<1x128xf32>
    %27 = vector.extract_strided_slice %19 {offsets = [7, 0], sizes = [1, 128], strides = [1, 1]} : vector<8x384xf32> to vector<1x128xf32>
    %28 = arith.truncf %9 : vector<8x128xf32> to vector<8x128xbf16>
    %cst_19 = arith.constant dense<0.000000e+00> : vector<8x384xf32>
    %29 = tpu.matmul %28, %11, %cst_19 {dimension_numbers = #tpu.dot_dimension_numbers<[1], [0], [0], [1], [0, 0, 1, 1], [], []>} : vector<8x128xbf16>, vector<128x384xbf16>, vector<8x384xf32> -> vector<8x384xf32>
    %30 = vector.broadcast %20 : vector<1x384xf32> to vector<8x384xf32>
    %31 = arith.addf %29, %30 : vector<8x384xf32>
    %32 = vector.extract_strided_slice %31 {offsets = [0, 0], sizes = [8, 128], strides = [1, 1]} : vector<8x384xf32> to vector<8x128xf32>
    %33 = vector.extract_strided_slice %31 {offsets = [0, 128], sizes = [8, 128], strides = [1, 1]} : vector<8x384xf32> to vector<8x128xf32>
    %34 = vector.extract_strided_slice %31 {offsets = [0, 256], sizes = [8, 128], strides = [1, 1]} : vector<8x384xf32> to vector<8x128xf32>
    %cst_20 = arith.constant 0.000000e+00 : f32
    %35 = vector.broadcast %cst_20 : f32 to vector<8x128xf32>
    %36 = vector.extract_strided_slice %32 {offsets = [0, 0], sizes = [8, 32], strides = [1, 1]} : vector<8x128xf32> to vector<8x32xf32>
    %37 = vector.shape_cast %36 : vector<8x32xf32> to vector<1x8x32xf32>
    %38 = arith.truncf %37 : vector<1x8x32xf32> to vector<1x8x32xbf16>
    %39 = vector.extract_strided_slice %33 {offsets = [0, 0], sizes = [8, 32], strides = [1, 1]} : vector<8x128xf32> to vector<8x32xf32>
    %40 = vector.shape_cast %39 : vector<8x32xf32> to vector<1x8x32xf32>
    %41 = arith.truncf %40 : vector<1x8x32xf32> to vector<1x8x32xbf16>
    %42 = vector.extract_strided_slice %34 {offsets = [0, 0], sizes = [8, 32], strides = [1, 1]} : vector<8x128xf32> to vector<8x32xf32>
    %43 = vector.shape_cast %42 : vector<8x32xf32> to vector<1x8x32xf32>
    %44 = arith.truncf %43 : vector<1x8x32xf32> to vector<1x8x32xbf16>
    "tpu.trace_start"() <{level = 10 : i32, message = "bqd,bkd->bqk"}> : () -> ()
    %cst_21 = arith.constant dense<0.000000e+00> : vector<1x8x8xf32>
    %45 = tpu.matmul %38, %41, %cst_21 {dimension_numbers = #tpu.dot_dimension_numbers<[2], [2], [1], [1], [0, 0, 0, 1, 1, 1], [0], [0]>} : vector<1x8x32xbf16>, vector<1x8x32xbf16>, vector<1x8x8xf32> -> vector<1x8x8xf32>
    "tpu.trace_stop"() : () -> ()
    %cst_22 = arith.constant 0.176776692 : f32
    %46 = vector.broadcast %cst_22 : f32 to vector<1x8x8xf32>
    %47 = arith.mulf %45, %46 : vector<1x8x8xf32>
    %cst_23 = arith.constant dense<0xFF800000> : vector<1x8xf32>
    %48 = vector.multi_reduction <maximumf>, %47, %cst_23 [2] : vector<1x8x8xf32> to vector<1x8xf32>
    %49 = vector.shape_cast %48 : vector<1x8xf32> to vector<1x8x1xf32>
    %50 = vector.broadcast %49 : vector<1x8x1xf32> to vector<1x8x8xf32>
    %51 = arith.subf %47, %50 : vector<1x8x8xf32>
    %52 = math.exp %51 : vector<1x8x8xf32>
    %cst_24 = arith.constant dense<0.000000e+00> : vector<1x8xf32>
    %53 = vector.multi_reduction <add>, %52, %cst_24 [2] : vector<1x8x8xf32> to vector<1x8xf32>
    %54 = vector.shape_cast %53 : vector<1x8xf32> to vector<1x8x1xf32>
    %55 = tpu.reciprocal %54 {approx = true} : vector<1x8x1xf32> -> vector<1x8x1xf32>
    %56 = vector.broadcast %55 : vector<1x8x1xf32> to vector<1x8x8xf32>
    %57 = arith.mulf %52, %56 : vector<1x8x8xf32>
    %58 = arith.truncf %57 : vector<1x8x8xf32> to vector<1x8x8xbf16>
    "tpu.trace_start"() <{level = 10 : i32, message = "bqk,bkd->bqd"}> : () -> ()
    %cst_25 = arith.constant dense<0.000000e+00> : vector<1x8x32xf32>
    %59 = tpu.matmul %58, %44, %cst_25 {dimension_numbers = #tpu.dot_dimension_numbers<[2], [1], [1], [2], [0, 0, 0, 1, 1, 2], [0], [0]>} : vector<1x8x8xbf16>, vector<1x8x32xbf16>, vector<1x8x32xf32> -> vector<1x8x32xf32>
    "tpu.trace_stop"() : () -> ()
    %60 = vector.shape_cast %59 : vector<1x8x32xf32> to vector<8x32xf32>
    %61 = arith.truncf %60 : vector<8x32xf32> to vector<8x32xbf16>
    %62 = vector.extract_strided_slice %13 {offsets = [0, 0], sizes = [32, 128], strides = [1, 1]} : vector<128x128xbf16> to vector<32x128xbf16>
    %cst_26 = arith.constant dense<0.000000e+00> : vector<8x128xf32>
    %63 = tpu.matmul %61, %62, %cst_26 {dimension_numbers = #tpu.dot_dimension_numbers<[1], [0], [0], [1], [0, 0, 1, 1], [], []>} : vector<8x32xbf16>, vector<32x128xbf16>, vector<8x128xf32> -> vector<8x128xf32>
    %64 = arith.addf %35, %63 : vector<8x128xf32>
    %65 = vector.extract_strided_slice %32 {offsets = [0, 32], sizes = [8, 32], strides = [1, 1]} : vector<8x128xf32> to vector<8x32xf32>
    %66 = vector.shape_cast %65 : vector<8x32xf32> to vector<1x8x32xf32>
    %67 = arith.truncf %66 : vector<1x8x32xf32> to vector<1x8x32xbf16>
    %68 = vector.extract_strided_slice %33 {offsets = [0, 32], sizes = [8, 32], strides = [1, 1]} : vector<8x128xf32> to vector<8x32xf32>
    %69 = vector.shape_cast %68 : vector<8x32xf32> to vector<1x8x32xf32>
    %70 = arith.truncf %69 : vector<1x8x32xf32> to vector<1x8x32xbf16>
    %71 = vector.extract_strided_slice %34 {offsets = [0, 32], sizes = [8, 32], strides = [1, 1]} : vector<8x128xf32> to vector<8x32xf32>
    %72 = vector.shape_cast %71 : vector<8x32xf32> to vector<1x8x32xf32>
    %73 = arith.truncf %72 : vector<1x8x32xf32> to vector<1x8x32xbf16>
    "tpu.trace_start"() <{level = 10 : i32, message = "bqd,bkd->bqk"}> : () -> ()
    %cst_27 = arith.constant dense<0.000000e+00> : vector<1x8x8xf32>
    %74 = tpu.matmul %67, %70, %cst_27 {dimension_numbers = #tpu.dot_dimension_numbers<[2], [2], [1], [1], [0, 0, 0, 1, 1, 1], [0], [0]>} : vector<1x8x32xbf16>, vector<1x8x32xbf16>, vector<1x8x8xf32> -> vector<1x8x8xf32>
    "tpu.trace_stop"() : () -> ()
    %cst_28 = arith.constant 0.176776692 : f32
    %75 = vector.broadcast %cst_28 : f32 to vector<1x8x8xf32>
    %76 = arith.mulf %74, %75 : vector<1x8x8xf32>
    %cst_29 = arith.constant dense<0xFF800000> : vector<1x8xf32>
    %77 = vector.multi_reduction <maximumf>, %76, %cst_29 [2] : vector<1x8x8xf32> to vector<1x8xf32>
    %78 = vector.shape_cast %77 : vector<1x8xf32> to vector<1x8x1xf32>
    %79 = vector.broadcast %78 : vector<1x8x1xf32> to vector<1x8x8xf32>
    %80 = arith.subf %76, %79 : vector<1x8x8xf32>
    %81 = math.exp %80 : vector<1x8x8xf32>
    %cst_30 = arith.constant dense<0.000000e+00> : vector<1x8xf32>
    %82 = vector.multi_reduction <add>, %81, %cst_30 [2] : vector<1x8x8xf32> to vector<1x8xf32>
    %83 = vector.shape_cast %82 : vector<1x8xf32> to vector<1x8x1xf32>
    %84 = tpu.reciprocal %83 {approx = true} : vector<1x8x1xf32> -> vector<1x8x1xf32>
    %85 = vector.broadcast %84 : vector<1x8x1xf32> to vector<1x8x8xf32>
    %86 = arith.mulf %81, %85 : vector<1x8x8xf32>
    %87 = arith.truncf %86 : vector<1x8x8xf32> to vector<1x8x8xbf16>
    "tpu.trace_start"() <{level = 10 : i32, message = "bqk,bkd->bqd"}> : () -> ()
    %cst_31 = arith.constant dense<0.000000e+00> : vector<1x8x32xf32>
    %88 = tpu.matmul %87, %73, %cst_31 {dimension_numbers = #tpu.dot_dimension_numbers<[2], [1], [1], [2], [0, 0, 0, 1, 1, 2], [0], [0]>} : vector<1x8x8xbf16>, vector<1x8x32xbf16>, vector<1x8x32xf32> -> vector<1x8x32xf32>
    "tpu.trace_stop"() : () -> ()
    %89 = vector.shape_cast %88 : vector<1x8x32xf32> to vector<8x32xf32>
    %90 = arith.truncf %89 : vector<8x32xf32> to vector<8x32xbf16>
    %91 = vector.extract_strided_slice %13 {offsets = [32, 0], sizes = [32, 128], strides = [1, 1]} : vector<128x128xbf16> to vector<32x128xbf16>
    %cst_32 = arith.constant dense<0.000000e+00> : vector<8x128xf32>
    %92 = tpu.matmul %90, %91, %cst_32 {dimension_numbers = #tpu.dot_dimension_numbers<[1], [0], [0], [1], [0, 0, 1, 1], [], []>} : vector<8x32xbf16>, vector<32x128xbf16>, vector<8x128xf32> -> vector<8x128xf32>
    %93 = arith.addf %64, %92 : vector<8x128xf32>
    %94 = vector.extract_strided_slice %32 {offsets = [0, 64], sizes = [8, 32], strides = [1, 1]} : vector<8x128xf32> to vector<8x32xf32>
    %95 = vector.shape_cast %94 : vector<8x32xf32> to vector<1x8x32xf32>
    %96 = arith.truncf %95 : vector<1x8x32xf32> to vector<1x8x32xbf16>
    %97 = vector.extract_strided_slice %33 {offsets = [0, 64], sizes = [8, 32], strides = [1, 1]} : vector<8x128xf32> to vector<8x32xf32>
    %98 = vector.shape_cast %97 : vector<8x32xf32> to vector<1x8x32xf32>
    %99 = arith.truncf %98 : vector<1x8x32xf32> to vector<1x8x32xbf16>
    %100 = vector.extract_strided_slice %34 {offsets = [0, 64], sizes = [8, 32], strides = [1, 1]} : vector<8x128xf32> to vector<8x32xf32>
    %101 = vector.shape_cast %100 : vector<8x32xf32> to vector<1x8x32xf32>
    %102 = arith.truncf %101 : vector<1x8x32xf32> to vector<1x8x32xbf16>
    "tpu.trace_start"() <{level = 10 : i32, message = "bqd,bkd->bqk"}> : () -> ()
    %cst_33 = arith.constant dense<0.000000e+00> : vector<1x8x8xf32>
    %103 = tpu.matmul %96, %99, %cst_33 {dimension_numbers = #tpu.dot_dimension_numbers<[2], [2], [1], [1], [0, 0, 0, 1, 1, 1], [0], [0]>} : vector<1x8x32xbf16>, vector<1x8x32xbf16>, vector<1x8x8xf32> -> vector<1x8x8xf32>
    "tpu.trace_stop"() : () -> ()
    %cst_34 = arith.constant 0.176776692 : f32
    %104 = vector.broadcast %cst_34 : f32 to vector<1x8x8xf32>
    %105 = arith.mulf %103, %104 : vector<1x8x8xf32>
    %cst_35 = arith.constant dense<0xFF800000> : vector<1x8xf32>
    %106 = vector.multi_reduction <maximumf>, %105, %cst_35 [2] : vector<1x8x8xf32> to vector<1x8xf32>
    %107 = vector.shape_cast %106 : vector<1x8xf32> to vector<1x8x1xf32>
    %108 = vector.broadcast %107 : vector<1x8x1xf32> to vector<1x8x8xf32>
    %109 = arith.subf %105, %108 : vector<1x8x8xf32>
    %110 = math.exp %109 : vector<1x8x8xf32>
    %cst_36 = arith.constant dense<0.000000e+00> : vector<1x8xf32>
    %111 = vector.multi_reduction <add>, %110, %cst_36 [2] : vector<1x8x8xf32> to vector<1x8xf32>
    %112 = vector.shape_cast %111 : vector<1x8xf32> to vector<1x8x1xf32>
    %113 = tpu.reciprocal %112 {approx = true} : vector<1x8x1xf32> -> vector<1x8x1xf32>
    %114 = vector.broadcast %113 : vector<1x8x1xf32> to vector<1x8x8xf32>
    %115 = arith.mulf %110, %114 : vector<1x8x8xf32>
    %116 = arith.truncf %115 : vector<1x8x8xf32> to vector<1x8x8xbf16>
    "tpu.trace_start"() <{level = 10 : i32, message = "bqk,bkd->bqd"}> : () -> ()
    %cst_37 = arith.constant dense<0.000000e+00> : vector<1x8x32xf32>
    %117 = tpu.matmul %116, %102, %cst_37 {dimension_numbers = #tpu.dot_dimension_numbers<[2], [1], [1], [2], [0, 0, 0, 1, 1, 2], [0], [0]>} : vector<1x8x8xbf16>, vector<1x8x32xbf16>, vector<1x8x32xf32> -> vector<1x8x32xf32>
    "tpu.trace_stop"() : () -> ()
    %118 = vector.shape_cast %117 : vector<1x8x32xf32> to vector<8x32xf32>
    %119 = arith.truncf %118 : vector<8x32xf32> to vector<8x32xbf16>
    %120 = vector.extract_strided_slice %13 {offsets = [64, 0], sizes = [32, 128], strides = [1, 1]} : vector<128x128xbf16> to vector<32x128xbf16>
    %cst_38 = arith.constant dense<0.000000e+00> : vector<8x128xf32>
    %121 = tpu.matmul %119, %120, %cst_38 {dimension_numbers = #tpu.dot_dimension_numbers<[1], [0], [0], [1], [0, 0, 1, 1], [], []>} : vector<8x32xbf16>, vector<32x128xbf16>, vector<8x128xf32> -> vector<8x128xf32>
    %122 = arith.addf %93, %121 : vector<8x128xf32>
    %123 = vector.extract_strided_slice %32 {offsets = [0, 96], sizes = [8, 32], strides = [1, 1]} : vector<8x128xf32> to vector<8x32xf32>
    %124 = vector.shape_cast %123 : vector<8x32xf32> to vector<1x8x32xf32>
    %125 = arith.truncf %124 : vector<1x8x32xf32> to vector<1x8x32xbf16>
    %126 = vector.extract_strided_slice %33 {offsets = [0, 96], sizes = [8, 32], strides = [1, 1]} : vector<8x128xf32> to vector<8x32xf32>
    %127 = vector.shape_cast %126 : vector<8x32xf32> to vector<1x8x32xf32>
    %128 = arith.truncf %127 : vector<1x8x32xf32> to vector<1x8x32xbf16>
    %129 = vector.extract_strided_slice %34 {offsets = [0, 96], sizes = [8, 32], strides = [1, 1]} : vector<8x128xf32> to vector<8x32xf32>
    %130 = vector.shape_cast %129 : vector<8x32xf32> to vector<1x8x32xf32>
    %131 = arith.truncf %130 : vector<1x8x32xf32> to vector<1x8x32xbf16>
    "tpu.trace_start"() <{level = 10 : i32, message = "bqd,bkd->bqk"}> : () -> ()
    %cst_39 = arith.constant dense<0.000000e+00> : vector<1x8x8xf32>
    %132 = tpu.matmul %125, %128, %cst_39 {dimension_numbers = #tpu.dot_dimension_numbers<[2], [2], [1], [1], [0, 0, 0, 1, 1, 1], [0], [0]>} : vector<1x8x32xbf16>, vector<1x8x32xbf16>, vector<1x8x8xf32> -> vector<1x8x8xf32>
    "tpu.trace_stop"() : () -> ()
    %cst_40 = arith.constant 0.176776692 : f32
    %133 = vector.broadcast %cst_40 : f32 to vector<1x8x8xf32>
    %134 = arith.mulf %132, %133 : vector<1x8x8xf32>
    %cst_41 = arith.constant dense<0xFF800000> : vector<1x8xf32>
    %135 = vector.multi_reduction <maximumf>, %134, %cst_41 [2] : vector<1x8x8xf32> to vector<1x8xf32>
    %136 = vector.shape_cast %135 : vector<1x8xf32> to vector<1x8x1xf32>
    %137 = vector.broadcast %136 : vector<1x8x1xf32> to vector<1x8x8xf32>
    %138 = arith.subf %134, %137 : vector<1x8x8xf32>
    %139 = math.exp %138 : vector<1x8x8xf32>
    %cst_42 = arith.constant dense<0.000000e+00> : vector<1x8xf32>
    %140 = vector.multi_reduction <add>, %139, %cst_42 [2] : vector<1x8x8xf32> to vector<1x8xf32>
    %141 = vector.shape_cast %140 : vector<1x8xf32> to vector<1x8x1xf32>
    %142 = tpu.reciprocal %141 {approx = true} : vector<1x8x1xf32> -> vector<1x8x1xf32>
    %143 = vector.broadcast %142 : vector<1x8x1xf32> to vector<1x8x8xf32>
    %144 = arith.mulf %139, %143 : vector<1x8x8xf32>
    %145 = arith.truncf %144 : vector<1x8x8xf32> to vector<1x8x8xbf16>
    "tpu.trace_start"() <{level = 10 : i32, message = "bqk,bkd->bqd"}> : () -> ()
    %cst_43 = arith.constant dense<0.000000e+00> : vector<1x8x32xf32>
    %146 = tpu.matmul %145, %131, %cst_43 {dimension_numbers = #tpu.dot_dimension_numbers<[2], [1], [1], [2], [0, 0, 0, 1, 1, 2], [0], [0]>} : vector<1x8x8xbf16>, vector<1x8x32xbf16>, vector<1x8x32xf32> -> vector<1x8x32xf32>
    "tpu.trace_stop"() : () -> ()
    %147 = vector.shape_cast %146 : vector<1x8x32xf32> to vector<8x32xf32>
    %148 = arith.truncf %147 : vector<8x32xf32> to vector<8x32xbf16>
    %149 = vector.extract_strided_slice %13 {offsets = [96, 0], sizes = [32, 128], strides = [1, 1]} : vector<128x128xbf16> to vector<32x128xbf16>
    %cst_44 = arith.constant dense<0.000000e+00> : vector<8x128xf32>
    %150 = tpu.matmul %148, %149, %cst_44 {dimension_numbers = #tpu.dot_dimension_numbers<[1], [0], [0], [1], [0, 0, 1, 1], [], []>} : vector<8x32xbf16>, vector<32x128xbf16>, vector<8x128xf32> -> vector<8x128xf32>
    %151 = arith.addf %122, %150 : vector<8x128xf32>
    %152 = vector.broadcast %21 : vector<1x128xf32> to vector<8x128xf32>
    %153 = arith.addf %151, %152 : vector<8x128xf32>
    %154 = arith.addf %9, %153 : vector<8x128xf32>
    %cst_45 = arith.constant dense<0.000000e+00> : vector<8xf32>
    %155 = vector.multi_reduction <add>, %154, %cst_45 [1] : vector<8x128xf32> to vector<8xf32>
    %156 = vector.shape_cast %155 : vector<8xf32> to vector<8x1xf32>
    %cst_46 = arith.constant 1.280000e+02 : f32
    %157 = vector.broadcast %cst_46 : f32 to vector<8x1xf32>
    %158 = arith.divf %156, %157 : vector<8x1xf32>
    %159 = vector.broadcast %158 : vector<8x1xf32> to vector<8x128xf32>
    %160 = arith.subf %154, %159 : vector<8x128xf32>
    %161 = arith.mulf %160, %160 : vector<8x128xf32>
    %cst_47 = arith.constant dense<0.000000e+00> : vector<8xf32>
    %162 = vector.multi_reduction <add>, %161, %cst_47 [1] : vector<8x128xf32> to vector<8xf32>
    %163 = vector.shape_cast %162 : vector<8xf32> to vector<8x1xf32>
    %cst_48 = arith.constant 1.280000e+02 : f32
    %164 = vector.broadcast %cst_48 : f32 to vector<8x1xf32>
    %165 = arith.divf %163, %164 : vector<8x1xf32>
    %166 = vector.broadcast %158 : vector<8x1xf32> to vector<8x128xf32>
    %167 = arith.subf %154, %166 : vector<8x128xf32>
    %cst_49 = arith.constant 9.99999974E-6 : f32
    %168 = vector.broadcast %cst_49 : f32 to vector<8x1xf32>
    %169 = arith.addf %165, %168 : vector<8x1xf32>
    %170 = math.rsqrt %169 : vector<8x1xf32>
    %171 = vector.broadcast %170 : vector<8x1xf32> to vector<8x128xf32>
    %172 = arith.mulf %167, %171 : vector<8x128xf32>
    %173 = vector.broadcast %24 : vector<1x128xf32> to vector<8x128xf32>
    %174 = arith.mulf %172, %173 : vector<8x128xf32>
    %175 = vector.broadcast %25 : vector<1x128xf32> to vector<8x128xf32>
    %176 = arith.addf %174, %175 : vector<8x128xf32>
    %177 = arith.truncf %176 : vector<8x128xf32> to vector<8x128xbf16>
    %cst_50 = arith.constant dense<0.000000e+00> : vector<8x256xf32>
    %178 = tpu.matmul %177, %15, %cst_50 {dimension_numbers = #tpu.dot_dimension_numbers<[1], [0], [0], [1], [0, 0, 1, 1], [], []>} : vector<8x128xbf16>, vector<128x256xbf16>, vector<8x256xf32> -> vector<8x256xf32>
    %179 = vector.broadcast %22 : vector<1x256xf32> to vector<8x256xf32>
    %180 = arith.addf %178, %179 : vector<8x256xf32>
    %cst_51 = arith.constant 0.000000e+00 : f32
    %181 = vector.broadcast %cst_51 : f32 to vector<8x256xf32>
    %182 = arith.maximumf %180, %181 : vector<8x256xf32>
    %183 = arith.truncf %182 : vector<8x256xf32> to vector<8x256xbf16>
    %cst_52 = arith.constant dense<0.000000e+00> : vector<8x128xf32>
    %184 = tpu.matmul %183, %17, %cst_52 {dimension_numbers = #tpu.dot_dimension_numbers<[1], [0], [0], [1], [0, 0, 1, 1], [], []>} : vector<8x256xbf16>, vector<256x128xbf16>, vector<8x128xf32> -> vector<8x128xf32>
    %185 = vector.broadcast %23 : vector<1x128xf32> to vector<8x128xf32>
    %186 = arith.addf %184, %185 : vector<8x128xf32>
    %187 = arith.addf %176, %186 : vector<8x128xf32>
    %cst_53 = arith.constant dense<0.000000e+00> : vector<8xf32>
    %188 = vector.multi_reduction <add>, %187, %cst_53 [1] : vector<8x128xf32> to vector<8xf32>
    %189 = vector.shape_cast %188 : vector<8xf32> to vector<8x1xf32>
    %cst_54 = arith.constant 1.280000e+02 : f32
    %190 = vector.broadcast %cst_54 : f32 to vector<8x1xf32>
    %191 = arith.divf %189, %190 : vector<8x1xf32>
    %192 = vector.broadcast %191 : vector<8x1xf32> to vector<8x128xf32>
    %193 = arith.subf %187, %192 : vector<8x128xf32>
    %194 = arith.mulf %193, %193 : vector<8x128xf32>
    %cst_55 = arith.constant dense<0.000000e+00> : vector<8xf32>
    %195 = vector.multi_reduction <add>, %194, %cst_55 [1] : vector<8x128xf32> to vector<8xf32>
    %196 = vector.shape_cast %195 : vector<8xf32> to vector<8x1xf32>
    %cst_56 = arith.constant 1.280000e+02 : f32
    %197 = vector.broadcast %cst_56 : f32 to vector<8x1xf32>
    %198 = arith.divf %196, %197 : vector<8x1xf32>
    %199 = vector.broadcast %191 : vector<8x1xf32> to vector<8x128xf32>
    %200 = arith.subf %187, %199 : vector<8x128xf32>
    %cst_57 = arith.constant 9.99999974E-6 : f32
    %201 = vector.broadcast %cst_57 : f32 to vector<8x1xf32>
    %202 = arith.addf %198, %201 : vector<8x1xf32>
    %203 = math.rsqrt %202 : vector<8x1xf32>
    %204 = vector.broadcast %203 : vector<8x1xf32> to vector<8x128xf32>
    %205 = arith.mulf %200, %204 : vector<8x128xf32>
    %206 = vector.broadcast %26 : vector<1x128xf32> to vector<8x128xf32>
    %207 = arith.mulf %205, %206 : vector<8x128xf32>
    %208 = vector.broadcast %27 : vector<1x128xf32> to vector<8x128xf32>
    %209 = arith.addf %207, %208 : vector<8x128xf32>
    %c1 = arith.constant 1 : index
    %c0_58 = arith.constant 0 : index
    %c0_59 = arith.constant 0 : index
    %210 = vector.load %arg3[%c1, %c0_58, %c0_59] : memref<2x128x384xbf16, #tpu.memory_space<vmem>>, vector<1x128x384xbf16>
    %211 = vector.shape_cast %210 : vector<1x128x384xbf16> to vector<128x384xbf16>
    %c1_60 = arith.constant 1 : index
    %c0_61 = arith.constant 0 : index
    %c0_62 = arith.constant 0 : index
    %212 = vector.load %arg4[%c1_60, %c0_61, %c0_62] : memref<2x128x128xbf16, #tpu.memory_space<vmem>>, vector<1x128x128xbf16>
    %213 = vector.shape_cast %212 : vector<1x128x128xbf16> to vector<128x128xbf16>
    %c1_63 = arith.constant 1 : index
    %c0_64 = arith.constant 0 : index
    %c0_65 = arith.constant 0 : index
    %214 = vector.load %arg5[%c1_63, %c0_64, %c0_65] : memref<2x128x256xbf16, #tpu.memory_space<vmem>>, vector<1x128x256xbf16>
    %215 = vector.shape_cast %214 : vector<1x128x256xbf16> to vector<128x256xbf16>
    %c1_66 = arith.constant 1 : index
    %c0_67 = arith.constant 0 : index
    %c0_68 = arith.constant 0 : index
    %216 = vector.load %arg6[%c1_66, %c0_67, %c0_68] : memref<2x256x128xbf16, #tpu.memory_space<vmem>>, vector<1x256x128xbf16>
    %217 = vector.shape_cast %216 : vector<1x256x128xbf16> to vector<256x128xbf16>
    %c1_69 = arith.constant 1 : index
    %c0_70 = arith.constant 0 : index
    %c0_71 = arith.constant 0 : index
    %218 = vector.load %arg7[%c1_69, %c0_70, %c0_71] : memref<2x8x384xf32, #tpu.memory_space<vmem>>, vector<1x8x384xf32>
    %219 = vector.shape_cast %218 : vector<1x8x384xf32> to vector<8x384xf32>
    %220 = vector.extract_strided_slice %219 {offsets = [0, 0], sizes = [1, 384], strides = [1, 1]} : vector<8x384xf32> to vector<1x384xf32>
    %221 = vector.extract_strided_slice %219 {offsets = [1, 0], sizes = [1, 128], strides = [1, 1]} : vector<8x384xf32> to vector<1x128xf32>
    %222 = vector.extract_strided_slice %219 {offsets = [2, 0], sizes = [1, 256], strides = [1, 1]} : vector<8x384xf32> to vector<1x256xf32>
    %223 = vector.extract_strided_slice %219 {offsets = [3, 0], sizes = [1, 128], strides = [1, 1]} : vector<8x384xf32> to vector<1x128xf32>
    %224 = vector.extract_strided_slice %219 {offsets = [4, 0], sizes = [1, 128], strides = [1, 1]} : vector<8x384xf32> to vector<1x128xf32>
    %225 = vector.extract_strided_slice %219 {offsets = [5, 0], sizes = [1, 128], strides = [1, 1]} : vector<8x384xf32> to vector<1x128xf32>
    %226 = vector.extract_strided_slice %219 {offsets = [6, 0], sizes = [1, 128], strides = [1, 1]} : vector<8x384xf32> to vector<1x128xf32>
    %227 = vector.extract_strided_slice %219 {offsets = [7, 0], sizes = [1, 128], strides = [1, 1]} : vector<8x384xf32> to vector<1x128xf32>
    %228 = arith.truncf %209 : vector<8x128xf32> to vector<8x128xbf16>
    %cst_72 = arith.constant dense<0.000000e+00> : vector<8x384xf32>
    %229 = tpu.matmul %228, %211, %cst_72 {dimension_numbers = #tpu.dot_dimension_numbers<[1], [0], [0], [1], [0, 0, 1, 1], [], []>} : vector<8x128xbf16>, vector<128x384xbf16>, vector<8x384xf32> -> vector<8x384xf32>
    %230 = vector.broadcast %220 : vector<1x384xf32> to vector<8x384xf32>
    %231 = arith.addf %229, %230 : vector<8x384xf32>
    %232 = vector.extract_strided_slice %231 {offsets = [0, 0], sizes = [8, 128], strides = [1, 1]} : vector<8x384xf32> to vector<8x128xf32>
    %233 = vector.extract_strided_slice %231 {offsets = [0, 128], sizes = [8, 128], strides = [1, 1]} : vector<8x384xf32> to vector<8x128xf32>
    %234 = vector.extract_strided_slice %231 {offsets = [0, 256], sizes = [8, 128], strides = [1, 1]} : vector<8x384xf32> to vector<8x128xf32>
    %cst_73 = arith.constant 0.000000e+00 : f32
    %235 = vector.broadcast %cst_73 : f32 to vector<8x128xf32>
    %236 = vector.extract_strided_slice %232 {offsets = [0, 0], sizes = [8, 32], strides = [1, 1]} : vector<8x128xf32> to vector<8x32xf32>
    %237 = vector.shape_cast %236 : vector<8x32xf32> to vector<1x8x32xf32>
    %238 = arith.truncf %237 : vector<1x8x32xf32> to vector<1x8x32xbf16>
    %239 = vector.extract_strided_slice %233 {offsets = [0, 0], sizes = [8, 32], strides = [1, 1]} : vector<8x128xf32> to vector<8x32xf32>
    %240 = vector.shape_cast %239 : vector<8x32xf32> to vector<1x8x32xf32>
    %241 = arith.truncf %240 : vector<1x8x32xf32> to vector<1x8x32xbf16>
    %242 = vector.extract_strided_slice %234 {offsets = [0, 0], sizes = [8, 32], strides = [1, 1]} : vector<8x128xf32> to vector<8x32xf32>
    %243 = vector.shape_cast %242 : vector<8x32xf32> to vector<1x8x32xf32>
    %244 = arith.truncf %243 : vector<1x8x32xf32> to vector<1x8x32xbf16>
    "tpu.trace_start"() <{level = 10 : i32, message = "bqd,bkd->bqk"}> : () -> ()
    %cst_74 = arith.constant dense<0.000000e+00> : vector<1x8x8xf32>
    %245 = tpu.matmul %238, %241, %cst_74 {dimension_numbers = #tpu.dot_dimension_numbers<[2], [2], [1], [1], [0, 0, 0, 1, 1, 1], [0], [0]>} : vector<1x8x32xbf16>, vector<1x8x32xbf16>, vector<1x8x8xf32> -> vector<1x8x8xf32>
    "tpu.trace_stop"() : () -> ()
    %cst_75 = arith.constant 0.176776692 : f32
    %246 = vector.broadcast %cst_75 : f32 to vector<1x8x8xf32>
    %247 = arith.mulf %245, %246 : vector<1x8x8xf32>
    %cst_76 = arith.constant dense<0xFF800000> : vector<1x8xf32>
    %248 = vector.multi_reduction <maximumf>, %247, %cst_76 [2] : vector<1x8x8xf32> to vector<1x8xf32>
    %249 = vector.shape_cast %248 : vector<1x8xf32> to vector<1x8x1xf32>
    %250 = vector.broadcast %249 : vector<1x8x1xf32> to vector<1x8x8xf32>
    %251 = arith.subf %247, %250 : vector<1x8x8xf32>
    %252 = math.exp %251 : vector<1x8x8xf32>
    %cst_77 = arith.constant dense<0.000000e+00> : vector<1x8xf32>
    %253 = vector.multi_reduction <add>, %252, %cst_77 [2] : vector<1x8x8xf32> to vector<1x8xf32>
    %254 = vector.shape_cast %253 : vector<1x8xf32> to vector<1x8x1xf32>
    %255 = tpu.reciprocal %254 {approx = true} : vector<1x8x1xf32> -> vector<1x8x1xf32>
    %256 = vector.broadcast %255 : vector<1x8x1xf32> to vector<1x8x8xf32>
    %257 = arith.mulf %252, %256 : vector<1x8x8xf32>
    %258 = arith.truncf %257 : vector<1x8x8xf32> to vector<1x8x8xbf16>
    "tpu.trace_start"() <{level = 10 : i32, message = "bqk,bkd->bqd"}> : () -> ()
    %cst_78 = arith.constant dense<0.000000e+00> : vector<1x8x32xf32>
    %259 = tpu.matmul %258, %244, %cst_78 {dimension_numbers = #tpu.dot_dimension_numbers<[2], [1], [1], [2], [0, 0, 0, 1, 1, 2], [0], [0]>} : vector<1x8x8xbf16>, vector<1x8x32xbf16>, vector<1x8x32xf32> -> vector<1x8x32xf32>
    "tpu.trace_stop"() : () -> ()
    %260 = vector.shape_cast %259 : vector<1x8x32xf32> to vector<8x32xf32>
    %261 = arith.truncf %260 : vector<8x32xf32> to vector<8x32xbf16>
    %262 = vector.extract_strided_slice %213 {offsets = [0, 0], sizes = [32, 128], strides = [1, 1]} : vector<128x128xbf16> to vector<32x128xbf16>
    %cst_79 = arith.constant dense<0.000000e+00> : vector<8x128xf32>
    %263 = tpu.matmul %261, %262, %cst_79 {dimension_numbers = #tpu.dot_dimension_numbers<[1], [0], [0], [1], [0, 0, 1, 1], [], []>} : vector<8x32xbf16>, vector<32x128xbf16>, vector<8x128xf32> -> vector<8x128xf32>
    %264 = arith.addf %235, %263 : vector<8x128xf32>
    %265 = vector.extract_strided_slice %232 {offsets = [0, 32], sizes = [8, 32], strides = [1, 1]} : vector<8x128xf32> to vector<8x32xf32>
    %266 = vector.shape_cast %265 : vector<8x32xf32> to vector<1x8x32xf32>
    %267 = arith.truncf %266 : vector<1x8x32xf32> to vector<1x8x32xbf16>
    %268 = vector.extract_strided_slice %233 {offsets = [0, 32], sizes = [8, 32], strides = [1, 1]} : vector<8x128xf32> to vector<8x32xf32>
    %269 = vector.shape_cast %268 : vector<8x32xf32> to vector<1x8x32xf32>
    %270 = arith.truncf %269 : vector<1x8x32xf32> to vector<1x8x32xbf16>
    %271 = vector.extract_strided_slice %234 {offsets = [0, 32], sizes = [8, 32], strides = [1, 1]} : vector<8x128xf32> to vector<8x32xf32>
    %272 = vector.shape_cast %271 : vector<8x32xf32> to vector<1x8x32xf32>
    %273 = arith.truncf %272 : vector<1x8x32xf32> to vector<1x8x32xbf16>
    "tpu.trace_start"() <{level = 10 : i32, message = "bqd,bkd->bqk"}> : () -> ()
    %cst_80 = arith.constant dense<0.000000e+00> : vector<1x8x8xf32>
    %274 = tpu.matmul %267, %270, %cst_80 {dimension_numbers = #tpu.dot_dimension_numbers<[2], [2], [1], [1], [0, 0, 0, 1, 1, 1], [0], [0]>} : vector<1x8x32xbf16>, vector<1x8x32xbf16>, vector<1x8x8xf32> -> vector<1x8x8xf32>
    "tpu.trace_stop"() : () -> ()
    %cst_81 = arith.constant 0.176776692 : f32
    %275 = vector.broadcast %cst_81 : f32 to vector<1x8x8xf32>
    %276 = arith.mulf %274, %275 : vector<1x8x8xf32>
    %cst_82 = arith.constant dense<0xFF800000> : vector<1x8xf32>
    %277 = vector.multi_reduction <maximumf>, %276, %cst_82 [2] : vector<1x8x8xf32> to vector<1x8xf32>
    %278 = vector.shape_cast %277 : vector<1x8xf32> to vector<1x8x1xf32>
    %279 = vector.broadcast %278 : vector<1x8x1xf32> to vector<1x8x8xf32>
    %280 = arith.subf %276, %279 : vector<1x8x8xf32>
    %281 = math.exp %280 : vector<1x8x8xf32>
    %cst_83 = arith.constant dense<0.000000e+00> : vector<1x8xf32>
    %282 = vector.multi_reduction <add>, %281, %cst_83 [2] : vector<1x8x8xf32> to vector<1x8xf32>
    %283 = vector.shape_cast %282 : vector<1x8xf32> to vector<1x8x1xf32>
    %284 = tpu.reciprocal %283 {approx = true} : vector<1x8x1xf32> -> vector<1x8x1xf32>
    %285 = vector.broadcast %284 : vector<1x8x1xf32> to vector<1x8x8xf32>
    %286 = arith.mulf %281, %285 : vector<1x8x8xf32>
    %287 = arith.truncf %286 : vector<1x8x8xf32> to vector<1x8x8xbf16>
    "tpu.trace_start"() <{level = 10 : i32, message = "bqk,bkd->bqd"}> : () -> ()
    %cst_84 = arith.constant dense<0.000000e+00> : vector<1x8x32xf32>
    %288 = tpu.matmul %287, %273, %cst_84 {dimension_numbers = #tpu.dot_dimension_numbers<[2], [1], [1], [2], [0, 0, 0, 1, 1, 2], [0], [0]>} : vector<1x8x8xbf16>, vector<1x8x32xbf16>, vector<1x8x32xf32> -> vector<1x8x32xf32>
    "tpu.trace_stop"() : () -> ()
    %289 = vector.shape_cast %288 : vector<1x8x32xf32> to vector<8x32xf32>
    %290 = arith.truncf %289 : vector<8x32xf32> to vector<8x32xbf16>
    %291 = vector.extract_strided_slice %213 {offsets = [32, 0], sizes = [32, 128], strides = [1, 1]} : vector<128x128xbf16> to vector<32x128xbf16>
    %cst_85 = arith.constant dense<0.000000e+00> : vector<8x128xf32>
    %292 = tpu.matmul %290, %291, %cst_85 {dimension_numbers = #tpu.dot_dimension_numbers<[1], [0], [0], [1], [0, 0, 1, 1], [], []>} : vector<8x32xbf16>, vector<32x128xbf16>, vector<8x128xf32> -> vector<8x128xf32>
    %293 = arith.addf %264, %292 : vector<8x128xf32>
    %294 = vector.extract_strided_slice %232 {offsets = [0, 64], sizes = [8, 32], strides = [1, 1]} : vector<8x128xf32> to vector<8x32xf32>
    %295 = vector.shape_cast %294 : vector<8x32xf32> to vector<1x8x32xf32>
    %296 = arith.truncf %295 : vector<1x8x32xf32> to vector<1x8x32xbf16>
    %297 = vector.extract_strided_slice %233 {offsets = [0, 64], sizes = [8, 32], strides = [1, 1]} : vector<8x128xf32> to vector<8x32xf32>
    %298 = vector.shape_cast %297 : vector<8x32xf32> to vector<1x8x32xf32>
    %299 = arith.truncf %298 : vector<1x8x32xf32> to vector<1x8x32xbf16>
    %300 = vector.extract_strided_slice %234 {offsets = [0, 64], sizes = [8, 32], strides = [1, 1]} : vector<8x128xf32> to vector<8x32xf32>
    %301 = vector.shape_cast %300 : vector<8x32xf32> to vector<1x8x32xf32>
    %302 = arith.truncf %301 : vector<1x8x32xf32> to vector<1x8x32xbf16>
    "tpu.trace_start"() <{level = 10 : i32, message = "bqd,bkd->bqk"}> : () -> ()
    %cst_86 = arith.constant dense<0.000000e+00> : vector<1x8x8xf32>
    %303 = tpu.matmul %296, %299, %cst_86 {dimension_numbers = #tpu.dot_dimension_numbers<[2], [2], [1], [1], [0, 0, 0, 1, 1, 1], [0], [0]>} : vector<1x8x32xbf16>, vector<1x8x32xbf16>, vector<1x8x8xf32> -> vector<1x8x8xf32>
    "tpu.trace_stop"() : () -> ()
    %cst_87 = arith.constant 0.176776692 : f32
    %304 = vector.broadcast %cst_87 : f32 to vector<1x8x8xf32>
    %305 = arith.mulf %303, %304 : vector<1x8x8xf32>
    %cst_88 = arith.constant dense<0xFF800000> : vector<1x8xf32>
    %306 = vector.multi_reduction <maximumf>, %305, %cst_88 [2] : vector<1x8x8xf32> to vector<1x8xf32>
    %307 = vector.shape_cast %306 : vector<1x8xf32> to vector<1x8x1xf32>
    %308 = vector.broadcast %307 : vector<1x8x1xf32> to vector<1x8x8xf32>
    %309 = arith.subf %305, %308 : vector<1x8x8xf32>
    %310 = math.exp %309 : vector<1x8x8xf32>
    %cst_89 = arith.constant dense<0.000000e+00> : vector<1x8xf32>
    %311 = vector.multi_reduction <add>, %310, %cst_89 [2] : vector<1x8x8xf32> to vector<1x8xf32>
    %312 = vector.shape_cast %311 : vector<1x8xf32> to vector<1x8x1xf32>
    %313 = tpu.reciprocal %312 {approx = true} : vector<1x8x1xf32> -> vector<1x8x1xf32>
    %314 = vector.broadcast %313 : vector<1x8x1xf32> to vector<1x8x8xf32>
    %315 = arith.mulf %310, %314 : vector<1x8x8xf32>
    %316 = arith.truncf %315 : vector<1x8x8xf32> to vector<1x8x8xbf16>
    "tpu.trace_start"() <{level = 10 : i32, message = "bqk,bkd->bqd"}> : () -> ()
    %cst_90 = arith.constant dense<0.000000e+00> : vector<1x8x32xf32>
    %317 = tpu.matmul %316, %302, %cst_90 {dimension_numbers = #tpu.dot_dimension_numbers<[2], [1], [1], [2], [0, 0, 0, 1, 1, 2], [0], [0]>} : vector<1x8x8xbf16>, vector<1x8x32xbf16>, vector<1x8x32xf32> -> vector<1x8x32xf32>
    "tpu.trace_stop"() : () -> ()
    %318 = vector.shape_cast %317 : vector<1x8x32xf32> to vector<8x32xf32>
    %319 = arith.truncf %318 : vector<8x32xf32> to vector<8x32xbf16>
    %320 = vector.extract_strided_slice %213 {offsets = [64, 0], sizes = [32, 128], strides = [1, 1]} : vector<128x128xbf16> to vector<32x128xbf16>
    %cst_91 = arith.constant dense<0.000000e+00> : vector<8x128xf32>
    %321 = tpu.matmul %319, %320, %cst_91 {dimension_numbers = #tpu.dot_dimension_numbers<[1], [0], [0], [1], [0, 0, 1, 1], [], []>} : vector<8x32xbf16>, vector<32x128xbf16>, vector<8x128xf32> -> vector<8x128xf32>
    %322 = arith.addf %293, %321 : vector<8x128xf32>
    %323 = vector.extract_strided_slice %232 {offsets = [0, 96], sizes = [8, 32], strides = [1, 1]} : vector<8x128xf32> to vector<8x32xf32>
    %324 = vector.shape_cast %323 : vector<8x32xf32> to vector<1x8x32xf32>
    %325 = arith.truncf %324 : vector<1x8x32xf32> to vector<1x8x32xbf16>
    %326 = vector.extract_strided_slice %233 {offsets = [0, 96], sizes = [8, 32], strides = [1, 1]} : vector<8x128xf32> to vector<8x32xf32>
    %327 = vector.shape_cast %326 : vector<8x32xf32> to vector<1x8x32xf32>
    %328 = arith.truncf %327 : vector<1x8x32xf32> to vector<1x8x32xbf16>
    %329 = vector.extract_strided_slice %234 {offsets = [0, 96], sizes = [8, 32], strides = [1, 1]} : vector<8x128xf32> to vector<8x32xf32>
    %330 = vector.shape_cast %329 : vector<8x32xf32> to vector<1x8x32xf32>
    %331 = arith.truncf %330 : vector<1x8x32xf32> to vector<1x8x32xbf16>
    "tpu.trace_start"() <{level = 10 : i32, message = "bqd,bkd->bqk"}> : () -> ()
    %cst_92 = arith.constant dense<0.000000e+00> : vector<1x8x8xf32>
    %332 = tpu.matmul %325, %328, %cst_92 {dimension_numbers = #tpu.dot_dimension_numbers<[2], [2], [1], [1], [0, 0, 0, 1, 1, 1], [0], [0]>} : vector<1x8x32xbf16>, vector<1x8x32xbf16>, vector<1x8x8xf32> -> vector<1x8x8xf32>
    "tpu.trace_stop"() : () -> ()
    %cst_93 = arith.constant 0.176776692 : f32
    %333 = vector.broadcast %cst_93 : f32 to vector<1x8x8xf32>
    %334 = arith.mulf %332, %333 : vector<1x8x8xf32>
    %cst_94 = arith.constant dense<0xFF800000> : vector<1x8xf32>
    %335 = vector.multi_reduction <maximumf>, %334, %cst_94 [2] : vector<1x8x8xf32> to vector<1x8xf32>
    %336 = vector.shape_cast %335 : vector<1x8xf32> to vector<1x8x1xf32>
    %337 = vector.broadcast %336 : vector<1x8x1xf32> to vector<1x8x8xf32>
    %338 = arith.subf %334, %337 : vector<1x8x8xf32>
    %339 = math.exp %338 : vector<1x8x8xf32>
    %cst_95 = arith.constant dense<0.000000e+00> : vector<1x8xf32>
    %340 = vector.multi_reduction <add>, %339, %cst_95 [2] : vector<1x8x8xf32> to vector<1x8xf32>
    %341 = vector.shape_cast %340 : vector<1x8xf32> to vector<1x8x1xf32>
    %342 = tpu.reciprocal %341 {approx = true} : vector<1x8x1xf32> -> vector<1x8x1xf32>
    %343 = vector.broadcast %342 : vector<1x8x1xf32> to vector<1x8x8xf32>
    %344 = arith.mulf %339, %343 : vector<1x8x8xf32>
    %345 = arith.truncf %344 : vector<1x8x8xf32> to vector<1x8x8xbf16>
    "tpu.trace_start"() <{level = 10 : i32, message = "bqk,bkd->bqd"}> : () -> ()
    %cst_96 = arith.constant dense<0.000000e+00> : vector<1x8x32xf32>
    %346 = tpu.matmul %345, %331, %cst_96 {dimension_numbers = #tpu.dot_dimension_numbers<[2], [1], [1], [2], [0, 0, 0, 1, 1, 2], [0], [0]>} : vector<1x8x8xbf16>, vector<1x8x32xbf16>, vector<1x8x32xf32> -> vector<1x8x32xf32>
    "tpu.trace_stop"() : () -> ()
    %347 = vector.shape_cast %346 : vector<1x8x32xf32> to vector<8x32xf32>
    %348 = arith.truncf %347 : vector<8x32xf32> to vector<8x32xbf16>
    %349 = vector.extract_strided_slice %213 {offsets = [96, 0], sizes = [32, 128], strides = [1, 1]} : vector<128x128xbf16> to vector<32x128xbf16>
    %cst_97 = arith.constant dense<0.000000e+00> : vector<8x128xf32>
    %350 = tpu.matmul %348, %349, %cst_97 {dimension_numbers = #tpu.dot_dimension_numbers<[1], [0], [0], [1], [0, 0, 1, 1], [], []>} : vector<8x32xbf16>, vector<32x128xbf16>, vector<8x128xf32> -> vector<8x128xf32>
    %351 = arith.addf %322, %350 : vector<8x128xf32>
    %352 = vector.broadcast %221 : vector<1x128xf32> to vector<8x128xf32>
    %353 = arith.addf %351, %352 : vector<8x128xf32>
    %354 = arith.addf %209, %353 : vector<8x128xf32>
    %cst_98 = arith.constant dense<0.000000e+00> : vector<8xf32>
    %355 = vector.multi_reduction <add>, %354, %cst_98 [1] : vector<8x128xf32> to vector<8xf32>
    %356 = vector.shape_cast %355 : vector<8xf32> to vector<8x1xf32>
    %cst_99 = arith.constant 1.280000e+02 : f32
    %357 = vector.broadcast %cst_99 : f32 to vector<8x1xf32>
    %358 = arith.divf %356, %357 : vector<8x1xf32>
    %359 = vector.broadcast %358 : vector<8x1xf32> to vector<8x128xf32>
    %360 = arith.subf %354, %359 : vector<8x128xf32>
    %361 = arith.mulf %360, %360 : vector<8x128xf32>
    %cst_100 = arith.constant dense<0.000000e+00> : vector<8xf32>
    %362 = vector.multi_reduction <add>, %361, %cst_100 [1] : vector<8x128xf32> to vector<8xf32>
    %363 = vector.shape_cast %362 : vector<8xf32> to vector<8x1xf32>
    %cst_101 = arith.constant 1.280000e+02 : f32
    %364 = vector.broadcast %cst_101 : f32 to vector<8x1xf32>
    %365 = arith.divf %363, %364 : vector<8x1xf32>
    %366 = vector.broadcast %358 : vector<8x1xf32> to vector<8x128xf32>
    %367 = arith.subf %354, %366 : vector<8x128xf32>
    %cst_102 = arith.constant 9.99999974E-6 : f32
    %368 = vector.broadcast %cst_102 : f32 to vector<8x1xf32>
    %369 = arith.addf %365, %368 : vector<8x1xf32>
    %370 = math.rsqrt %369 : vector<8x1xf32>
    %371 = vector.broadcast %370 : vector<8x1xf32> to vector<8x128xf32>
    %372 = arith.mulf %367, %371 : vector<8x128xf32>
    %373 = vector.broadcast %224 : vector<1x128xf32> to vector<8x128xf32>
    %374 = arith.mulf %372, %373 : vector<8x128xf32>
    %375 = vector.broadcast %225 : vector<1x128xf32> to vector<8x128xf32>
    %376 = arith.addf %374, %375 : vector<8x128xf32>
    %377 = arith.truncf %376 : vector<8x128xf32> to vector<8x128xbf16>
    %cst_103 = arith.constant dense<0.000000e+00> : vector<8x256xf32>
    %378 = tpu.matmul %377, %215, %cst_103 {dimension_numbers = #tpu.dot_dimension_numbers<[1], [0], [0], [1], [0, 0, 1, 1], [], []>} : vector<8x128xbf16>, vector<128x256xbf16>, vector<8x256xf32> -> vector<8x256xf32>
    %379 = vector.broadcast %222 : vector<1x256xf32> to vector<8x256xf32>
    %380 = arith.addf %378, %379 : vector<8x256xf32>
    %cst_104 = arith.constant 0.000000e+00 : f32
    %381 = vector.broadcast %cst_104 : f32 to vector<8x256xf32>
    %382 = arith.maximumf %380, %381 : vector<8x256xf32>
    %383 = arith.truncf %382 : vector<8x256xf32> to vector<8x256xbf16>
    %cst_105 = arith.constant dense<0.000000e+00> : vector<8x128xf32>
    %384 = tpu.matmul %383, %217, %cst_105 {dimension_numbers = #tpu.dot_dimension_numbers<[1], [0], [0], [1], [0, 0, 1, 1], [], []>} : vector<8x256xbf16>, vector<256x128xbf16>, vector<8x128xf32> -> vector<8x128xf32>
    %385 = vector.broadcast %223 : vector<1x128xf32> to vector<8x128xf32>
    %386 = arith.addf %384, %385 : vector<8x128xf32>
    %387 = arith.addf %376, %386 : vector<8x128xf32>
    %cst_106 = arith.constant dense<0.000000e+00> : vector<8xf32>
    %388 = vector.multi_reduction <add>, %387, %cst_106 [1] : vector<8x128xf32> to vector<8xf32>
    %389 = vector.shape_cast %388 : vector<8xf32> to vector<8x1xf32>
    %cst_107 = arith.constant 1.280000e+02 : f32
    %390 = vector.broadcast %cst_107 : f32 to vector<8x1xf32>
    %391 = arith.divf %389, %390 : vector<8x1xf32>
    %392 = vector.broadcast %391 : vector<8x1xf32> to vector<8x128xf32>
    %393 = arith.subf %387, %392 : vector<8x128xf32>
    %394 = arith.mulf %393, %393 : vector<8x128xf32>
    %cst_108 = arith.constant dense<0.000000e+00> : vector<8xf32>
    %395 = vector.multi_reduction <add>, %394, %cst_108 [1] : vector<8x128xf32> to vector<8xf32>
    %396 = vector.shape_cast %395 : vector<8xf32> to vector<8x1xf32>
    %cst_109 = arith.constant 1.280000e+02 : f32
    %397 = vector.broadcast %cst_109 : f32 to vector<8x1xf32>
    %398 = arith.divf %396, %397 : vector<8x1xf32>
    %399 = vector.broadcast %391 : vector<8x1xf32> to vector<8x128xf32>
    %400 = arith.subf %387, %399 : vector<8x128xf32>
    %cst_110 = arith.constant 9.99999974E-6 : f32
    %401 = vector.broadcast %cst_110 : f32 to vector<8x1xf32>
    %402 = arith.addf %398, %401 : vector<8x1xf32>
    %403 = math.rsqrt %402 : vector<8x1xf32>
    %404 = vector.broadcast %403 : vector<8x1xf32> to vector<8x128xf32>
    %405 = arith.mulf %400, %404 : vector<8x128xf32>
    %406 = vector.broadcast %226 : vector<1x128xf32> to vector<8x128xf32>
    %407 = arith.mulf %405, %406 : vector<8x128xf32>
    %408 = vector.broadcast %227 : vector<1x128xf32> to vector<8x128xf32>
    %409 = arith.addf %407, %408 : vector<8x128xf32>
    %410 = vector.shape_cast %409 : vector<8x128xf32> to vector<1x8x128xf32>
    %cst_111 = arith.constant dense<0.000000e+00> : vector<1x128xf32>
    %411 = vector.multi_reduction <add>, %410, %cst_111 [1] : vector<1x8x128xf32> to vector<1x128xf32>
    %cst_112 = arith.constant 8.000000e+00 : f32
    %412 = vector.broadcast %cst_112 : f32 to vector<1x128xf32>
    %413 = arith.divf %411, %412 : vector<1x128xf32>
    %c0_113 = arith.constant 0 : index
    %c0_114 = arith.constant 0 : index
    %414 = vector.load %arg8[%c0_113, %c0_114] : memref<8x128xf32, #tpu.memory_space<vmem>>, vector<8x128xf32>
    %415 = vector.extract_strided_slice %414 {offsets = [0, 0], sizes = [1, 128], strides = [1, 1]} : vector<8x128xf32> to vector<1x128xf32>
    %416 = arith.mulf %413, %415 : vector<1x128xf32>
    %cst_115 = arith.constant dense<0.000000e+00> : vector<1xf32>
    %417 = vector.multi_reduction <add>, %416, %cst_115 [1] : vector<1x128xf32> to vector<1xf32>
    %418 = vector.shape_cast %417 : vector<1xf32> to vector<1x1xf32>
    %419 = vector.extract_strided_slice %414 {offsets = [1, 0], sizes = [1, 1], strides = [1, 1]} : vector<8x128xf32> to vector<1x1xf32>
    %420 = arith.addf %418, %419 : vector<1x1xf32>
    %421 = arith.negf %420 : vector<1x1xf32>
    %422 = math.exp %421 : vector<1x1xf32>
    %cst_116 = arith.constant 1.000000e+00 : f32
    %423 = vector.broadcast %cst_116 : f32 to vector<1x1xf32>
    %424 = arith.addf %423, %422 : vector<1x1xf32>
    %425 = arith.divf %423, %424 : vector<1x1xf32>
    %426 = vector.shape_cast %425 : vector<1x1xf32> to vector<1x1x1xf32>
    %427 = vector.shape_cast %426 : vector<1x1x1xf32> to vector<1x1x1xf32>
    %428 = vector.broadcast %427 : vector<1x1x1xf32> to vector<1x1x128xf32>
    %c0_117 = arith.constant 0 : index
    %c0_118 = arith.constant 0 : index
    %c0_119 = arith.constant 0 : index
    %429 = vector.load %arg9[%c0_117, %c0_118, %c0_119] : memref<1x1x128xf32, #tpu.memory_space<vmem>>, vector<1x1x128xf32>
    tpu.vector_store %arg9[%c0_117, %c0_118, %c0_119], %428 {strides = array<i32>} : memref<1x1x128xf32, #tpu.memory_space<vmem>>, vector<1x1x128xf32>,
    return
  }
  func.func @transform_0(%arg0: i32) -> (i32, i32, i32) {
    %c0_i32 = arith.constant 0 : i32
    %c0_i32_0 = arith.constant 0 : i32
    %c0_i32_1 = arith.constant 0 : i32
    return %arg0, %c0_i32, %c0_i32_0 : i32, i32, i32
  }
  func.func @transform_1(%arg0: i32) -> (i32, i32) {
    %c0_i32 = arith.constant 0 : i32
    %c0_i32_0 = arith.constant 0 : i32
    %c0_i32_1 = arith.constant 0 : i32
    return %c0_i32, %c0_i32_0 : i32, i32
  }
  func.func @transform_2(%arg0: i32) -> (i32, i32, i32) {
    %c0_i32 = arith.constant 0 : i32
    %c0_i32_0 = arith.constant 0 : i32
    %c0_i32_1 = arith.constant 0 : i32
    %c0_i32_2 = arith.constant 0 : i32
    return %c0_i32, %c0_i32_0, %c0_i32_1 : i32, i32, i32
  }
  func.func @transform_3(%arg0: i32) -> (i32, i32, i32) {
    %c0_i32 = arith.constant 0 : i32
    %c0_i32_0 = arith.constant 0 : i32
    %c0_i32_1 = arith.constant 0 : i32
    %c0_i32_2 = arith.constant 0 : i32
    return %c0_i32, %c0_i32_0, %c0_i32_1 : i32, i32, i32
  }
  func.func @transform_4(%arg0: i32) -> (i32, i32, i32) {
    %c0_i32 = arith.constant 0 : i32
    %c0_i32_0 = arith.constant 0 : i32
    %c0_i32_1 = arith.constant 0 : i32
    %c0_i32_2 = arith.constant 0 : i32
    return %c0_i32, %c0_i32_0, %c0_i32_1 : i32, i32, i32
  }
  func.func @transform_5(%arg0: i32) -> (i32, i32, i32) {
    %c0_i32 = arith.constant 0 : i32
    %c0_i32_0 = arith.constant 0 : i32
    %c0_i32_1 = arith.constant 0 : i32
    %c0_i32_2 = arith.constant 0 : i32
    return %c0_i32, %c0_i32_0, %c0_i32_1 : i32, i32, i32
  }
  func.func @transform_6(%arg0: i32) -> (i32, i32, i32) {
    %c0_i32 = arith.constant 0 : i32
    %c0_i32_0 = arith.constant 0 : i32
    %c0_i32_1 = arith.constant 0 : i32
    %c0_i32_2 = arith.constant 0 : i32
    return %c0_i32, %c0_i32_0, %c0_i32_1 : i32, i32, i32
  }
  func.func @transform_7(%arg0: i32) -> (i32, i32) {
    %c0_i32 = arith.constant 0 : i32
    %c0_i32_0 = arith.constant 0 : i32
    %c0_i32_1 = arith.constant 0 : i32
    return %c0_i32, %c0_i32_0 : i32, i32
  }
  func.func @transform_8(%arg0: i32) -> (i32, i32, i32) {
    %c0_i32 = arith.constant 0 : i32
    %c0_i32_0 = arith.constant 0 : i32
    %c0_i32_1 = arith.constant 0 : i32
    return %arg0, %c0_i32, %c0_i32_0 : i32, i32, i32
  }
}

</mosaic_0001>

<llo_original>
// kernel: transformer_classifier_forward.1
$region0: #{transformer_classifier_forward.1}
  #allocation0 [shape = 'u32[]', space=smem, size = 0x4, offset = 0x4, fixed_abs, tag = 'smem constant byte address 0x4 - core index']
  #allocation1 [shape = 'u32[144,128]{1,0:T(1,128)}', space=vmem, size = 0x12000, scoped, tag = 'internal scratch']
  %s0 = inlined_call_operand.vmem [shape: s32[2,8,1], index: 0, kind: input, shape index: {}]
  %s1 = inlined_call_operand.hbm [shape: bf16[128,128], index: 1, kind: input, shape index: {}]
  %s2 = inlined_call_operand.hbm [shape: bf16[2,128,384], index: 2, kind: input, shape index: {}]
  %s3 = inlined_call_operand.hbm [shape: bf16[2,128,128], index: 3, kind: input, shape index: {}]
  %s4 = inlined_call_operand.hbm [shape: bf16[2,128,256], index: 4, kind: input, shape index: {}]
  %s5 = inlined_call_operand.hbm [shape: bf16[2,256,128], index: 5, kind: input, shape index: {}]
  %s6 = inlined_call_operand.hbm [shape: f32[2,8,384], index: 6, kind: input, shape index: {}]
  %s7 = inlined_call_operand.vmem [shape: f32[8,128], index: 7, kind: input, shape index: {}]
  %s8 = inlined_call_operand.vmem [shape: f32[2,1,128], index: 8, kind: output, shape index: {}]
  %s9 = sld [smem:[#allocation0]]
  $region89: #{transformer_classifier_forward.1} parent=0
    _
  %s11 = ssub.s32 1, %s9
  %s12 = scalar_select 0, %s11, %s9
  $region1: #{transformer_classifier_forward.1} parent=0
    #allocation2 [shape = 'u8[32768]{0}', space=vmem, size = 0x8000, scoped, tag = 'input window, operand 1, single buffered']
    #allocation3 [shape = 's32[2]{0}', space=sflag, size = 0x8, scoped, tag = 'scoped memory for transformer_classifier_forward.1']
    #allocation4 [shape = 'u8[196608]{0}', space=vmem, size = 0x30000, scoped, tag = 'input window, operand 2, single buffered']
    #allocation5 [shape = 's32[1]{0}', space=sflag, size = 0x4, scoped, tag = 'scoped memory for transformer_classifier_forward.1']
    #allocation6 [shape = 'u8[65536]{0}', space=vmem, size = 0x10000, scoped, tag = 'input window, operand 3, single buffered']
    #allocation7 [shape = 'u8[131072]{0}', space=vmem, size = 0x20000, scoped, tag = 'input window, operand 4, single buffered']
    #allocation8 [shape = 's32[1]{0}', space=sflag, size = 0x4, scoped, tag = 'scoped memory for transformer_classifier_forward.1']
    #allocation9 [shape = 'u8[131072]{0}', space=vmem, size = 0x20000, scoped, tag = 'input window, operand 5, single buffered']
    #allocation10 [shape = 'u8[24576]{0}', space=vmem, size = 0x6000, scoped, tag = 'input window, operand 6, single buffered']
    #allocation11 [shape = 's32[1]{0}', space=sflag, size = 0x4, scoped, tag = 'scoped memory for transformer_classifier_forward.1']
    %13 = vsyncpa [#allocation3], 0
    %14 = vsyncpa [#allocation5], 0
    %15 = vsyncpa [#allocation8], 0
    %16 = vsyncpa [#allocation11], 0
    loop: start=0, step=1, limit=4
    $region2: #{transformer_classifier_forward.1} parent=1 // loop_pre_header
      _
    $region3: #{transformer_classifier_forward.1} parent=1 // loop_header
      %s18 = sphi 0, %s22
      %p19 = scmp.ge.s32.totalorder %s18, 4
      %s28 = sphi 0, %s30
      %s31 = sphi 0, %s28
      %s32 = sphi 0, %s31
      %s48 = sphi 0, %s32
      %s52 = sphi 0, %s52
      %s54 = sphi 0, %s52
      %s55 = sphi 0, %s54
      %s69 = sphi 0, %s55
      %s73 = sphi 0, %s73
      %s75 = sphi 0, %s73
      %s76 = sphi 0, %s75
      %s90 = sphi 0, %s76
      %s94 = sphi 0, %s94
      %s96 = sphi 0, %s94
      %s97 = sphi 0, %s96
      %s111 = sphi 0, %s97
      %s115 = sphi 0, %s115
      %s117 = sphi 0, %s115
      %s118 = sphi 0, %s117
      %s132 = sphi 0, %s118
      %s136 = sphi 0, %s136
      %s138 = sphi 0, %s136
      %s139 = sphi 0, %s138
      %s153 = sphi 0, %s139
      %s157 = sphi 0, %s157
      %s159 = sphi 0, %s157
      %s160 = sphi 0, %s159
      %s174 = sphi 0, %s160
      %s178 = sphi 0, %s178
      %s180 = sphi 0, %s178
      %s181 = sphi 0, %s180
      %s195 = sphi 0, %s181
      %s201 = sphi 0, %s203
      %s204 = sphi 0, %s201
      %s205 = sphi 0, %s204
      %s221 = sphi 0, %s205
    $region4: #{transformer_classifier_forward.1} parent=1 // loop_header_branch
      %21 = sbr.rel (%p19) target = $region8
    $region5: #{transformer_classifier_forward.1} parent=1 // loop_body
      %s23 = ssub.s32 %s18, 1
      %s24 = ssub.s32 %s18, 2
      %s25 = sadd.s32 %s18, 1
      %s26 = ssub.s32 %s18, %s25
      %p27 = scmp.eq.s32.totalorder %s26, 0
      %s29 = sadd.s32 %s28, 1
      %s30 = scalar_select %p27, %s28, %s29
      %p33 = pneg %p27
      %p34 = scmp.eq.s32.totalorder %s18, 1
      %p35 = por %p33, %p34
      %p36 = scmp.ne.s32.totalorder %s28, %s31
      %p37 = scmp.eq.s32.totalorder %s18, 0
      %p38 = por %p36, %p37
      %p39 = scmp.ne.s32.totalorder %s28, %s31
      %p40 = scmp.eq.s32.totalorder %s23, 1
      %p41 = por %p39, %p40
      %p42 = scmp.ne.s32.totalorder %s31, %s32
      %p43 = scmp.eq.s32.totalorder %s23, 0
      %p44 = por %p42, %p43
      %p45 = scmp.ne.s32.totalorder %s31, %s32
      %p46 = scmp.eq.s32.totalorder %s24, 1
      %p47 = por %p45, %p46
      %p49 = scmp.ne.s32.totalorder %s32, %s48
      %p50 = scmp.eq.s32.totalorder %s24, 0
      %p51 = por %p49, %p50
      %s53 = sadd.s32 %s52, 1
      %p56 = scmp.eq.s32.totalorder %s18, 1
      %p57 = scmp.ne.s32.totalorder %s52, %s54
      %p58 = scmp.eq.s32.totalorder %s18, 0
      %p59 = por %p57, %p58
      %p60 = scmp.ne.s32.totalorder %s52, %s54
      %p61 = scmp.eq.s32.totalorder %s23, 1
      %p62 = por %p60, %p61
      %p63 = scmp.ne.s32.totalorder %s54, %s55
      %p64 = scmp.eq.s32.totalorder %s23, 0
      %p65 = por %p63, %p64
      %p66 = scmp.ne.s32.totalorder %s54, %s55
      %p67 = scmp.eq.s32.totalorder %s24, 1
      %p68 = por %p66, %p67
      %p70 = scmp.ne.s32.totalorder %s55, %s69
      %p71 = scmp.eq.s32.totalorder %s24, 0
      %p72 = por %p70, %p71
      %s74 = sadd.s32 %s73, 1
      %p77 = scmp.eq.s32.totalorder %s18, 1
      %p78 = scmp.ne.s32.totalorder %s73, %s75
      %p79 = scmp.eq.s32.totalorder %s18, 0
      %p80 = por %p78, %p79
      %p81 = scmp.ne.s32.totalorder %s73, %s75
      %p82 = scmp.eq.s32.totalorder %s23, 1
      %p83 = por %p81, %p82
      %p84 = scmp.ne.s32.totalorder %s75, %s76
      %p85 = scmp.eq.s32.totalorder %s23, 0
      %p86 = por %p84, %p85
      %p87 = scmp.ne.s32.totalorder %s75, %s76
      %p88 = scmp.eq.s32.totalorder %s24, 1
      %p89 = por %p87, %p88
      %p91 = scmp.ne.s32.totalorder %s76, %s90
      %p92 = scmp.eq.s32.totalorder %s24, 0
      %p93 = por %p91, %p92
      %s95 = sadd.s32 %s94, 1
      %p98 = scmp.eq.s32.totalorder %s18, 1
      %p99 = scmp.ne.s32.totalorder %s94, %s96
      %p100 = scmp.eq.s32.totalorder %s18, 0
      %p101 = por %p99, %p100
      %p102 = scmp.ne.s32.totalorder %s94, %s96
      %p103 = scmp.eq.s32.totalorder %s23, 1
      %p104 = por %p102, %p103
      %p105 = scmp.ne.s32.totalorder %s96, %s97
      %p106 = scmp.eq.s32.totalorder %s23, 0
      %p107 = por %p105, %p106
      %p108 = scmp.ne.s32.totalorder %s96, %s97
      %p109 = scmp.eq.s32.totalorder %s24, 1
      %p110 = por %p108, %p109
      %p112 = scmp.ne.s32.totalorder %s97, %s111
      %p113 = scmp.eq.s32.totalorder %s24, 0
      %p114 = por %p112, %p113
      %s116 = sadd.s32 %s115, 1
      %p119 = scmp.eq.s32.totalorder %s18, 1
      %p120 = scmp.ne.s32.totalorder %s115, %s117
      %p121 = scmp.eq.s32.totalorder %s18, 0
      %p122 = por %p120, %p121
      %p123 = scmp.ne.s32.totalorder %s115, %s117
      %p124 = scmp.eq.s32.totalorder %s23, 1
      %p125 = por %p123, %p124
      %p126 = scmp.ne.s32.totalorder %s117, %s118
      %p127 = scmp.eq.s32.totalorder %s23, 0
      %p128 = por %p126, %p127
      %p129 = scmp.ne.s32.totalorder %s117, %s118
      %p130 = scmp.eq.s32.totalorder %s24, 1
      %p131 = por %p129, %p130
      %p133 = scmp.ne.s32.totalorder %s118, %s132
      %p134 = scmp.eq.s32.totalorder %s24, 0
      %p135 = por %p133, %p134
      %s137 = sadd.s32 %s136, 1
      %p140 = scmp.eq.s32.totalorder %s18, 1
      %p141 = scmp.ne.s32.totalorder %s136, %s138
      %p142 = scmp.eq.s32.totalorder %s18, 0
      %p143 = por %p141, %p142
      %p144 = scmp.ne.s32.totalorder %s136, %s138
      %p145 = scmp.eq.s32.totalorder %s23, 1
      %p146 = por %p144, %p145
      %p147 = scmp.ne.s32.totalorder %s138, %s139
      %p148 = scmp.eq.s32.totalorder %s23, 0
      %p149 = por %p147, %p148
      %p150 = scmp.ne.s32.totalorder %s138, %s139
      %p151 = scmp.eq.s32.totalorder %s24, 1
      %p152 = por %p150, %p151
      %p154 = scmp.ne.s32.totalorder %s139, %s153
      %p155 = scmp.eq.s32.totalorder %s24, 0
      %p156 = por %p154, %p155
      %s158 = sadd.s32 %s157, 1
      %p161 = scmp.eq.s32.totalorder %s18, 1
      %p162 = scmp.ne.s32.totalorder %s157, %s159
      %p163 = scmp.eq.s32.totalorder %s18, 0
      %p164 = por %p162, %p163
      %p165 = scmp.ne.s32.totalorder %s157, %s159
      %p166 = scmp.eq.s32.totalorder %s23, 1
      %p167 = por %p165, %p166
      %p168 = scmp.ne.s32.totalorder %s159, %s160
      %p169 = scmp.eq.s32.totalorder %s23, 0
      %p170 = por %p168, %p169
      %p171 = scmp.ne.s32.totalorder %s159, %s160
      %p172 = scmp.eq.s32.totalorder %s24, 1
      %p173 = por %p171, %p172
      %p175 = scmp.ne.s32.totalorder %s160, %s174
      %p176 = scmp.eq.s32.totalorder %s24, 0
      %p177 = por %p175, %p176
      %s179 = sadd.s32 %s178, 1
      %p182 = scmp.eq.s32.totalorder %s18, 1
      %p183 = scmp.ne.s32.totalorder %s178, %s180
      %p184 = scmp.eq.s32.totalorder %s18, 0
      %p185 = por %p183, %p184
      %p186 = scmp.ne.s32.totalorder %s178, %s180
      %p187 = scmp.eq.s32.totalorder %s23, 1
      %p188 = por %p186, %p187
      %p189 = scmp.ne.s32.totalorder %s180, %s181
      %p190 = scmp.eq.s32.totalorder %s23, 0
      %p191 = por %p189, %p190
      %p192 = scmp.ne.s32.totalorder %s180, %s181
      %p193 = scmp.eq.s32.totalorder %s24, 1
      %p194 = por %p192, %p193
      %p196 = scmp.ne.s32.totalorder %s181, %s195
      %p197 = scmp.eq.s32.totalorder %s24, 0
      %p198 = por %p196, %p197
      %s199 = ssub.s32 %s18, %s25
      %p200 = scmp.eq.s32.totalorder %s199, 0
      %s202 = sadd.s32 %s201, 1
      %s203 = scalar_select %p200, %s201, %s202
      %p206 = pneg %p200
      %p207 = scmp.eq.s32.totalorder %s18, 1
      %p208 = por %p206, %p207
      %p209 = scmp.ne.s32.totalorder %s201, %s204
      %p210 = scmp.eq.s32.totalorder %s18, 0
      %p211 = por %p209, %p210
      %p212 = scmp.ne.s32.totalorder %s201, %s204
      %p213 = scmp.eq.s32.totalorder %s23, 1
      %p214 = por %p212, %p213
      %p215 = scmp.ne.s32.totalorder %s204, %s205
      %p216 = scmp.eq.s32.totalorder %s23, 0
      %p217 = por %p215, %p216
      %p218 = scmp.ne.s32.totalorder %s204, %s205
      %p219 = scmp.eq.s32.totalorder %s24, 1
      %p220 = por %p218, %p219
      %p222 = scmp.ne.s32.totalorder %s205, %s221
      %p223 = scmp.eq.s32.totalorder %s24, 0
      %p224 = por %p222, %p223
      %p225 = scmp.le.s32.totalorder 1, %s18
      %p226 = scmp.lt.s32.totalorder %s18, 3
      %p227 = pnand %p225, %p226
      %p228 = pneg %p227
      // Predicated region
      $region9: #{transformer_classifier_forward.1} parent=5 // pred_check
        _
      $region10: #{transformer_classifier_forward.1} parent=5 // pred_check_branch
        %230 = sbr.rel (%p227) target = $region12
      $region11: #{transformer_classifier_forward.1} parent=5 // pred_region
        %s231 = ssub.s32 %s18, 1
        // Predicated region
        $region13: #{transformer_classifier_forward.1} parent=11 // pred_check
          %p232 = pneg %p65
        $region14: #{transformer_classifier_forward.1} parent=11 // pred_check_branch
          %234 = sbr.rel (%p232) target = $region16
        $region15: #{transformer_classifier_forward.1} parent=11 // pred_region
          %s236 = ssub.s32 1024, 1024
          %237 = vsyncadd [#allocation3], %s236
          %s238 = sshll.u32 [#allocation2], 4
          %s239 = int_to_ptr.vmem [resolvable:$true] %s238
          %244 = dma.hbm_to_vmem [thread:$0]  %s1, 1024, %s239, [#allocation3], 64, 64, 4
        $region16: #{transformer_classifier_forward.1} parent=11 // pred_fallthru
          _
        // Predicated region
        $region17: #{transformer_classifier_forward.1} parent=11 // pred_check
          %p245 = pneg %p86
        $region18: #{transformer_classifier_forward.1} parent=11 // pred_check_branch
          %247 = sbr.rel (%p245) target = $region20
        $region19: #{transformer_classifier_forward.1} parent=11 // pred_region
          %s249 = ssub.s32 6144, 6144
          %250 = vsyncadd [#allocation5], %s249
          %s251 = sshll.u32 [#allocation4], 4
          %s252 = int_to_ptr.vmem [resolvable:$true] %s251
          %257 = dma.hbm_to_vmem [thread:$0]  %s2, 6144, %s252, [#allocation5], 192, 192, 12
        $region20: #{transformer_classifier_forward.1} parent=11 // pred_fallthru
          _
        // Predicated region
        $region21: #{transformer_classifier_forward.1} parent=11 // pred_check
          %p258 = pneg %p107
        $region22: #{transformer_classifier_forward.1} parent=11 // pred_check_branch
          %260 = sbr.rel (%p258) target = $region24
        $region23: #{transformer_classifier_forward.1} parent=11 // pred_region
          %s262 = ssub.s32 2048, 2048
          %263 = vsyncadd [#allocation5], %s262
          %s264 = sshll.u32 [#allocation6], 4
          %s265 = int_to_ptr.vmem [resolvable:$true] %s264
          %270 = dma.hbm_to_vmem [thread:$0]  %s3, 2048, %s265, [#allocation5], 64, 64, 4
        $region24: #{transformer_classifier_forward.1} parent=11 // pred_fallthru
          _
        // Predicated region
        $region25: #{transformer_classifier_forward.1} parent=11 // pred_check
          %p271 = pneg %p128
        $region26: #{transformer_classifier_forward.1} parent=11 // pred_check_branch
          %273 = sbr.rel (%p271) target = $region28
        $region27: #{transformer_classifier_forward.1} parent=11 // pred_region
          %s275 = ssub.s32 4096, 4096
          %276 = vsyncadd [#allocation8], %s275
          %s277 = sshll.u32 [#allocation7], 4
          %s278 = int_to_ptr.vmem [resolvable:$true] %s277
          %283 = dma.hbm_to_vmem [thread:$0]  %s4, 4096, %s278, [#allocation8], 128, 128, 8
        $region28: #{transformer_classifier_forward.1} parent=11 // pred_fallthru
          _
        // Predicated region
        $region29: #{transformer_classifier_forward.1} parent=11 // pred_check
          %p284 = pneg %p149
        $region30: #{transformer_classifier_forward.1} parent=11 // pred_check_branch
          %286 = sbr.rel (%p284) target = $region32
        $region31: #{transformer_classifier_forward.1} parent=11 // pred_region
          %s288 = ssub.s32 4096, 4096
          %289 = vsyncadd [#allocation8], %s288
          %s290 = sshll.u32 [#allocation9], 4
          %s291 = int_to_ptr.vmem [resolvable:$true] %s290
          %296 = dma.hbm_to_vmem [thread:$0]  %s5, 4096, %s291, [#allocation8], 64, 64, 4
        $region32: #{transformer_classifier_forward.1} parent=11 // pred_fallthru
          _
        // Predicated region
        $region33: #{transformer_classifier_forward.1} parent=11 // pred_check
          %p297 = pneg %p170
        $region34: #{transformer_classifier_forward.1} parent=11 // pred_check_branch
          %299 = sbr.rel (%p297) target = $region36
        $region35: #{transformer_classifier_forward.1} parent=11 // pred_region
          %s301 = ssub.s32 768, 768
          %302 = vsyncadd [#allocation11], %s301
          %s303 = sshll.u32 [#allocation10], 4
          %s304 = int_to_ptr.vmem [resolvable:$true] %s303
          %309 = dma.hbm_to_vmem [thread:$0]  %s6, 768, %s304, [#allocation11], 384, 384, 24
        $region36: #{transformer_classifier_forward.1} parent=11 // pred_fallthru
          _
        // Predicated region
        $region37: #{transformer_classifier_forward.1} parent=11 // pred_check
          %p310 = pneg %p191
        $region38: #{transformer_classifier_forward.1} parent=11 // pred_check_branch
          %312 = sbr.rel (%p310) target = $region40
        $region39: #{transformer_classifier_forward.1} parent=11 // pred_region
          _
        $region40: #{transformer_classifier_forward.1} parent=11 // pred_fallthru
          _
      $region12: #{transformer_classifier_forward.1} parent=5 // pred_fallthru
        _
      %p313 = scmp.lt.s32.totalorder %s18, 2
      // Predicated region
      $region41: #{transformer_classifier_forward.1} parent=5 // pred_check
        %p314 = pneg %p313
      $region42: #{transformer_classifier_forward.1} parent=5 // pred_check_branch
        %316 = sbr.rel (%p314) target = $region44
      $region43: #{transformer_classifier_forward.1} parent=5 // pred_region
        // Predicated region
        $region45: #{transformer_classifier_forward.1} parent=43 // pred_check
          %p317 = pneg %p38
        $region46: #{transformer_classifier_forward.1} parent=43 // pred_check_branch
          %319 = sbr.rel (%p317) target = $region48
        $region47: #{transformer_classifier_forward.1} parent=43 // pred_region
          %p320 = scmp.lt.s32.totalorder %s18, 1
          %s321 = scalar_select %p320, %s18, 1
          %s322 = smul.addr %s321, 8
          %s323 = scalar_lea.vmem %s0, %s322
        $region48: #{transformer_classifier_forward.1} parent=43 // pred_fallthru
          _
      $region44: #{transformer_classifier_forward.1} parent=5 // pred_fallthru
        _
      %p324 = scmp.le.s32.totalorder 1, %s18
      %p325 = scmp.lt.s32.totalorder %s18, 3
      %p326 = pnand %p324, %p325
      %p327 = pneg %p326
      // Predicated region
      $region49: #{transformer_classifier_forward.1} parent=5 // pred_check
        _
      $region50: #{transformer_classifier_forward.1} parent=5 // pred_check_branch
        %329 = sbr.rel (%p326) target = $region52
      $region51: #{transformer_classifier_forward.1} parent=5 // pred_region
        %s330 = ssub.s32 %s18, 1
        // Predicated region
        $region53: #{transformer_classifier_forward.1} parent=51 // pred_check
          %p331 = pneg %p65
        $region54: #{transformer_classifier_forward.1} parent=51 // pred_check_branch
          %333 = sbr.rel (%p331) target = $region56
        $region55: #{transformer_classifier_forward.1} parent=51 // pred_region
          %334 = dma.done [#allocation3], 1024
        $region56: #{transformer_classifier_forward.1} parent=51 // pred_fallthru
          _
        // Predicated region
        $region57: #{transformer_classifier_forward.1} parent=51 // pred_check
          %p335 = pneg %p86
        $region58: #{transformer_classifier_forward.1} parent=51 // pred_check_branch
          %337 = sbr.rel (%p335) target = $region60
        $region59: #{transformer_classifier_forward.1} parent=51 // pred_region
          %338 = dma.done [#allocation5], 6144
        $region60: #{transformer_classifier_forward.1} parent=51 // pred_fallthru
          _
        // Predicated region
        $region61: #{transformer_classifier_forward.1} parent=51 // pred_check
          %p339 = pneg %p107
        $region62: #{transformer_classifier_forward.1} parent=51 // pred_check_branch
          %341 = sbr.rel (%p339) target = $region64
        $region63: #{transformer_classifier_forward.1} parent=51 // pred_region
          %342 = dma.done [#allocation5], 2048
        $region64: #{transformer_classifier_forward.1} parent=51 // pred_fallthru
          _
        // Predicated region
        $region65: #{transformer_classifier_forward.1} parent=51 // pred_check
          %p343 = pneg %p128
        $region66: #{transformer_classifier_forward.1} parent=51 // pred_check_branch
          %345 = sbr.rel (%p343) target = $region68
        $region67: #{transformer_classifier_forward.1} parent=51 // pred_region
          %346 = dma.done [#allocation8], 4096
        $region68: #{transformer_classifier_forward.1} parent=51 // pred_fallthru
          _
        // Predicated region
        $region69: #{transformer_classifier_forward.1} parent=51 // pred_check
          %p347 = pneg %p149
        $region70: #{transformer_classifier_forward.1} parent=51 // pred_check_branch
          %349 = sbr.rel (%p347) target = $region72
        $region71: #{transformer_classifier_forward.1} parent=51 // pred_region
          %350 = dma.done [#allocation8], 4096
        $region72: #{transformer_classifier_forward.1} parent=51 // pred_fallthru
          _
        // Predicated region
        $region73: #{transformer_classifier_forward.1} parent=51 // pred_check
          %p351 = pneg %p170
        $region74: #{transformer_classifier_forward.1} parent=51 // pred_check_branch
          %353 = sbr.rel (%p351) target = $region76
        $region75: #{transformer_classifier_forward.1} parent=51 // pred_region
          %354 = dma.done [#allocation11], 768
        $region76: #{transformer_classifier_forward.1} parent=51 // pred_fallthru
          _
        %p355 = scmp.lt.s32.totalorder %s23, 1
        %s356 = scalar_select %p355, %s23, 1
        %s357 = smul.addr %s356, 8
        %s358 = scalar_lea.vmem %s0, %s357
        %p359 = pneg %p44
        %p360 = pneg %p41
        %p361 = pneg %p65
        %p362 = pneg %p62
        %p363 = pneg %p86
        %p364 = pneg %p83
        %p365 = pneg %p107
        %p366 = pneg %p104
        %p367 = pneg %p128
        %p368 = pneg %p125
        %p369 = pneg %p149
        %p370 = pneg %p146
        %p371 = pneg %p170
        %p372 = pneg %p167
        %p373 = pneg %p191
        %p374 = pneg %p188
        %p375 = pneg %p217
        %p376 = pneg %p214
        %p377 = scmp.lt.s32.totalorder %s23, 1
        %s378 = scalar_select %p377, %s23, 1
        %s379 = scalar_lea.vmem %s8, %s378
        %p380 = scmp.lt.s32.totalorder %s23, 1
        %s381 = scalar_select %p380, %s23, 1
        %s382 = smul.addr %s381, 8
        %s383 = scalar_lea.vmem %s0, %s382
        %p384 = scmp.lt.s32.totalorder %s23, 1
        %s385 = scalar_select %p384, %s23, 1
        %s386 = scalar_lea.vmem %s8, %s385
        %v388 = vld [vmem:[%s383] sm:$0xff]
        %v389 = vlaneseq
        %v390 = vand.u32 %v389, 127
        %391 = vset.pattern.permute.xlu0 0
        %392 = vperm.xlu0 %391, %v388
        %v393 = vpop.permute.xlu0 %392
        %vm394 = vcmp.eq.s32.totalorder %v390, %v393
        %v395 = vsel %vm394, 1, 0
        %v396 = vcvt.s32.f32 %v395
        %v397 = vpack.c.bf16 %v396, %v396
        %v398 = vld [vmem:[#allocation2] sm:$0xf]
        %v399 = vld [vmem:[#allocation2 + $0x4] sm:$0xf]
        %v400 = vld [vmem:[#allocation2 + $0x8] sm:$0xf]
        %v401 = vld [vmem:[#allocation2 + $0xc] sm:$0xf]
        %v402 = vld [vmem:[#allocation2 + $0x10] sm:$0xf]
        %v403 = vld [vmem:[#allocation2 + $0x14] sm:$0xf]
        %v404 = vld [vmem:[#allocation2 + $0x18] sm:$0xf]
        %v405 = vld [vmem:[#allocation2 + $0x1c] sm:$0xf]
        %v406 = vld [vmem:[#allocation2 + $0x20] sm:$0xf]
        %v407 = vld [vmem:[#allocation2 + $0x24] sm:$0xf]
        %v408 = vld [vmem:[#allocation2 + $0x28] sm:$0xf]
        %v409 = vld [vmem:[#allocation2 + $0x2c] sm:$0xf]
        %v410 = vld [vmem:[#allocation2 + $0x30] sm:$0xf]
        %v411 = vld [vmem:[#allocation2 + $0x34] sm:$0xf]
        %v412 = vld [vmem:[#allocation2 + $0x38] sm:$0xf]
        %v413 = vld [vmem:[#allocation2 + $0x3c] sm:$0xf]
        %v430 = vunpack.c.l.b16 %v398
        %v431 = vunpack.c.l.b16 %v399
        %v432 = vunpack.c.l.b16 %v400
        %v433 = vunpack.c.l.b16 %v401
        %v434 = vunpack.c.l.b16 %v402
        %v435 = vunpack.c.l.b16 %v403
        %v436 = vunpack.c.l.b16 %v404
        %v437 = vunpack.c.l.b16 %v405
        %v438 = vunpack.c.l.b16 %v406
        %v439 = vunpack.c.l.b16 %v407
        %v440 = vunpack.c.l.b16 %v408
        %v441 = vunpack.c.l.b16 %v409
        %v442 = vunpack.c.l.b16 %v410
        %v443 = vunpack.c.l.b16 %v411
        %v444 = vunpack.c.l.b16 %v412
        %v445 = vunpack.c.l.b16 %v413
        %v446 = vpack.c.b16 %v431, %v430
        %v447 = vpack.c.b16 %v433, %v432
        %v448 = vpack.c.b16 %v435, %v434
        %v449 = vpack.c.b16 %v437, %v436
        %v450 = vpack.c.b16 %v439, %v438
        %v451 = vpack.c.b16 %v441, %v440
        %v452 = vpack.c.b16 %v443, %v442
        %v453 = vpack.c.b16 %v445, %v444
        %462 = vmatprep.subr.bf16.mxu0 0
        %463 = vmatpush1.bf16.msra.mxu0 %v453
        %464 = vmatprep.subr.bf16.mxu0 0
        %465 = vmatpush1.bf16.msra.mxu0 %v452
        %466 = vmatprep.subr.bf16.mxu0 0
        %467 = vmatpush1.bf16.msra.mxu0 %v451
        %468 = vmatprep.subr.bf16.mxu0 0
        %469 = vmatpush1.bf16.msra.mxu0 %v450
        %470 = vmatprep.subr.bf16.mxu0 0
        %471 = vmatpush1.bf16.msra.mxu0 %v449
        %472 = vmatprep.subr.bf16.mxu0 0
        %473 = vmatpush1.bf16.msra.mxu0 %v448
        %474 = vmatprep.subr.bf16.mxu0 0
        %475 = vmatpush1.bf16.msra.mxu0 %v447
        %476 = vmatprep.subr.bf16.mxu0 0
        %477 = vmatpush1.bf16.msra.mxu0 %v446
        %478 = vmatprep.subr.bf16.mxu0 0
        %479 = vmatpush2.bf16.msra.mxu0 0
        %480 = vmatprep.subr.bf16.mxu0 0
        %481 = vmatpush2.bf16.msra.mxu0 0
        %482 = vmatprep.subr.bf16.mxu0 0
        %483 = vmatpush2.bf16.msra.mxu0 0
        %484 = vmatprep.subr.bf16.mxu0 0
        %485 = vmatpush2.bf16.msra.mxu0 0
        %486 = vmatprep.subr.bf16.mxu0 0
        %487 = vmatpush2.bf16.msra.mxu0 0
        %488 = vmatprep.subr.bf16.mxu0 0
        %489 = vmatpush2.bf16.msra.mxu0 0
        %490 = vmatprep.subr.bf16.mxu0 0
        %491 = vmatpush2.bf16.msra.mxu0 0
        %492 = vmatprep.subr.bf16.mxu0 0
        %493 = vmatpush2.bf16.msra.mxu0 0
        %494 = vmatprep.mubr.bf16.mxu0 0
        %495 = vmatmul.mubr.bf16.gmra.mxu0 %v397
        %v496 = vpop.f32.mrf.mxu0
        %v497 = vadd.f32 0.0, %v496
        %v498 = vpop.f32.mrf.mxu0
        %v499 = vpop.f32.mrf.mxu0
        %v500 = vpop.f32.mrf.mxu0
        %501 = vdwg.mxu0
        %v502 = vld [vmem:[#allocation4] sm:$0xff]
        %v503 = vld [vmem:[#allocation4 + $0x8] sm:$0xf]
        %v504 = vld [vmem:[#allocation4 + $0xc] sm:$0xff]
        %v505 = vld [vmem:[#allocation4 + $0x14] sm:$0xf]
        %v506 = vld [vmem:[#allocation4 + $0x18] sm:$0xff]
        %v507 = vld [vmem:[#allocation4 + $0x20] sm:$0xf]
        %v508 = vld [vmem:[#allocation4 + $0x24] sm:$0xff]
        %v509 = vld [vmem:[#allocation4 + $0x2c] sm:$0xf]
        %v510 = vld [vmem:[#allocation4 + $0x30] sm:$0xff]
        %v511 = vld [vmem:[#allocation4 + $0x38] sm:$0xf]
        %v512 = vld [vmem:[#allocation4 + $0x3c] sm:$0xff]
        %v513 = vld [vmem:[#allocation4 + $0x44] sm:$0xf]
        %v514 = vld [vmem:[#allocation4 + $0x48] sm:$0xff]
        %v515 = vld [vmem:[#allocation4 + $0x50] sm:$0xf]
        %v516 = vld [vmem:[#allocation4 + $0x54] sm:$0xff]
        %v517 = vld [vmem:[#allocation4 + $0x5c] sm:$0xf]
        %v518 = vld [vmem:[#allocation4 + $0x60] sm:$0xff]
        %v519 = vld [vmem:[#allocation4 + $0x68] sm:$0xf]
        %v520 = vld [vmem:[#allocation4 + $0x6c] sm:$0xff]
        %v521 = vld [vmem:[#allocation4 + $0x74] sm:$0xf]
        %v522 = vld [vmem:[#allocation4 + $0x78] sm:$0xff]
        %v523 = vld [vmem:[#allocation4 + $0x80] sm:$0xf]
        %v524 = vld [vmem:[#allocation4 + $0x84] sm:$0xff]
        %v525 = vld [vmem:[#allocation4 + $0x8c] sm:$0xf]
        %v526 = vld [vmem:[#allocation4 + $0x90] sm:$0xff]
        %v527 = vld [vmem:[#allocation4 + $0x98] sm:$0xf]
        %v528 = vld [vmem:[#allocation4 + $0x9c] sm:$0xff]
        %v529 = vld [vmem:[#allocation4 + $0xa4] sm:$0xf]
        %v530 = vld [vmem:[#allocation4 + $0xa8] sm:$0xff]
        %v531 = vld [vmem:[#allocation4 + $0xb0] sm:$0xf]
        %v532 = vld [vmem:[#allocation4 + $0xb4] sm:$0xff]
        %v533 = vld [vmem:[#allocation4 + $0xbc] sm:$0xf]
        %v534 = vld [vmem:[#allocation6] sm:$0xf]
        %v535 = vld [vmem:[#allocation6 + $0x4] sm:$0xf]
        %v536 = vld [vmem:[#allocation6 + $0x8] sm:$0xf]
        %v537 = vld [vmem:[#allocation6 + $0xc] sm:$0xf]
        %v538 = vld [vmem:[#allocation6 + $0x10] sm:$0xf]
        %v539 = vld [vmem:[#allocation6 + $0x14] sm:$0xf]
        %v540 = vld [vmem:[#allocation6 + $0x18] sm:$0xf]
        %v541 = vld [vmem:[#allocation6 + $0x1c] sm:$0xf]
        %v542 = vld [vmem:[#allocation6 + $0x20] sm:$0xf]
        %v543 = vld [vmem:[#allocation6 + $0x24] sm:$0xf]
        %v544 = vld [vmem:[#allocation6 + $0x28] sm:$0xf]
        %v545 = vld [vmem:[#allocation6 + $0x2c] sm:$0xf]
        %v546 = vld [vmem:[#allocation6 + $0x30] sm:$0xf]
        %v547 = vld [vmem:[#allocation6 + $0x34] sm:$0xf]
        %v548 = vld [vmem:[#allocation6 + $0x38] sm:$0xf]
        %v549 = vld [vmem:[#allocation6 + $0x3c] sm:$0xf]
        %v550 = vld [vmem:[#allocation7] sm:$0xff]
        %v551 = vld [vmem:[#allocation7 + $0x8] sm:$0xff]
        %v552 = vld [vmem:[#allocation7 + $0x10] sm:$0xff]
        %v553 = vld [vmem:[#allocation7 + $0x18] sm:$0xff]
        %v554 = vld [vmem:[#allocation7 + $0x20] sm:$0xff]
        %v555 = vld [vmem:[#allocation7 + $0x28] sm:$0xff]
        %v556 = vld [vmem:[#allocation7 + $0x30] sm:$0xff]
        %v557 = vld [vmem:[#allocation7 + $0x38] sm:$0xff]
        %v558 = vld [vmem:[#allocation7 + $0x40] sm:$0xff]
        %v559 = vld [vmem:[#allocation7 + $0x48] sm:$0xff]
        %v560 = vld [vmem:[#allocation7 + $0x50] sm:$0xff]
        %v561 = vld [vmem:[#allocation7 + $0x58] sm:$0xff]
        %v562 = vld [vmem:[#allocation7 + $0x60] sm:$0xff]
        %v563 = vld [vmem:[#allocation7 + $0x68] sm:$0xff]
        %v564 = vld [vmem:[#allocation7 + $0x70] sm:$0xff]
        %v565 = vld [vmem:[#allocation7 + $0x78] sm:$0xff]
        %v566 = vld [vmem:[#allocation9] sm:$0xf]
        %v567 = vld [vmem:[#allocation9 + $0x4] sm:$0xf]
        %v568 = vld [vmem:[#allocation9 + $0x8] sm:$0xf]
        %v569 = vld [vmem:[#allocation9 + $0xc] sm:$0xf]
        %v570 = vld [vmem:[#allocation9 + $0x10] sm:$0xf]
        %v571 = vld [vmem:[#allocation9 + $0x14] sm:$0xf]
        %v572 = vld [vmem:[#allocation9 + $0x18] sm:$0xf]
        %v573 = vld [vmem:[#allocation9 + $0x1c] sm:$0xf]
        %v574 = vld [vmem:[#allocation9 + $0x20] sm:$0xf]
        %v575 = vld [vmem:[#allocation9 + $0x24] sm:$0xf]
        %v576 = vld [vmem:[#allocation9 + $0x28] sm:$0xf]
        %v577 = vld [vmem:[#allocation9 + $0x2c] sm:$0xf]
        %v578 = vld [vmem:[#allocation9 + $0x30] sm:$0xf]
        %v579 = vld [vmem:[#allocation9 + $0x34] sm:$0xf]
        %v580 = vld [vmem:[#allocation9 + $0x38] sm:$0xf]
        %v581 = vld [vmem:[#allocation9 + $0x3c] sm:$0xf]
        %v582 = vld [vmem:[#allocation9 + $0x40] sm:$0xf]
        %v583 = vld [vmem:[#allocation9 + $0x44] sm:$0xf]
        %v584 = vld [vmem:[#allocation9 + $0x48] sm:$0xf]
        %v585 = vld [vmem:[#allocation9 + $0x4c] sm:$0xf]
        %v586 = vld [vmem:[#allocation9 + $0x50] sm:$0xf]
        %v587 = vld [vmem:[#allocation9 + $0x54] sm:$0xf]
        %v588 = vld [vmem:[#allocation9 + $0x58] sm:$0xf]
        %v589 = vld [vmem:[#allocation9 + $0x5c] sm:$0xf]
        %v590 = vld [vmem:[#allocation9 + $0x60] sm:$0xf]
        %v591 = vld [vmem:[#allocation9 + $0x64] sm:$0xf]
        %v592 = vld [vmem:[#allocation9 + $0x68] sm:$0xf]
        %v593 = vld [vmem:[#allocation9 + $0x6c] sm:$0xf]
        %v594 = vld [vmem:[#allocation9 + $0x70] sm:$0xf]
        %v595 = vld [vmem:[#allocation9 + $0x74] sm:$0xf]
        %v596 = vld [vmem:[#allocation9 + $0x78] sm:$0xf]
        %v597 = vld [vmem:[#allocation9 + $0x7c] sm:$0xf]
        %v598 = vld [vmem:[#allocation10] sm:$0xff]
        %v599 = vld [vmem:[#allocation10 + $0x8] sm:$0xff]
        %v600 = vld [vmem:[#allocation10 + $0x10] sm:$0xff]
        %v601 = vpack.c.bf16 %v497, %v497
        %v602 = vlaneseq
        %v603 = vshrl.u32 %v602, 7
        %v604 = vsub.s32 0, %v603
        %v605 = vrot.slane %v598, %v604
        %v606 = vlaneseq
        %v607 = vshrl.u32 %v606, 7
        %v608 = vsub.s32 0, %v607
        %v609 = vrot.slane %v599, %v608
        %v610 = vlaneseq
        %v611 = vshrl.u32 %v610, 7
        %v612 = vsub.s32 0, %v611
        %v613 = vrot.slane %v600, %v612
        %v646 = vunpack.c.l.b16 %v502
        %v647 = vunpack.c.h.b16 %v502
        %v648 = vunpack.c.l.b16 %v503
        %v649 = vunpack.c.l.b16 %v504
        %v650 = vunpack.c.h.b16 %v504
        %v651 = vunpack.c.l.b16 %v505
        %v652 = vunpack.c.l.b16 %v506
        %v653 = vunpack.c.h.b16 %v506
        %v654 = vunpack.c.l.b16 %v507
        %v655 = vunpack.c.l.b16 %v508
        %v656 = vunpack.c.h.b16 %v508
        %v657 = vunpack.c.l.b16 %v509
        %v658 = vunpack.c.l.b16 %v510
        %v659 = vunpack.c.h.b16 %v510
        %v660 = vunpack.c.l.b16 %v511
        %v661 = vunpack.c.l.b16 %v512
        %v662 = vunpack.c.h.b16 %v512
        %v663 = vunpack.c.l.b16 %v513
        %v664 = vunpack.c.l.b16 %v514
        %v665 = vunpack.c.h.b16 %v514
        %v666 = vunpack.c.l.b16 %v515
        %v667 = vunpack.c.l.b16 %v516
        %v668 = vunpack.c.h.b16 %v516
        %v669 = vunpack.c.l.b16 %v517
        %v670 = vunpack.c.l.b16 %v518
        %v671 = vunpack.c.h.b16 %v518
        %v672 = vunpack.c.l.b16 %v519
        %v673 = vunpack.c.l.b16 %v520
        %v674 = vunpack.c.h.b16 %v520
        %v675 = vunpack.c.l.b16 %v521
        %v676 = vunpack.c.l.b16 %v522
        %v677 = vunpack.c.h.b16 %v522
        %v678 = vunpack.c.l.b16 %v523
        %v679 = vunpack.c.l.b16 %v524
        %v680 = vunpack.c.h.b16 %v524
        %v681 = vunpack.c.l.b16 %v525
        %v682 = vunpack.c.l.b16 %v526
        %v683 = vunpack.c.h.b16 %v526
        %v684 = vunpack.c.l.b16 %v527
        %v685 = vunpack.c.l.b16 %v528
        %v686 = vunpack.c.h.b16 %v528
        %v687 = vunpack.c.l.b16 %v529
        %v688 = vunpack.c.l.b16 %v530
        %v689 = vunpack.c.h.b16 %v530
        %v690 = vunpack.c.l.b16 %v531
        %v691 = vunpack.c.l.b16 %v532
        %v692 = vunpack.c.h.b16 %v532
        %v693 = vunpack.c.l.b16 %v533
        %v694 = vpack.c.b16 %v649, %v646
        %v695 = vpack.c.b16 %v650, %v647
        %v696 = vpack.c.b16 %v651, %v648
        %v697 = vpack.c.b16 %v655, %v652
        %v698 = vpack.c.b16 %v656, %v653
        %v699 = vpack.c.b16 %v657, %v654
        %v700 = vpack.c.b16 %v661, %v658
        %v701 = vpack.c.b16 %v662, %v659
        %v702 = vpack.c.b16 %v663, %v660
        %v703 = vpack.c.b16 %v667, %v664
        %v704 = vpack.c.b16 %v668, %v665
        %v705 = vpack.c.b16 %v669, %v666
        %v706 = vpack.c.b16 %v673, %v670
        %v707 = vpack.c.b16 %v674, %v671
        %v708 = vpack.c.b16 %v675, %v672
        %v709 = vpack.c.b16 %v679, %v676
        %v710 = vpack.c.b16 %v680, %v677
        %v711 = vpack.c.b16 %v681, %v678
        %v712 = vpack.c.b16 %v685, %v682
        %v713 = vpack.c.b16 %v686, %v683
        %v714 = vpack.c.b16 %v687, %v684
        %v715 = vpack.c.b16 %v691, %v688
        %v716 = vpack.c.b16 %v692, %v689
        %v717 = vpack.c.b16 %v693, %v690
        %742 = vmatprep.subr.bf16.mxu0 %v716
        %743 = vmatpush1.bf16.msra.mxu0 %v715
        %744 = vmatprep.subr.bf16.mxu0 %v713
        %745 = vmatpush1.bf16.msra.mxu0 %v712
        %746 = vmatprep.subr.bf16.mxu0 %v710
        %747 = vmatpush1.bf16.msra.mxu0 %v709
        %748 = vmatprep.subr.bf16.mxu0 %v707
        %749 = vmatpush1.bf16.msra.mxu0 %v706
        %750 = vmatprep.subr.bf16.mxu0 %v704
        %751 = vmatpush1.bf16.msra.mxu0 %v703
        %752 = vmatprep.subr.bf16.mxu0 %v701
        %753 = vmatpush1.bf16.msra.mxu0 %v700
        %754 = vmatprep.subr.bf16.mxu0 %v698
        %755 = vmatpush1.bf16.msra.mxu0 %v697
        %756 = vmatprep.subr.bf16.mxu0 %v695
        %757 = vmatpush1.bf16.msra.mxu0 %v694
        %758 = vmatprep.subr.bf16.mxu0 0
        %759 = vmatpush2.bf16.msra.mxu0 0
        %760 = vmatprep.subr.bf16.mxu0 0
        %761 = vmatpush2.bf16.msra.mxu0 0
        %762 = vmatprep.subr.bf16.mxu0 0
        %763 = vmatpush2.bf16.msra.mxu0 0
        %764 = vmatprep.subr.bf16.mxu0 0
        %765 = vmatpush2.bf16.msra.mxu0 0
        %766 = vmatprep.subr.bf16.mxu0 0
        %767 = vmatpush2.bf16.msra.mxu0 0
        %768 = vmatprep.subr.bf16.mxu0 0
        %769 = vmatpush2.bf16.msra.mxu0 0
        %770 = vmatprep.subr.bf16.mxu0 0
        %771 = vmatpush2.bf16.msra.mxu0 0
        %772 = vmatprep.subr.bf16.mxu0 0
        %773 = vmatpush2.bf16.msra.mxu0 0
        %774 = vmatprep.mubr.bf16.mxu0 0
        %775 = vmatmul.mubr.bf16.gmra.mxu0 %v601
        %v776 = vpop.f32.mrf.mxu0
        %v777 = vadd.f32 %v605, %v776
        %v778 = vpop.f32.mrf.mxu0
        %v779 = vadd.f32 %v609, %v778
        %v780 = vpop.f32.mrf.mxu0
        %v781 = vpop.f32.mrf.mxu0
        %782 = vdwg.mxu0
        %783 = vmatprep.subr.bf16.mxu0 0
        %784 = vmatpush1.bf16.msra.mxu0 %v717
        %785 = vmatprep.subr.bf16.mxu0 0
        %786 = vmatpush1.bf16.msra.mxu0 %v714
        %787 = vmatprep.subr.bf16.mxu0 0
        %788 = vmatpush1.bf16.msra.mxu0 %v711
        %789 = vmatprep.subr.bf16.mxu0 0
        %790 = vmatpush1.bf16.msra.mxu0 %v708
        %791 = vmatprep.subr.bf16.mxu0 0
        %792 = vmatpush1.bf16.msra.mxu0 %v705
        %793 = vmatprep.subr.bf16.mxu0 0
        %794 = vmatpush1.bf16.msra.mxu0 %v702
        %795 = vmatprep.subr.bf16.mxu0 0
        %796 = vmatpush1.bf16.msra.mxu0 %v699
        %797 = vmatprep.subr.bf16.mxu0 0
        %798 = vmatpush1.bf16.msra.mxu0 %v696
        %799 = vmatprep.subr.bf16.mxu0 0
        %800 = vmatpush2.bf16.msra.mxu0 0
        %801 = vmatprep.subr.bf16.mxu0 0
        %802 = vmatpush2.bf16.msra.mxu0 0
        %803 = vmatprep.subr.bf16.mxu0 0
        %804 = vmatpush2.bf16.msra.mxu0 0
        %805 = vmatprep.subr.bf16.mxu0 0
        %806 = vmatpush2.bf16.msra.mxu0 0
        %807 = vmatprep.subr.bf16.mxu0 0
        %808 = vmatpush2.bf16.msra.mxu0 0
        %809 = vmatprep.subr.bf16.mxu0 0
        %810 = vmatpush2.bf16.msra.mxu0 0
        %811 = vmatprep.subr.bf16.mxu0 0
        %812 = vmatpush2.bf16.msra.mxu0 0
        %813 = vmatprep.subr.bf16.mxu0 0
        %814 = vmatpush2.bf16.msra.mxu0 0
        %815 = vmatprep.mubr.bf16.mxu0 0
        %816 = vmatmul.mubr.bf16.gmra.mxu0 %v601
        %v817 = vpop.f32.mrf.mxu0
        %v818 = vadd.f32 %v613, %v817
        %v819 = vpop.f32.mrf.mxu0
        %v820 = vpop.f32.mrf.mxu0
        %v821 = vpop.f32.mrf.mxu0
        %822 = vdwg.mxu0
        %v823 = vpack.c.bf16 %v777, %v777
        %v824 = vpack.c.bf16 %v779, %v779
        %v825 = vpack.c.bf16 %v818, %v818
        %vm826 = vcmask 261120
        %v828 = vsel %vm826, %v823, 0
        %v831 = vsel %vm826, %v824, 0
        %833 = vmatprep.subr.bf16.mxu0 0
        %834 = vmatpush1.bf16.xpose.msra.mxu0 0
        %835 = vmatprep.subr.bf16.mxu0 0
        %836 = vmatpush1.bf16.xpose.msra.mxu0 0
        %837 = vmatprep.subr.bf16.mxu0 0
        %838 = vmatpush1.bf16.xpose.msra.mxu0 0
        %839 = vmatprep.subr.bf16.mxu0 0
        %840 = vmatpush1.bf16.xpose.msra.mxu0 0
        %841 = vmatprep.subr.bf16.mxu0 0
        %842 = vmatpush1.bf16.xpose.msra.mxu0 0
        %843 = vmatprep.subr.bf16.mxu0 0
        %844 = vmatpush1.bf16.xpose.msra.mxu0 0
        %845 = vmatprep.subr.bf16.mxu0 0
        %846 = vmatpush1.bf16.xpose.msra.mxu0 0
        %847 = vmatprep.subr.bf16.mxu0 0
        %848 = vmatpush1.bf16.xpose.msra.mxu0 %v831
        %849 = vmatprep.subr.bf16.mxu0 0
        %850 = vmatpush2.bf16.xpose.msra.mxu0 0
        %851 = vmatprep.subr.bf16.mxu0 0
        %852 = vmatpush2.bf16.xpose.msra.mxu0 0
        %853 = vmatprep.subr.bf16.mxu0 0
        %854 = vmatpush2.bf16.xpose.msra.mxu0 0
        %855 = vmatprep.subr.bf16.mxu0 0
        %856 = vmatpush2.bf16.xpose.msra.mxu0 0
        %857 = vmatprep.subr.bf16.mxu0 0
        %858 = vmatpush2.bf16.xpose.msra.mxu0 0
        %859 = vmatprep.subr.bf16.mxu0 0
        %860 = vmatpush2.bf16.xpose.msra.mxu0 0
        %861 = vmatprep.subr.bf16.mxu0 0
        %862 = vmatpush2.bf16.xpose.msra.mxu0 0
        %863 = vmatprep.subr.bf16.mxu0 0
        %864 = vmatpush2.bf16.xpose.msra.mxu0 0
        %865 = vmatprep.mubr.bf16.mxu0 0
        %866 = vmatmul.mubr.bf16.gmra.mxu0 %v828
        %v867 = vpop.f32.mrf.mxu0
        %v868 = vadd.f32 0.0, %v867
        %v869 = vpop.f32.mrf.mxu0
        %v870 = vpop.f32.mrf.mxu0
        %v871 = vpop.f32.mrf.mxu0
        %872 = vdwg.mxu0
        %v873 = vmul.f32 %v868, 0.17677669
        %vm874 = vcmask 64512
        %v875 = vsel %vm874, %v873, -inf
        %876 = vmax.xlane.f32.xlu0 %v875
        %v877 = vpop.xlane.xlu0 %876
        %v878 = vsub.f32 %v873, %v877
        %v879 = vmul.f32 %v878, 1.442695
        %v880 = vpow.pop %v879
        %v881 = vsel %vm874, %v880, 0.0
        %882 = vadd.xlane.f32.xlu0 %v881
        %v883 = vpop.xlane.xlu0 %882
        %v884 = vrcp.pop %v883
        %v885 = vmul.f32 %v880, %v884
        %v886 = vpack.c.bf16 %v885, %v885
        %v888 = vsel %vm874, %v886, 0
        %vm890 = vcmask 1043456
        %v892 = vsel %vm890, %v825, 0
        %894 = vmatprep.subr.bf16.mxu0 0
        %895 = vmatpush1.bf16.msra.mxu0 0
        %896 = vmatprep.subr.bf16.mxu0 0
        %897 = vmatpush1.bf16.msra.mxu0 0
        %898 = vmatprep.subr.bf16.mxu0 0
        %899 = vmatpush1.bf16.msra.mxu0 0
        %900 = vmatprep.subr.bf16.mxu0 0
        %901 = vmatpush1.bf16.msra.mxu0 0
        %902 = vmatprep.subr.bf16.mxu0 0
        %903 = vmatpush1.bf16.msra.mxu0 0
        %904 = vmatprep.subr.bf16.mxu0 0
        %905 = vmatpush1.bf16.msra.mxu0 0
        %906 = vmatprep.subr.bf16.mxu0 0
        %907 = vmatpush1.bf16.msra.mxu0 0
        %908 = vmatprep.subr.bf16.mxu0 0
        %909 = vmatpush1.bf16.msra.mxu0 %v892
        %910 = vmatprep.subr.bf16.mxu0 0
        %911 = vmatpush2.bf16.msra.mxu0 0
        %912 = vmatprep.subr.bf16.mxu0 0
        %913 = vmatpush2.bf16.msra.mxu0 0
        %914 = vmatprep.subr.bf16.mxu0 0
        %915 = vmatpush2.bf16.msra.mxu0 0
        %916 = vmatprep.subr.bf16.mxu0 0
        %917 = vmatpush2.bf16.msra.mxu0 0
        %918 = vmatprep.subr.bf16.mxu0 0
        %919 = vmatpush2.bf16.msra.mxu0 0
        %920 = vmatprep.subr.bf16.mxu0 0
        %921 = vmatpush2.bf16.msra.mxu0 0
        %922 = vmatprep.subr.bf16.mxu0 0
        %923 = vmatpush2.bf16.msra.mxu0 0
        %924 = vmatprep.subr.bf16.mxu0 0
        %925 = vmatpush2.bf16.msra.mxu0 0
        %926 = vmatprep.mubr.bf16.mxu0 0
        %927 = vmatmul.mubr.bf16.gmra.mxu0 %v888
        %v928 = vpop.f32.mrf.mxu0
        %v929 = vadd.f32 0.0, %v928
        %v930 = vpop.f32.mrf.mxu0
        %v931 = vpop.f32.mrf.mxu0
        %v932 = vpop.f32.mrf.mxu0
        %933 = vdwg.mxu0
        %v934 = vpack.c.bf16 %v929, %v929
        %936 = vrot.lane.b32.xlu0 %v823, 96
        %v937 = vpop.permute.xlu0 %936
        %939 = vrot.lane.b32.xlu0 %v824, 96
        %v940 = vpop.permute.xlu0 %939
        %v942 = vsel %vm826, %v937, 0
        %v945 = vsel %vm826, %v940, 0
        %947 = vmatprep.subr.bf16.mxu0 0
        %948 = vmatpush1.bf16.xpose.msra.mxu0 0
        %949 = vmatprep.subr.bf16.mxu0 0
        %950 = vmatpush1.bf16.xpose.msra.mxu0 0
        %951 = vmatprep.subr.bf16.mxu0 0
        %952 = vmatpush1.bf16.xpose.msra.mxu0 0
        %953 = vmatprep.subr.bf16.mxu0 0
        %954 = vmatpush1.bf16.xpose.msra.mxu0 0
        %955 = vmatprep.subr.bf16.mxu0 0
        %956 = vmatpush1.bf16.xpose.msra.mxu0 0
        %957 = vmatprep.subr.bf16.mxu0 0
        %958 = vmatpush1.bf16.xpose.msra.mxu0 0
        %959 = vmatprep.subr.bf16.mxu0 0
        %960 = vmatpush1.bf16.xpose.msra.mxu0 0
        %961 = vmatprep.subr.bf16.mxu0 0
        %962 = vmatpush1.bf16.xpose.msra.mxu0 %v945
        %963 = vmatprep.subr.bf16.mxu0 0
        %964 = vmatpush2.bf16.xpose.msra.mxu0 0
        %965 = vmatprep.subr.bf16.mxu0 0
        %966 = vmatpush2.bf16.xpose.msra.mxu0 0
        %967 = vmatprep.subr.bf16.mxu0 0
        %968 = vmatpush2.bf16.xpose.msra.mxu0 0
        %969 = vmatprep.subr.bf16.mxu0 0
        %970 = vmatpush2.bf16.xpose.msra.mxu0 0
        %971 = vmatprep.subr.bf16.mxu0 0
        %972 = vmatpush2.bf16.xpose.msra.mxu0 0
        %973 = vmatprep.subr.bf16.mxu0 0
        %974 = vmatpush2.bf16.xpose.msra.mxu0 0
        %975 = vmatprep.subr.bf16.mxu0 0
        %976 = vmatpush2.bf16.xpose.msra.mxu0 0
        %977 = vmatprep.subr.bf16.mxu0 0
        %978 = vmatpush2.bf16.xpose.msra.mxu0 0
        %979 = vmatprep.mubr.bf16.mxu0 0
        %980 = vmatmul.mubr.bf16.gmra.mxu0 %v942
        %v981 = vpop.f32.mrf.mxu0
        %v982 = vadd.f32 0.0, %v981
        %v983 = vpop.f32.mrf.mxu0
        %v984 = vpop.f32.mrf.mxu0
        %v985 = vpop.f32.mrf.mxu0
        %986 = vdwg.mxu0
        %v987 = vmul.f32 %v982, 0.17677669
        %v988 = vsel %vm874, %v987, -inf
        %989 = vmax.xlane.f32.xlu0 %v988
        %v990 = vpop.xlane.xlu0 %989
        %v991 = vsub.f32 %v987, %v990
        %v992 = vmul.f32 %v991, 1.442695
        %v993 = vpow.pop %v992
        %v994 = vsel %vm874, %v993, 0.0
        %995 = vadd.xlane.f32.xlu0 %v994
        %v996 = vpop.xlane.xlu0 %995
        %v997 = vrcp.pop %v996
        %v998 = vmul.f32 %v993, %v997
        %v999 = vpack.c.bf16 %v998, %v998
        %1001 = vrot.lane.b32.xlu0 %v825, 96
        %v1002 = vpop.permute.xlu0 %1001
        %v1004 = vsel %vm874, %v999, 0
        %v1007 = vsel %vm890, %v1002, 0
        %1009 = vmatprep.subr.bf16.mxu0 0
        %1010 = vmatpush1.bf16.msra.mxu0 0
        %1011 = vmatprep.subr.bf16.mxu0 0
        %1012 = vmatpush1.bf16.msra.mxu0 0
        %1013 = vmatprep.subr.bf16.mxu0 0
        %1014 = vmatpush1.bf16.msra.mxu0 0
        %1015 = vmatprep.subr.bf16.mxu0 0
        %1016 = vmatpush1.bf16.msra.mxu0 0
        %1017 = vmatprep.subr.bf16.mxu0 0
        %1018 = vmatpush1.bf16.msra.mxu0 0
        %1019 = vmatprep.subr.bf16.mxu0 0
        %1020 = vmatpush1.bf16.msra.mxu0 0
        %1021 = vmatprep.subr.bf16.mxu0 0
        %1022 = vmatpush1.bf16.msra.mxu0 0
        %1023 = vmatprep.subr.bf16.mxu0 0
        %1024 = vmatpush1.bf16.msra.mxu0 %v1007
        %1025 = vmatprep.subr.bf16.mxu0 0
        %1026 = vmatpush2.bf16.msra.mxu0 0
        %1027 = vmatprep.subr.bf16.mxu0 0
        %1028 = vmatpush2.bf16.msra.mxu0 0
        %1029 = vmatprep.subr.bf16.mxu0 0
        %1030 = vmatpush2.bf16.msra.mxu0 0
        %1031 = vmatprep.subr.bf16.mxu0 0
        %1032 = vmatpush2.bf16.msra.mxu0 0
        %1033 = vmatprep.subr.bf16.mxu0 0
        %1034 = vmatpush2.bf16.msra.mxu0 0
        %1035 = vmatprep.subr.bf16.mxu0 0
        %1036 = vmatpush2.bf16.msra.mxu0 0
        %1037 = vmatprep.subr.bf16.mxu0 0
        %1038 = vmatpush2.bf16.msra.mxu0 0
        %1039 = vmatprep.subr.bf16.mxu0 0
        %1040 = vmatpush2.bf16.msra.mxu0 0
        %1041 = vmatprep.mubr.bf16.mxu0 0
        %1042 = vmatmul.mubr.bf16.gmra.mxu0 %v1004
        %v1043 = vpop.f32.mrf.mxu0
        %v1044 = vadd.f32 0.0, %v1043
        %v1045 = vpop.f32.mrf.mxu0
        %v1046 = vpop.f32.mrf.mxu0
        %v1047 = vpop.f32.mrf.mxu0
        %1048 = vdwg.mxu0
        %v1049 = vpack.c.bf16 %v1044, %v1044
        %v1054 = vunpack.c.l.b16 %v538
        %v1055 = vunpack.c.l.b16 %v539
        %v1056 = vunpack.c.l.b16 %v540
        %v1057 = vunpack.c.l.b16 %v541
        %v1058 = vpack.c.b16 %v1055, %v1054
        %v1059 = vpack.c.b16 %v1057, %v1056
        %v1063 = vsel %vm826, %v1049, 0
        %1065 = vmatprep.subr.bf16.mxu0 0
        %1066 = vmatpush1.bf16.msra.mxu0 0
        %1067 = vmatprep.subr.bf16.mxu0 0
        %1068 = vmatpush1.bf16.msra.mxu0 0
        %1069 = vmatprep.subr.bf16.mxu0 0
        %1070 = vmatpush1.bf16.msra.mxu0 0
        %1071 = vmatprep.subr.bf16.mxu0 0
        %1072 = vmatpush1.bf16.msra.mxu0 0
        %1073 = vmatprep.subr.bf16.mxu0 0
        %1074 = vmatpush1.bf16.msra.mxu0 0
        %1075 = vmatprep.subr.bf16.mxu0 0
        %1076 = vmatpush1.bf16.msra.mxu0 0
        %1077 = vmatprep.subr.bf16.mxu0 0
        %1078 = vmatpush1.bf16.msra.mxu0 %v1059
        %1079 = vmatprep.subr.bf16.mxu0 0
        %1080 = vmatpush1.bf16.msra.mxu0 %v1058
        %1081 = vmatprep.subr.bf16.mxu0 0
        %1082 = vmatpush2.bf16.msra.mxu0 0
        %1083 = vmatprep.subr.bf16.mxu0 0
        %1084 = vmatpush2.bf16.msra.mxu0 0
        %1085 = vmatprep.subr.bf16.mxu0 0
        %1086 = vmatpush2.bf16.msra.mxu0 0
        %1087 = vmatprep.subr.bf16.mxu0 0
        %1088 = vmatpush2.bf16.msra.mxu0 0
        %1089 = vmatprep.subr.bf16.mxu0 0
        %1090 = vmatpush2.bf16.msra.mxu0 0
        %1091 = vmatprep.subr.bf16.mxu0 0
        %1092 = vmatpush2.bf16.msra.mxu0 0
        %1093 = vmatprep.subr.bf16.mxu0 0
        %1094 = vmatpush2.bf16.msra.mxu0 0
        %1095 = vmatprep.subr.bf16.mxu0 0
        %1096 = vmatpush2.bf16.msra.mxu0 0
        %1097 = vmatprep.mubr.bf16.mxu0 0
        %1098 = vmatmul.mubr.bf16.gmra.mxu0 %v1063
        %v1099 = vpop.f32.mrf.mxu0
        %v1100 = vadd.f32 0.0, %v1099
        %v1101 = vpop.f32.mrf.mxu0
        %v1102 = vpop.f32.mrf.mxu0
        %v1103 = vpop.f32.mrf.mxu0
        %1104 = vdwg.mxu0
        %v1109 = vunpack.c.l.b16 %v534
        %v1110 = vunpack.c.l.b16 %v535
        %v1111 = vunpack.c.l.b16 %v536
        %v1112 = vunpack.c.l.b16 %v537
        %v1113 = vpack.c.b16 %v1110, %v1109
        %v1114 = vpack.c.b16 %v1112, %v1111
        %v1118 = vsel %vm826, %v934, 0
        %1120 = vmatprep.subr.bf16.mxu0 0
        %1121 = vmatpush1.bf16.msra.mxu0 0
        %1122 = vmatprep.subr.bf16.mxu0 0
        %1123 = vmatpush1.bf16.msra.mxu0 0
        %1124 = vmatprep.subr.bf16.mxu0 0
        %1125 = vmatpush1.bf16.msra.mxu0 0
        %1126 = vmatprep.subr.bf16.mxu0 0
        %1127 = vmatpush1.bf16.msra.mxu0 0
        %1128 = vmatprep.subr.bf16.mxu0 0
        %1129 = vmatpush1.bf16.msra.mxu0 0
        %1130 = vmatprep.subr.bf16.mxu0 0
        %1131 = vmatpush1.bf16.msra.mxu0 0
        %1132 = vmatprep.subr.bf16.mxu0 0
        %1133 = vmatpush1.bf16.msra.mxu0 %v1114
        %1134 = vmatprep.subr.bf16.mxu0 0
        %1135 = vmatpush1.bf16.msra.mxu0 %v1113
        %1136 = vmatprep.subr.bf16.mxu0 0
        %1137 = vmatpush2.bf16.msra.mxu0 0
        %1138 = vmatprep.subr.bf16.mxu0 0
        %1139 = vmatpush2.bf16.msra.mxu0 0
        %1140 = vmatprep.subr.bf16.mxu0 0
        %1141 = vmatpush2.bf16.msra.mxu0 0
        %1142 = vmatprep.subr.bf16.mxu0 0
        %1143 = vmatpush2.bf16.msra.mxu0 0
        %1144 = vmatprep.subr.bf16.mxu0 0
        %1145 = vmatpush2.bf16.msra.mxu0 0
        %1146 = vmatprep.subr.bf16.mxu0 0
        %1147 = vmatpush2.bf16.msra.mxu0 0
        %1148 = vmatprep.subr.bf16.mxu0 0
        %1149 = vmatpush2.bf16.msra.mxu0 0
        %1150 = vmatprep.subr.bf16.mxu0 0
        %1151 = vmatpush2.bf16.msra.mxu0 0
        %1152 = vmatprep.mubr.bf16.mxu0 0
        %1153 = vmatmul.mubr.bf16.gmra.mxu0 %v1118
        %v1154 = vpop.f32.mrf.mxu0
        %v1155 = vadd.f32 %v1100, %v1154
        %v1156 = vpop.f32.mrf.mxu0
        %v1157 = vpop.f32.mrf.mxu0
        %v1158 = vpop.f32.mrf.mxu0
        %1159 = vdwg.mxu0
        %1160 = vrot.lane.b32.xlu0 %v823, 64
        %v1161 = vpop.permute.xlu0 %1160
        %1162 = vrot.lane.b32.xlu0 %v824, 64
        %v1163 = vpop.permute.xlu0 %1162
        %v1165 = vsel %vm826, %v1161, 0
        %v1168 = vsel %vm826, %v1163, 0
        %1170 = vmatprep.subr.bf16.mxu0 0
        %1171 = vmatpush1.bf16.xpose.msra.mxu0 0
        %1172 = vmatprep.subr.bf16.mxu0 0
        %1173 = vmatpush1.bf16.xpose.msra.mxu0 0
        %1174 = vmatprep.subr.bf16.mxu0 0
        %1175 = vmatpush1.bf16.xpose.msra.mxu0 0
        %1176 = vmatprep.subr.bf16.mxu0 0
        %1177 = vmatpush1.bf16.xpose.msra.mxu0 0
        %1178 = vmatprep.subr.bf16.mxu0 0
        %1179 = vmatpush1.bf16.xpose.msra.mxu0 0
        %1180 = vmatprep.subr.bf16.mxu0 0
        %1181 = vmatpush1.bf16.xpose.msra.mxu0 0
        %1182 = vmatprep.subr.bf16.mxu0 0
        %1183 = vmatpush1.bf16.xpose.msra.mxu0 0
        %1184 = vmatprep.subr.bf16.mxu0 0
        %1185 = vmatpush1.bf16.xpose.msra.mxu0 %v1168
        %1186 = vmatprep.subr.bf16.mxu0 0
        %1187 = vmatpush2.bf16.xpose.msra.mxu0 0
        %1188 = vmatprep.subr.bf16.mxu0 0
        %1189 = vmatpush2.bf16.xpose.msra.mxu0 0
        %1190 = vmatprep.subr.bf16.mxu0 0
        %1191 = vmatpush2.bf16.xpose.msra.mxu0 0
        %1192 = vmatprep.subr.bf16.mxu0 0
        %1193 = vmatpush2.bf16.xpose.msra.mxu0 0
        %1194 = vmatprep.subr.bf16.mxu0 0
        %1195 = vmatpush2.bf16.xpose.msra.mxu0 0
        %1196 = vmatprep.subr.bf16.mxu0 0
        %1197 = vmatpush2.bf16.xpose.msra.mxu0 0
        %1198 = vmatprep.subr.bf16.mxu0 0
        %1199 = vmatpush2.bf16.xpose.msra.mxu0 0
        %1200 = vmatprep.subr.bf16.mxu0 0
        %1201 = vmatpush2.bf16.xpose.msra.mxu0 0
        %1202 = vmatprep.mubr.bf16.mxu0 0
        %1203 = vmatmul.mubr.bf16.gmra.mxu0 %v1165
        %v1204 = vpop.f32.mrf.mxu0
        %v1205 = vadd.f32 0.0, %v1204
        %v1206 = vpop.f32.mrf.mxu0
        %v1207 = vpop.f32.mrf.mxu0
        %v1208 = vpop.f32.mrf.mxu0
        %1209 = vdwg.mxu0
        %v1210 = vmul.f32 %v1205, 0.17677669
        %v1211 = vsel %vm874, %v1210, -inf
        %1212 = vmax.xlane.f32.xlu0 %v1211
        %v1213 = vpop.xlane.xlu0 %1212
        %v1214 = vsub.f32 %v1210, %v1213
        %v1215 = vmul.f32 %v1214, 1.442695
        %v1216 = vpow.pop %v1215
        %v1217 = vsel %vm874, %v1216, 0.0
        %1218 = vadd.xlane.f32.xlu0 %v1217
        %v1219 = vpop.xlane.xlu0 %1218
        %v1220 = vrcp.pop %v1219
        %v1221 = vmul.f32 %v1216, %v1220
        %v1222 = vpack.c.bf16 %v1221, %v1221
        %1223 = vrot.lane.b32.xlu0 %v825, 64
        %v1224 = vpop.permute.xlu0 %1223
        %v1226 = vsel %vm874, %v1222, 0
        %v1229 = vsel %vm890, %v1224, 0
        %1231 = vmatprep.subr.bf16.mxu0 0
        %1232 = vmatpush1.bf16.msra.mxu0 0
        %1233 = vmatprep.subr.bf16.mxu0 0
        %1234 = vmatpush1.bf16.msra.mxu0 0
        %1235 = vmatprep.subr.bf16.mxu0 0
        %1236 = vmatpush1.bf16.msra.mxu0 0
        %1237 = vmatprep.subr.bf16.mxu0 0
        %1238 = vmatpush1.bf16.msra.mxu0 0
        %1239 = vmatprep.subr.bf16.mxu0 0
        %1240 = vmatpush1.bf16.msra.mxu0 0
        %1241 = vmatprep.subr.bf16.mxu0 0
        %1242 = vmatpush1.bf16.msra.mxu0 0
        %1243 = vmatprep.subr.bf16.mxu0 0
        %1244 = vmatpush1.bf16.msra.mxu0 0
        %1245 = vmatprep.subr.bf16.mxu0 0
        %1246 = vmatpush1.bf16.msra.mxu0 %v1229
        %1247 = vmatprep.subr.bf16.mxu0 0
        %1248 = vmatpush2.bf16.msra.mxu0 0
        %1249 = vmatprep.subr.bf16.mxu0 0
        %1250 = vmatpush2.bf16.msra.mxu0 0
        %1251 = vmatprep.subr.bf16.mxu0 0
        %1252 = vmatpush2.bf16.msra.mxu0 0
        %1253 = vmatprep.subr.bf16.mxu0 0
        %1254 = vmatpush2.bf16.msra.mxu0 0
        %1255 = vmatprep.subr.bf16.mxu0 0
        %1256 = vmatpush2.bf16.msra.mxu0 0
        %1257 = vmatprep.subr.bf16.mxu0 0
        %1258 = vmatpush2.bf16.msra.mxu0 0
        %1259 = vmatprep.subr.bf16.mxu0 0
        %1260 = vmatpush2.bf16.msra.mxu0 0
        %1261 = vmatprep.subr.bf16.mxu0 0
        %1262 = vmatpush2.bf16.msra.mxu0 0
        %1263 = vmatprep.mubr.bf16.mxu0 0
        %1264 = vmatmul.mubr.bf16.gmra.mxu0 %v1226
        %v1265 = vpop.f32.mrf.mxu0
        %v1266 = vadd.f32 0.0, %v1265
        %v1267 = vpop.f32.mrf.mxu0
        %v1268 = vpop.f32.mrf.mxu0
        %v1269 = vpop.f32.mrf.mxu0
        %1270 = vdwg.mxu0
        %v1271 = vpack.c.bf16 %v1266, %v1266
        %v1276 = vunpack.c.l.b16 %v542
        %v1277 = vunpack.c.l.b16 %v543
        %v1278 = vunpack.c.l.b16 %v544
        %v1279 = vunpack.c.l.b16 %v545
        %v1280 = vpack.c.b16 %v1277, %v1276
        %v1281 = vpack.c.b16 %v1279, %v1278
        %v1285 = vsel %vm826, %v1271, 0
        %1287 = vmatprep.subr.bf16.mxu0 0
        %1288 = vmatpush1.bf16.msra.mxu0 0
        %1289 = vmatprep.subr.bf16.mxu0 0
        %1290 = vmatpush1.bf16.msra.mxu0 0
        %1291 = vmatprep.subr.bf16.mxu0 0
        %1292 = vmatpush1.bf16.msra.mxu0 0
        %1293 = vmatprep.subr.bf16.mxu0 0
        %1294 = vmatpush1.bf16.msra.mxu0 0
        %1295 = vmatprep.subr.bf16.mxu0 0
        %1296 = vmatpush1.bf16.msra.mxu0 0
        %1297 = vmatprep.subr.bf16.mxu0 0
        %1298 = vmatpush1.bf16.msra.mxu0 0
        %1299 = vmatprep.subr.bf16.mxu0 0
        %1300 = vmatpush1.bf16.msra.mxu0 %v1281
        %1301 = vmatprep.subr.bf16.mxu0 0
        %1302 = vmatpush1.bf16.msra.mxu0 %v1280
        %1303 = vmatprep.subr.bf16.mxu0 0
        %1304 = vmatpush2.bf16.msra.mxu0 0
        %1305 = vmatprep.subr.bf16.mxu0 0
        %1306 = vmatpush2.bf16.msra.mxu0 0
        %1307 = vmatprep.subr.bf16.mxu0 0
        %1308 = vmatpush2.bf16.msra.mxu0 0
        %1309 = vmatprep.subr.bf16.mxu0 0
        %1310 = vmatpush2.bf16.msra.mxu0 0
        %1311 = vmatprep.subr.bf16.mxu0 0
        %1312 = vmatpush2.bf16.msra.mxu0 0
        %1313 = vmatprep.subr.bf16.mxu0 0
        %1314 = vmatpush2.bf16.msra.mxu0 0
        %1315 = vmatprep.subr.bf16.mxu0 0
        %1316 = vmatpush2.bf16.msra.mxu0 0
        %1317 = vmatprep.subr.bf16.mxu0 0
        %1318 = vmatpush2.bf16.msra.mxu0 0
        %1319 = vmatprep.mubr.bf16.mxu0 0
        %1320 = vmatmul.mubr.bf16.gmra.mxu0 %v1285
        %v1321 = vpop.f32.mrf.mxu0
        %v1322 = vadd.f32 0.0, %v1321
        %v1323 = vpop.f32.mrf.mxu0
        %v1324 = vpop.f32.mrf.mxu0
        %v1325 = vpop.f32.mrf.mxu0
        %1326 = vdwg.mxu0
        %v1327 = vadd.f32 %v1155, %v1322
        %1328 = vrot.lane.b32.xlu0 %v823, 32
        %v1329 = vpop.permute.xlu0 %1328
        %1330 = vrot.lane.b32.xlu0 %v824, 32
        %v1331 = vpop.permute.xlu0 %1330
        %v1333 = vsel %vm826, %v1329, 0
        %v1336 = vsel %vm826, %v1331, 0
        %1338 = vmatprep.subr.bf16.mxu0 0
        %1339 = vmatpush1.bf16.xpose.msra.mxu0 0
        %1340 = vmatprep.subr.bf16.mxu0 0
        %1341 = vmatpush1.bf16.xpose.msra.mxu0 0
        %1342 = vmatprep.subr.bf16.mxu0 0
        %1343 = vmatpush1.bf16.xpose.msra.mxu0 0
        %1344 = vmatprep.subr.bf16.mxu0 0
        %1345 = vmatpush1.bf16.xpose.msra.mxu0 0
        %1346 = vmatprep.subr.bf16.mxu0 0
        %1347 = vmatpush1.bf16.xpose.msra.mxu0 0
        %1348 = vmatprep.subr.bf16.mxu0 0
        %1349 = vmatpush1.bf16.xpose.msra.mxu0 0
        %1350 = vmatprep.subr.bf16.mxu0 0
        %1351 = vmatpush1.bf16.xpose.msra.mxu0 0
        %1352 = vmatprep.subr.bf16.mxu0 0
        %1353 = vmatpush1.bf16.xpose.msra.mxu0 %v1336
        %1354 = vmatprep.subr.bf16.mxu0 0
        %1355 = vmatpush2.bf16.xpose.msra.mxu0 0
        %1356 = vmatprep.subr.bf16.mxu0 0
        %1357 = vmatpush2.bf16.xpose.msra.mxu0 0
        %1358 = vmatprep.subr.bf16.mxu0 0
        %1359 = vmatpush2.bf16.xpose.msra.mxu0 0
        %1360 = vmatprep.subr.bf16.mxu0 0
        %1361 = vmatpush2.bf16.xpose.msra.mxu0 0
        %1362 = vmatprep.subr.bf16.mxu0 0
        %1363 = vmatpush2.bf16.xpose.msra.mxu0 0
        %1364 = vmatprep.subr.bf16.mxu0 0
        %1365 = vmatpush2.bf16.xpose.msra.mxu0 0
        %1366 = vmatprep.subr.bf16.mxu0 0
        %1367 = vmatpush2.bf16.xpose.msra.mxu0 0
        %1368 = vmatprep.subr.bf16.mxu0 0
        %1369 = vmatpush2.bf16.xpose.msra.mxu0 0
        %1370 = vmatprep.mubr.bf16.mxu0 0
        %1371 = vmatmul.mubr.bf16.gmra.mxu0 %v1333
        %v1372 = vpop.f32.mrf.mxu0
        %v1373 = vadd.f32 0.0, %v1372
        %v1374 = vpop.f32.mrf.mxu0
        %v1375 = vpop.f32.mrf.mxu0
        %v1376 = vpop.f32.mrf.mxu0
        %1377 = vdwg.mxu0
        %v1378 = vmul.f32 %v1373, 0.17677669
        %v1379 = vsel %vm874, %v1378, -inf
        %1380 = vmax.xlane.f32.xlu0 %v1379
        %v1381 = vpop.xlane.xlu0 %1380
        %v1382 = vsub.f32 %v1378, %v1381
        %v1383 = vmul.f32 %v1382, 1.442695
        %v1384 = vpow.pop %v1383
        %v1385 = vsel %vm874, %v1384, 0.0
        %1386 = vadd.xlane.f32.xlu0 %v1385
        %v1387 = vpop.xlane.xlu0 %1386
        %v1388 = vrcp.pop %v1387
        %v1389 = vmul.f32 %v1384, %v1388
        %v1390 = vpack.c.bf16 %v1389, %v1389
        %1391 = vrot.lane.b32.xlu0 %v825, 32
        %v1392 = vpop.permute.xlu0 %1391
        %v1394 = vsel %vm874, %v1390, 0
        %v1397 = vsel %vm890, %v1392, 0
        %1399 = vmatprep.subr.bf16.mxu0 0
        %1400 = vmatpush1.bf16.msra.mxu0 0
        %1401 = vmatprep.subr.bf16.mxu0 0
        %1402 = vmatpush1.bf16.msra.mxu0 0
        %1403 = vmatprep.subr.bf16.mxu0 0
        %1404 = vmatpush1.bf16.msra.mxu0 0
        %1405 = vmatprep.subr.bf16.mxu0 0
        %1406 = vmatpush1.bf16.msra.mxu0 0
        %1407 = vmatprep.subr.bf16.mxu0 0
        %1408 = vmatpush1.bf16.msra.mxu0 0
        %1409 = vmatprep.subr.bf16.mxu0 0
        %1410 = vmatpush1.bf16.msra.mxu0 0
        %1411 = vmatprep.subr.bf16.mxu0 0
        %1412 = vmatpush1.bf16.msra.mxu0 0
        %1413 = vmatprep.subr.bf16.mxu0 0
        %1414 = vmatpush1.bf16.msra.mxu0 %v1397
        %1415 = vmatprep.subr.bf16.mxu0 0
        %1416 = vmatpush2.bf16.msra.mxu0 0
        %1417 = vmatprep.subr.bf16.mxu0 0
        %1418 = vmatpush2.bf16.msra.mxu0 0
        %1419 = vmatprep.subr.bf16.mxu0 0
        %1420 = vmatpush2.bf16.msra.mxu0 0
        %1421 = vmatprep.subr.bf16.mxu0 0
        %1422 = vmatpush2.bf16.msra.mxu0 0
        %1423 = vmatprep.subr.bf16.mxu0 0
        %1424 = vmatpush2.bf16.msra.mxu0 0
        %1425 = vmatprep.subr.bf16.mxu0 0
        %1426 = vmatpush2.bf16.msra.mxu0 0
        %1427 = vmatprep.subr.bf16.mxu0 0
        %1428 = vmatpush2.bf16.msra.mxu0 0
        %1429 = vmatprep.subr.bf16.mxu0 0
        %1430 = vmatpush2.bf16.msra.mxu0 0
        %1431 = vmatprep.mubr.bf16.mxu0 0
        %1432 = vmatmul.mubr.bf16.gmra.mxu0 %v1394
        %v1433 = vpop.f32.mrf.mxu0
        %v1434 = vadd.f32 0.0, %v1433
        %v1435 = vpop.f32.mrf.mxu0
        %v1436 = vpop.f32.mrf.mxu0
        %v1437 = vpop.f32.mrf.mxu0
        %1438 = vdwg.mxu0
        %v1439 = vpack.c.bf16 %v1434, %v1434
        %v1444 = vunpack.c.l.b16 %v546
        %v1445 = vunpack.c.l.b16 %v547
        %v1446 = vunpack.c.l.b16 %v548
        %v1447 = vunpack.c.l.b16 %v549
        %v1448 = vpack.c.b16 %v1445, %v1444
        %v1449 = vpack.c.b16 %v1447, %v1446
        %v1453 = vsel %vm826, %v1439, 0
        %1455 = vmatprep.subr.bf16.mxu0 0
        %1456 = vmatpush1.bf16.msra.mxu0 0
        %1457 = vmatprep.subr.bf16.mxu0 0
        %1458 = vmatpush1.bf16.msra.mxu0 0
        %1459 = vmatprep.subr.bf16.mxu0 0
        %1460 = vmatpush1.bf16.msra.mxu0 0
        %1461 = vmatprep.subr.bf16.mxu0 0
        %1462 = vmatpush1.bf16.msra.mxu0 0
        %1463 = vmatprep.subr.bf16.mxu0 0
        %1464 = vmatpush1.bf16.msra.mxu0 0
        %1465 = vmatprep.subr.bf16.mxu0 0
        %1466 = vmatpush1.bf16.msra.mxu0 0
        %1467 = vmatprep.subr.bf16.mxu0 0
        %1468 = vmatpush1.bf16.msra.mxu0 %v1449
        %1469 = vmatprep.subr.bf16.mxu0 0
        %1470 = vmatpush1.bf16.msra.mxu0 %v1448
        %1471 = vmatprep.subr.bf16.mxu0 0
        %1472 = vmatpush2.bf16.msra.mxu0 0
        %1473 = vmatprep.subr.bf16.mxu0 0
        %1474 = vmatpush2.bf16.msra.mxu0 0
        %1475 = vmatprep.subr.bf16.mxu0 0
        %1476 = vmatpush2.bf16.msra.mxu0 0
        %1477 = vmatprep.subr.bf16.mxu0 0
        %1478 = vmatpush2.bf16.msra.mxu0 0
        %1479 = vmatprep.subr.bf16.mxu0 0
        %1480 = vmatpush2.bf16.msra.mxu0 0
        %1481 = vmatprep.subr.bf16.mxu0 0
        %1482 = vmatpush2.bf16.msra.mxu0 0
        %1483 = vmatprep.subr.bf16.mxu0 0
        %1484 = vmatpush2.bf16.msra.mxu0 0
        %1485 = vmatprep.subr.bf16.mxu0 0
        %1486 = vmatpush2.bf16.msra.mxu0 0
        %1487 = vmatprep.mubr.bf16.mxu0 0
        %1488 = vmatmul.mubr.bf16.gmra.mxu0 %v1453
        %v1489 = vpop.f32.mrf.mxu0
        %v1490 = vadd.f32 0.0, %v1489
        %v1491 = vpop.f32.mrf.mxu0
        %v1492 = vpop.f32.mrf.mxu0
        %v1493 = vpop.f32.mrf.mxu0
        %1494 = vdwg.mxu0
        %v1495 = vadd.f32 %v1327, %v1490
        %v1496 = vlaneseq
        %v1497 = vshrl.u32 %v1496, 7
        %v1498 = vsub.s32 1, %v1497
        %v1499 = vrot.slane %v598, %v1498
        %v1500 = vadd.f32 %v1495, %v1499
        %v1501 = vadd.f32 %v497, %v1500
        %1502 = vadd.xlane.f32.xlu0 %v1501
        %v1503 = vpop.xlane.xlu0 %1502
        %v1504 = vrcp.pop 128.0
        %v1505 = vmul.f32 %v1503, %v1504
        %v1506 = vsub.f32 %v1501, %v1505
        %v1507 = vmul.f32 %v1506, %v1506
        %1508 = vadd.xlane.f32.xlu0 %v1507
        %v1509 = vpop.xlane.xlu0 %1508
        %v1510 = vmul.f32 %v1509, %v1504
        %v1511 = vadd.f32 %v1510, 1e-05
        %v1512 = vrsqrt.pop %v1511
        %v1513 = vmul.f32 %v1506, %v1512
        %v1514 = vlaneseq
        %v1515 = vshrl.u32 %v1514, 7
        %v1516 = vsub.s32 4, %v1515
        %v1517 = vrot.slane %v598, %v1516
        %v1518 = vmul.f32 %v1513, %v1517
        %v1519 = vlaneseq
        %v1520 = vshrl.u32 %v1519, 7
        %v1521 = vsub.s32 5, %v1520
        %v1522 = vrot.slane %v598, %v1521
        %v1523 = vadd.f32 %v1518, %v1522
        %v1524 = vpack.c.bf16 %v1523, %v1523
        %v1525 = vlaneseq
        %v1526 = vshrl.u32 %v1525, 7
        %v1527 = vsub.s32 2, %v1526
        %v1528 = vrot.slane %v598, %v1527
        %v1529 = vlaneseq
        %v1530 = vshrl.u32 %v1529, 7
        %v1531 = vsub.s32 2, %v1530
        %v1532 = vrot.slane %v599, %v1531
        %v1549 = vunpack.c.l.b16 %v550
        %v1550 = vunpack.c.h.b16 %v550
        %v1551 = vunpack.c.l.b16 %v551
        %v1552 = vunpack.c.h.b16 %v551
        %v1553 = vunpack.c.l.b16 %v552
        %v1554 = vunpack.c.h.b16 %v552
        %v1555 = vunpack.c.l.b16 %v553
        %v1556 = vunpack.c.h.b16 %v553
        %v1557 = vunpack.c.l.b16 %v554
        %v1558 = vunpack.c.h.b16 %v554
        %v1559 = vunpack.c.l.b16 %v555
        %v1560 = vunpack.c.h.b16 %v555
        %v1561 = vunpack.c.l.b16 %v556
        %v1562 = vunpack.c.h.b16 %v556
        %v1563 = vunpack.c.l.b16 %v557
        %v1564 = vunpack.c.h.b16 %v557
        %v1565 = vunpack.c.l.b16 %v558
        %v1566 = vunpack.c.h.b16 %v558
        %v1567 = vunpack.c.l.b16 %v559
        %v1568 = vunpack.c.h.b16 %v559
        %v1569 = vunpack.c.l.b16 %v560
        %v1570 = vunpack.c.h.b16 %v560
        %v1571 = vunpack.c.l.b16 %v561
        %v1572 = vunpack.c.h.b16 %v561
        %v1573 = vunpack.c.l.b16 %v562
        %v1574 = vunpack.c.h.b16 %v562
        %v1575 = vunpack.c.l.b16 %v563
        %v1576 = vunpack.c.h.b16 %v563
        %v1577 = vunpack.c.l.b16 %v564
        %v1578 = vunpack.c.h.b16 %v564
        %v1579 = vunpack.c.l.b16 %v565
        %v1580 = vunpack.c.h.b16 %v565
        %v1581 = vpack.c.b16 %v1551, %v1549
        %v1582 = vpack.c.b16 %v1552, %v1550
        %v1583 = vpack.c.b16 %v1555, %v1553
        %v1584 = vpack.c.b16 %v1556, %v1554
        %v1585 = vpack.c.b16 %v1559, %v1557
        %v1586 = vpack.c.b16 %v1560, %v1558
        %v1587 = vpack.c.b16 %v1563, %v1561
        %v1588 = vpack.c.b16 %v1564, %v1562
        %v1589 = vpack.c.b16 %v1567, %v1565
        %v1590 = vpack.c.b16 %v1568, %v1566
        %v1591 = vpack.c.b16 %v1571, %v1569
        %v1592 = vpack.c.b16 %v1572, %v1570
        %v1593 = vpack.c.b16 %v1575, %v1573
        %v1594 = vpack.c.b16 %v1576, %v1574
        %v1595 = vpack.c.b16 %v1579, %v1577
        %v1596 = vpack.c.b16 %v1580, %v1578
        %1613 = vmatprep.subr.bf16.mxu0 %v1596
        %1614 = vmatpush1.bf16.msra.mxu0 %v1595
        %1615 = vmatprep.subr.bf16.mxu0 %v1594
        %1616 = vmatpush1.bf16.msra.mxu0 %v1593
        %1617 = vmatprep.subr.bf16.mxu0 %v1592
        %1618 = vmatpush1.bf16.msra.mxu0 %v1591
        %1619 = vmatprep.subr.bf16.mxu0 %v1590
        %1620 = vmatpush1.bf16.msra.mxu0 %v1589
        %1621 = vmatprep.subr.bf16.mxu0 %v1588
        %1622 = vmatpush1.bf16.msra.mxu0 %v1587
        %1623 = vmatprep.subr.bf16.mxu0 %v1586
        %1624 = vmatpush1.bf16.msra.mxu0 %v1585
        %1625 = vmatprep.subr.bf16.mxu0 %v1584
        %1626 = vmatpush1.bf16.msra.mxu0 %v1583
        %1627 = vmatprep.subr.bf16.mxu0 %v1582
        %1628 = vmatpush1.bf16.msra.mxu0 %v1581
        %1629 = vmatprep.subr.bf16.mxu0 0
        %1630 = vmatpush2.bf16.msra.mxu0 0
        %1631 = vmatprep.subr.bf16.mxu0 0
        %1632 = vmatpush2.bf16.msra.mxu0 0
        %1633 = vmatprep.subr.bf16.mxu0 0
        %1634 = vmatpush2.bf16.msra.mxu0 0
        %1635 = vmatprep.subr.bf16.mxu0 0
        %1636 = vmatpush2.bf16.msra.mxu0 0
        %1637 = vmatprep.subr.bf16.mxu0 0
        %1638 = vmatpush2.bf16.msra.mxu0 0
        %1639 = vmatprep.subr.bf16.mxu0 0
        %1640 = vmatpush2.bf16.msra.mxu0 0
        %1641 = vmatprep.subr.bf16.mxu0 0
        %1642 = vmatpush2.bf16.msra.mxu0 0
        %1643 = vmatprep.subr.bf16.mxu0 0
        %1644 = vmatpush2.bf16.msra.mxu0 0
        %1645 = vmatprep.mubr.bf16.mxu0 0
        %1646 = vmatmul.mubr.bf16.gmra.mxu0 %v1524
        %v1647 = vpop.f32.mrf.mxu0
        %v1648 = vadd.f32 %v1528, %v1647
        %v1649 = vpop.f32.mrf.mxu0
        %v1650 = vadd.f32 %v1532, %v1649
        %v1651 = vpop.f32.mrf.mxu0
        %v1652 = vpop.f32.mrf.mxu0
        %1653 = vdwg.mxu0
        %v1654 = vmax.f32 %v1648, 0.0
        %v1655 = vmax.f32 %v1650, 0.0
        %v1656 = vpack.c.bf16 %v1654, %v1654
        %v1657 = vpack.c.bf16 %v1655, %v1655
        %v1658 = vlaneseq
        %v1659 = vshrl.u32 %v1658, 7
        %v1660 = vsub.s32 3, %v1659
        %v1661 = vrot.slane %v598, %v1660
        %v1694 = vunpack.c.l.b16 %v566
        %v1695 = vunpack.c.l.b16 %v567
        %v1696 = vunpack.c.l.b16 %v568
        %v1697 = vunpack.c.l.b16 %v569
        %v1698 = vunpack.c.l.b16 %v570
        %v1699 = vunpack.c.l.b16 %v571
        %v1700 = vunpack.c.l.b16 %v572
        %v1701 = vunpack.c.l.b16 %v573
        %v1702 = vunpack.c.l.b16 %v574
        %v1703 = vunpack.c.l.b16 %v575
        %v1704 = vunpack.c.l.b16 %v576
        %v1705 = vunpack.c.l.b16 %v577
        %v1706 = vunpack.c.l.b16 %v578
        %v1707 = vunpack.c.l.b16 %v579
        %v1708 = vunpack.c.l.b16 %v580
        %v1709 = vunpack.c.l.b16 %v581
        %v1710 = vunpack.c.l.b16 %v582
        %v1711 = vunpack.c.l.b16 %v583
        %v1712 = vunpack.c.l.b16 %v584
        %v1713 = vunpack.c.l.b16 %v585
        %v1714 = vunpack.c.l.b16 %v586
        %v1715 = vunpack.c.l.b16 %v587
        %v1716 = vunpack.c.l.b16 %v588
        %v1717 = vunpack.c.l.b16 %v589
        %v1718 = vunpack.c.l.b16 %v590
        %v1719 = vunpack.c.l.b16 %v591
        %v1720 = vunpack.c.l.b16 %v592
        %v1721 = vunpack.c.l.b16 %v593
        %v1722 = vunpack.c.l.b16 %v594
        %v1723 = vunpack.c.l.b16 %v595
        %v1724 = vunpack.c.l.b16 %v596
        %v1725 = vunpack.c.l.b16 %v597
        %v1726 = vpack.c.b16 %v1695, %v1694
        %v1727 = vpack.c.b16 %v1697, %v1696
        %v1728 = vpack.c.b16 %v1699, %v1698
        %v1729 = vpack.c.b16 %v1701, %v1700
        %v1730 = vpack.c.b16 %v1703, %v1702
        %v1731 = vpack.c.b16 %v1705, %v1704
        %v1732 = vpack.c.b16 %v1707, %v1706
        %v1733 = vpack.c.b16 %v1709, %v1708
        %v1734 = vpack.c.b16 %v1711, %v1710
        %v1735 = vpack.c.b16 %v1713, %v1712
        %v1736 = vpack.c.b16 %v1715, %v1714
        %v1737 = vpack.c.b16 %v1717, %v1716
        %v1738 = vpack.c.b16 %v1719, %v1718
        %v1739 = vpack.c.b16 %v1721, %v1720
        %v1740 = vpack.c.b16 %v1723, %v1722
        %v1741 = vpack.c.b16 %v1725, %v1724
        %1758 = vmatprep.subr.bf16.mxu0 0
        %1759 = vmatpush1.bf16.msra.mxu0 %v1733
        %1760 = vmatprep.subr.bf16.mxu0 0
        %1761 = vmatpush1.bf16.msra.mxu0 %v1732
        %1762 = vmatprep.subr.bf16.mxu0 0
        %1763 = vmatpush1.bf16.msra.mxu0 %v1731
        %1764 = vmatprep.subr.bf16.mxu0 0
        %1765 = vmatpush1.bf16.msra.mxu0 %v1730
        %1766 = vmatprep.subr.bf16.mxu0 0
        %1767 = vmatpush1.bf16.msra.mxu0 %v1729
        %1768 = vmatprep.subr.bf16.mxu0 0
        %1769 = vmatpush1.bf16.msra.mxu0 %v1728
        %1770 = vmatprep.subr.bf16.mxu0 0
        %1771 = vmatpush1.bf16.msra.mxu0 %v1727
        %1772 = vmatprep.subr.bf16.mxu0 0
        %1773 = vmatpush1.bf16.msra.mxu0 %v1726
        %1774 = vmatprep.subr.bf16.mxu0 0
        %1775 = vmatpush2.bf16.msra.mxu0 %v1741
        %1776 = vmatprep.subr.bf16.mxu0 0
        %1777 = vmatpush2.bf16.msra.mxu0 %v1740
        %1778 = vmatprep.subr.bf16.mxu0 0
        %1779 = vmatpush2.bf16.msra.mxu0 %v1739
        %1780 = vmatprep.subr.bf16.mxu0 0
        %1781 = vmatpush2.bf16.msra.mxu0 %v1738
        %1782 = vmatprep.subr.bf16.mxu0 0
        %1783 = vmatpush2.bf16.msra.mxu0 %v1737
        %1784 = vmatprep.subr.bf16.mxu0 0
        %1785 = vmatpush2.bf16.msra.mxu0 %v1736
        %1786 = vmatprep.subr.bf16.mxu0 0
        %1787 = vmatpush2.bf16.msra.mxu0 %v1735
        %1788 = vmatprep.subr.bf16.mxu0 0
        %1789 = vmatpush2.bf16.msra.mxu0 %v1734
        %1790 = vmatprep.mubr.bf16.mxu0 %v1657
        %1791 = vmatmul.mubr.bf16.gmra.mxu0 %v1656
        %v1792 = vpop.f32.mrf.mxu0
        %v1793 = vadd.f32 %v1661, %v1792
        %v1794 = vpop.f32.mrf.mxu0
        %v1795 = vpop.f32.mrf.mxu0
        %v1796 = vpop.f32.mrf.mxu0
        %1797 = vdwg.mxu0
        %v1798 = vadd.f32 %v1523, %v1793
        %1799 = vadd.xlane.f32.xlu0 %v1798
        %v1800 = vpop.xlane.xlu0 %1799
        %v1801 = vmul.f32 %v1800, %v1504
        %v1802 = vsub.f32 %v1798, %v1801
        %v1803 = vmul.f32 %v1802, %v1802
        %1804 = vadd.xlane.f32.xlu0 %v1803
        %v1805 = vpop.xlane.xlu0 %1804
        %v1806 = vmul.f32 %v1805, %v1504
        %v1807 = vadd.f32 %v1806, 1e-05
        %v1808 = vrsqrt.pop %v1807
        %v1809 = vmul.f32 %v1802, %v1808
        %v1810 = vlaneseq
        %v1811 = vshrl.u32 %v1810, 7
        %v1812 = vsub.s32 6, %v1811
        %v1813 = vrot.slane %v598, %v1812
        %v1814 = vmul.f32 %v1809, %v1813
        %v1815 = vlaneseq
        %v1816 = vshrl.u32 %v1815, 7
        %v1817 = vsub.s32 7, %v1816
        %v1818 = vrot.slane %v598, %v1817
        %v1819 = vadd.f32 %v1814, %v1818
        %s1820 = scalar_lea.vmem [#allocation4], 192
        %v1821 = vld [vmem:[%s1820] sm:$0xff]
        %v1822 = vld [vmem:[%s1820 + $0x8] sm:$0xf]
        %v1823 = vld [vmem:[%s1820 + $0xc] sm:$0xff]
        %v1824 = vld [vmem:[%s1820 + $0x14] sm:$0xf]
        %v1825 = vld [vmem:[%s1820 + $0x18] sm:$0xff]
        %v1826 = vld [vmem:[%s1820 + $0x20] sm:$0xf]
        %v1827 = vld [vmem:[%s1820 + $0x24] sm:$0xff]
        %v1828 = vld [vmem:[%s1820 + $0x2c] sm:$0xf]
        %v1829 = vld [vmem:[%s1820 + $0x30] sm:$0xff]
        %v1830 = vld [vmem:[%s1820 + $0x38] sm:$0xf]
        %v1831 = vld [vmem:[%s1820 + $0x3c] sm:$0xff]
        %v1832 = vld [vmem:[%s1820 + $0x44] sm:$0xf]
        %v1833 = vld [vmem:[%s1820 + $0x48] sm:$0xff]
        %v1834 = vld [vmem:[%s1820 + $0x50] sm:$0xf]
        %v1835 = vld [vmem:[%s1820 + $0x54] sm:$0xff]
        %v1836 = vld [vmem:[%s1820 + $0x5c] sm:$0xf]
        %v1837 = vld [vmem:[%s1820 + $0x60] sm:$0xff]
        %v1838 = vld [vmem:[%s1820 + $0x68] sm:$0xf]
        %v1839 = vld [vmem:[%s1820 + $0x6c] sm:$0xff]
        %v1840 = vld [vmem:[%s1820 + $0x74] sm:$0xf]
        %v1841 = vld [vmem:[%s1820 + $0x78] sm:$0xff]
        %v1842 = vld [vmem:[%s1820 + $0x80] sm:$0xf]
        %v1843 = vld [vmem:[%s1820 + $0x84] sm:$0xff]
        %v1844 = vld [vmem:[%s1820 + $0x8c] sm:$0xf]
        %v1845 = vld [vmem:[%s1820 + $0x90] sm:$0xff]
        %v1846 = vld [vmem:[%s1820 + $0x98] sm:$0xf]
        %v1847 = vld [vmem:[%s1820 + $0x9c] sm:$0xff]
        %v1848 = vld [vmem:[%s1820 + $0xa4] sm:$0xf]
        %v1849 = vld [vmem:[%s1820 + $0xa8] sm:$0xff]
        %v1850 = vld [vmem:[%s1820 + $0xb0] sm:$0xf]
        %v1851 = vld [vmem:[%s1820 + $0xb4] sm:$0xff]
        %v1852 = vld [vmem:[%s1820 + $0xbc] sm:$0xf]
        %s1853 = scalar_lea.vmem [#allocation6], 64
        %v1854 = vld [vmem:[%s1853] sm:$0xf]
        %v1855 = vld [vmem:[%s1853 + $0x4] sm:$0xf]
        %v1856 = vld [vmem:[%s1853 + $0x8] sm:$0xf]
        %v1857 = vld [vmem:[%s1853 + $0xc] sm:$0xf]
        %v1858 = vld [vmem:[%s1853 + $0x10] sm:$0xf]
        %v1859 = vld [vmem:[%s1853 + $0x14] sm:$0xf]
        %v1860 = vld [vmem:[%s1853 + $0x18] sm:$0xf]
        %v1861 = vld [vmem:[%s1853 + $0x1c] sm:$0xf]
        %v1862 = vld [vmem:[%s1853 + $0x20] sm:$0xf]
        %v1863 = vld [vmem:[%s1853 + $0x24] sm:$0xf]
        %v1864 = vld [vmem:[%s1853 + $0x28] sm:$0xf]
        %v1865 = vld [vmem:[%s1853 + $0x2c] sm:$0xf]
        %v1866 = vld [vmem:[%s1853 + $0x30] sm:$0xf]
        %v1867 = vld [vmem:[%s1853 + $0x34] sm:$0xf]
        %v1868 = vld [vmem:[%s1853 + $0x38] sm:$0xf]
        %v1869 = vld [vmem:[%s1853 + $0x3c] sm:$0xf]
        %s1870 = scalar_lea.vmem [#allocation7], 128
        %v1871 = vld [vmem:[%s1870] sm:$0xff]
        %v1872 = vld [vmem:[%s1870 + $0x8] sm:$0xff]
        %v1873 = vld [vmem:[%s1870 + $0x10] sm:$0xff]
        %v1874 = vld [vmem:[%s1870 + $0x18] sm:$0xff]
        %v1875 = vld [vmem:[%s1870 + $0x20] sm:$0xff]
        %v1876 = vld [vmem:[%s1870 + $0x28] sm:$0xff]
        %v1877 = vld [vmem:[%s1870 + $0x30] sm:$0xff]
        %v1878 = vld [vmem:[%s1870 + $0x38] sm:$0xff]
        %v1879 = vld [vmem:[%s1870 + $0x40] sm:$0xff]
        %v1880 = vld [vmem:[%s1870 + $0x48] sm:$0xff]
        %v1881 = vld [vmem:[%s1870 + $0x50] sm:$0xff]
        %v1882 = vld [vmem:[%s1870 + $0x58] sm:$0xff]
        %v1883 = vld [vmem:[%s1870 + $0x60] sm:$0xff]
        %v1884 = vld [vmem:[%s1870 + $0x68] sm:$0xff]
        %v1885 = vld [vmem:[%s1870 + $0x70] sm:$0xff]
        %v1886 = vld [vmem:[%s1870 + $0x78] sm:$0xff]
        %s1887 = scalar_lea.vmem [#allocation9], 128
        %v1888 = vld [vmem:[%s1887] sm:$0xf]
        %v1889 = vld [vmem:[%s1887 + $0x4] sm:$0xf]
        %v1890 = vld [vmem:[%s1887 + $0x8] sm:$0xf]
        %v1891 = vld [vmem:[%s1887 + $0xc] sm:$0xf]
        %v1892 = vld [vmem:[%s1887 + $0x10] sm:$0xf]
        %v1893 = vld [vmem:[%s1887 + $0x14] sm:$0xf]
        %v1894 = vld [vmem:[%s1887 + $0x18] sm:$0xf]
        %v1895 = vld [vmem:[%s1887 + $0x1c] sm:$0xf]
        %v1896 = vld [vmem:[%s1887 + $0x20] sm:$0xf]
        %v1897 = vld [vmem:[%s1887 + $0x24] sm:$0xf]
        %v1898 = vld [vmem:[%s1887 + $0x28] sm:$0xf]
        %v1899 = vld [vmem:[%s1887 + $0x2c] sm:$0xf]
        %v1900 = vld [vmem:[%s1887 + $0x30] sm:$0xf]
        %v1901 = vld [vmem:[%s1887 + $0x34] sm:$0xf]
        %v1902 = vld [vmem:[%s1887 + $0x38] sm:$0xf]
        %v1903 = vld [vmem:[%s1887 + $0x3c] sm:$0xf]
        %v1904 = vld [vmem:[%s1887 + $0x40] sm:$0xf]
        %v1905 = vld [vmem:[%s1887 + $0x44] sm:$0xf]
        %v1906 = vld [vmem:[%s1887 + $0x48] sm:$0xf]
        %v1907 = vld [vmem:[%s1887 + $0x4c] sm:$0xf]
        %v1908 = vld [vmem:[%s1887 + $0x50] sm:$0xf]
        %v1909 = vld [vmem:[%s1887 + $0x54] sm:$0xf]
        %v1910 = vld [vmem:[%s1887 + $0x58] sm:$0xf]
        %v1911 = vld [vmem:[%s1887 + $0x5c] sm:$0xf]
        %v1912 = vld [vmem:[%s1887 + $0x60] sm:$0xf]
        %v1913 = vld [vmem:[%s1887 + $0x64] sm:$0xf]
        %v1914 = vld [vmem:[%s1887 + $0x68] sm:$0xf]
        %v1915 = vld [vmem:[%s1887 + $0x6c] sm:$0xf]
        %v1916 = vld [vmem:[%s1887 + $0x70] sm:$0xf]
        %v1917 = vld [vmem:[%s1887 + $0x74] sm:$0xf]
        %v1918 = vld [vmem:[%s1887 + $0x78] sm:$0xf]
        %v1919 = vld [vmem:[%s1887 + $0x7c] sm:$0xf]
        %s1920 = scalar_lea.vmem [#allocation10], 24
        %v1921 = vld [vmem:[%s1920] sm:$0xff]
        %v1922 = vld [vmem:[%s1920 + $0x8] sm:$0xff]
        %v1923 = vld [vmem:[%s1920 + $0x10] sm:$0xff]
        %v1924 = vpack.c.bf16 %v1819, %v1819
        %v1925 = vlaneseq
        %v1926 = vshrl.u32 %v1925, 7
        %v1927 = vsub.s32 0, %v1926
        %v1928 = vrot.slane %v1921, %v1927
        %v1929 = vlaneseq
        %v1930 = vshrl.u32 %v1929, 7
        %v1931 = vsub.s32 0, %v1930
        %v1932 = vrot.slane %v1922, %v1931
        %v1933 = vlaneseq
        %v1934 = vshrl.u32 %v1933, 7
        %v1935 = vsub.s32 0, %v1934
        %v1936 = vrot.slane %v1923, %v1935
        %v1969 = vunpack.c.l.b16 %v1821
        %v1970 = vunpack.c.h.b16 %v1821
        %v1971 = vunpack.c.l.b16 %v1822
        %v1972 = vunpack.c.l.b16 %v1823
        %v1973 = vunpack.c.h.b16 %v1823
        %v1974 = vunpack.c.l.b16 %v1824
        %v1975 = vunpack.c.l.b16 %v1825
        %v1976 = vunpack.c.h.b16 %v1825
        %v1977 = vunpack.c.l.b16 %v1826
        %v1978 = vunpack.c.l.b16 %v1827
        %v1979 = vunpack.c.h.b16 %v1827
        %v1980 = vunpack.c.l.b16 %v1828
        %v1981 = vunpack.c.l.b16 %v1829
        %v1982 = vunpack.c.h.b16 %v1829
        %v1983 = vunpack.c.l.b16 %v1830
        %v1984 = vunpack.c.l.b16 %v1831
        %v1985 = vunpack.c.h.b16 %v1831
        %v1986 = vunpack.c.l.b16 %v1832
        %v1987 = vunpack.c.l.b16 %v1833
        %v1988 = vunpack.c.h.b16 %v1833
        %v1989 = vunpack.c.l.b16 %v1834
        %v1990 = vunpack.c.l.b16 %v1835
        %v1991 = vunpack.c.h.b16 %v1835
        %v1992 = vunpack.c.l.b16 %v1836
        %v1993 = vunpack.c.l.b16 %v1837
        %v1994 = vunpack.c.h.b16 %v1837
        %v1995 = vunpack.c.l.b16 %v1838
        %v1996 = vunpack.c.l.b16 %v1839
        %v1997 = vunpack.c.h.b16 %v1839
        %v1998 = vunpack.c.l.b16 %v1840
        %v1999 = vunpack.c.l.b16 %v1841
        %v2000 = vunpack.c.h.b16 %v1841
        %v2001 = vunpack.c.l.b16 %v1842
        %v2002 = vunpack.c.l.b16 %v1843
        %v2003 = vunpack.c.h.b16 %v1843
        %v2004 = vunpack.c.l.b16 %v1844
        %v2005 = vunpack.c.l.b16 %v1845
        %v2006 = vunpack.c.h.b16 %v1845
        %v2007 = vunpack.c.l.b16 %v1846
        %v2008 = vunpack.c.l.b16 %v1847
        %v2009 = vunpack.c.h.b16 %v1847
        %v2010 = vunpack.c.l.b16 %v1848
        %v2011 = vunpack.c.l.b16 %v1849
        %v2012 = vunpack.c.h.b16 %v1849
        %v2013 = vunpack.c.l.b16 %v1850
        %v2014 = vunpack.c.l.b16 %v1851
        %v2015 = vunpack.c.h.b16 %v1851
        %v2016 = vunpack.c.l.b16 %v1852
        %v2017 = vpack.c.b16 %v1972, %v1969
        %v2018 = vpack.c.b16 %v1973, %v1970
        %v2019 = vpack.c.b16 %v1974, %v1971
        %v2020 = vpack.c.b16 %v1978, %v1975
        %v2021 = vpack.c.b16 %v1979, %v1976
        %v2022 = vpack.c.b16 %v1980, %v1977
        %v2023 = vpack.c.b16 %v1984, %v1981
        %v2024 = vpack.c.b16 %v1985, %v1982
        %v2025 = vpack.c.b16 %v1986, %v1983
        %v2026 = vpack.c.b16 %v1990, %v1987
        %v2027 = vpack.c.b16 %v1991, %v1988
        %v2028 = vpack.c.b16 %v1992, %v1989
        %v2029 = vpack.c.b16 %v1996, %v1993
        %v2030 = vpack.c.b16 %v1997, %v1994
        %v2031 = vpack.c.b16 %v1998, %v1995
        %v2032 = vpack.c.b16 %v2002, %v1999
        %v2033 = vpack.c.b16 %v2003, %v2000
        %v2034 = vpack.c.b16 %v2004, %v2001
        %v2035 = vpack.c.b16 %v2008, %v2005
        %v2036 = vpack.c.b16 %v2009, %v2006
        %v2037 = vpack.c.b16 %v2010, %v2007
        %v2038 = vpack.c.b16 %v2014, %v2011
        %v2039 = vpack.c.b16 %v2015, %v2012
        %v2040 = vpack.c.b16 %v2016, %v2013
        %2065 = vmatprep.subr.bf16.mxu0 %v2039
        %2066 = vmatpush1.bf16.msra.mxu0 %v2038
        %2067 = vmatprep.subr.bf16.mxu0 %v2036
        %2068 = vmatpush1.bf16.msra.mxu0 %v2035
        %2069 = vmatprep.subr.bf16.mxu0 %v2033
        %2070 = vmatpush1.bf16.msra.mxu0 %v2032
        %2071 = vmatprep.subr.bf16.mxu0 %v2030
        %2072 = vmatpush1.bf16.msra.mxu0 %v2029
        %2073 = vmatprep.subr.bf16.mxu0 %v2027
        %2074 = vmatpush1.bf16.msra.mxu0 %v2026
        %2075 = vmatprep.subr.bf16.mxu0 %v2024
        %2076 = vmatpush1.bf16.msra.mxu0 %v2023
        %2077 = vmatprep.subr.bf16.mxu0 %v2021
        %2078 = vmatpush1.bf16.msra.mxu0 %v2020
        %2079 = vmatprep.subr.bf16.mxu0 %v2018
        %2080 = vmatpush1.bf16.msra.mxu0 %v2017
        %2081 = vmatprep.subr.bf16.mxu0 0
        %2082 = vmatpush2.bf16.msra.mxu0 0
        %2083 = vmatprep.subr.bf16.mxu0 0
        %2084 = vmatpush2.bf16.msra.mxu0 0
        %2085 = vmatprep.subr.bf16.mxu0 0
        %2086 = vmatpush2.bf16.msra.mxu0 0
        %2087 = vmatprep.subr.bf16.mxu0 0
        %2088 = vmatpush2.bf16.msra.mxu0 0
        %2089 = vmatprep.subr.bf16.mxu0 0
        %2090 = vmatpush2.bf16.msra.mxu0 0
        %2091 = vmatprep.subr.bf16.mxu0 0
        %2092 = vmatpush2.bf16.msra.mxu0 0
        %2093 = vmatprep.subr.bf16.mxu0 0
        %2094 = vmatpush2.bf16.msra.mxu0 0
        %2095 = vmatprep.subr.bf16.mxu0 0
        %2096 = vmatpush2.bf16.msra.mxu0 0
        %2097 = vmatprep.mubr.bf16.mxu0 0
        %2098 = vmatmul.mubr.bf16.gmra.mxu0 %v1924
        %v2099 = vpop.f32.mrf.mxu0
        %v2100 = vadd.f32 %v1928, %v2099
        %v2101 = vpop.f32.mrf.mxu0
        %v2102 = vadd.f32 %v1932, %v2101
        %v2103 = vpop.f32.mrf.mxu0
        %v2104 = vpop.f32.mrf.mxu0
        %2105 = vdwg.mxu0
        %2106 = vmatprep.subr.bf16.mxu0 0
        %2107 = vmatpush1.bf16.msra.mxu0 %v2040
        %2108 = vmatprep.subr.bf16.mxu0 0
        %2109 = vmatpush1.bf16.msra.mxu0 %v2037
        %2110 = vmatprep.subr.bf16.mxu0 0
        %2111 = vmatpush1.bf16.msra.mxu0 %v2034
        %2112 = vmatprep.subr.bf16.mxu0 0
        %2113 = vmatpush1.bf16.msra.mxu0 %v2031
        %2114 = vmatprep.subr.bf16.mxu0 0
        %2115 = vmatpush1.bf16.msra.mxu0 %v2028
        %2116 = vmatprep.subr.bf16.mxu0 0
        %2117 = vmatpush1.bf16.msra.mxu0 %v2025
        %2118 = vmatprep.subr.bf16.mxu0 0
        %2119 = vmatpush1.bf16.msra.mxu0 %v2022
        %2120 = vmatprep.subr.bf16.mxu0 0
        %2121 = vmatpush1.bf16.msra.mxu0 %v2019
        %2122 = vmatprep.subr.bf16.mxu0 0
        %2123 = vmatpush2.bf16.msra.mxu0 0
        %2124 = vmatprep.subr.bf16.mxu0 0
        %2125 = vmatpush2.bf16.msra.mxu0 0
        %2126 = vmatprep.subr.bf16.mxu0 0
        %2127 = vmatpush2.bf16.msra.mxu0 0
        %2128 = vmatprep.subr.bf16.mxu0 0
        %2129 = vmatpush2.bf16.msra.mxu0 0
        %2130 = vmatprep.subr.bf16.mxu0 0
        %2131 = vmatpush2.bf16.msra.mxu0 0
        %2132 = vmatprep.subr.bf16.mxu0 0
        %2133 = vmatpush2.bf16.msra.mxu0 0
        %2134 = vmatprep.subr.bf16.mxu0 0
        %2135 = vmatpush2.bf16.msra.mxu0 0
        %2136 = vmatprep.subr.bf16.mxu0 0
        %2137 = vmatpush2.bf16.msra.mxu0 0
        %2138 = vmatprep.mubr.bf16.mxu0 0
        %2139 = vmatmul.mubr.bf16.gmra.mxu0 %v1924
        %v2140 = vpop.f32.mrf.mxu0
        %v2141 = vadd.f32 %v1936, %v2140
        %v2142 = vpop.f32.mrf.mxu0
        %v2143 = vpop.f32.mrf.mxu0
        %v2144 = vpop.f32.mrf.mxu0
        %2145 = vdwg.mxu0
        %v2146 = vpack.c.bf16 %v2100, %v2100
        %v2147 = vpack.c.bf16 %v2102, %v2102
        %v2148 = vpack.c.bf16 %v2141, %v2141
        %v2150 = vsel %vm826, %v2146, 0
        %v2153 = vsel %vm826, %v2147, 0
        %2155 = vmatprep.subr.bf16.mxu0 0
        %2156 = vmatpush1.bf16.xpose.msra.mxu0 0
        %2157 = vmatprep.subr.bf16.mxu0 0
        %2158 = vmatpush1.bf16.xpose.msra.mxu0 0
        %2159 = vmatprep.subr.bf16.mxu0 0
        %2160 = vmatpush1.bf16.xpose.msra.mxu0 0
        %2161 = vmatprep.subr.bf16.mxu0 0
        %2162 = vmatpush1.bf16.xpose.msra.mxu0 0
        %2163 = vmatprep.subr.bf16.mxu0 0
        %2164 = vmatpush1.bf16.xpose.msra.mxu0 0
        %2165 = vmatprep.subr.bf16.mxu0 0
        %2166 = vmatpush1.bf16.xpose.msra.mxu0 0
        %2167 = vmatprep.subr.bf16.mxu0 0
        %2168 = vmatpush1.bf16.xpose.msra.mxu0 0
        %2169 = vmatprep.subr.bf16.mxu0 0
        %2170 = vmatpush1.bf16.xpose.msra.mxu0 %v2153
        %2171 = vmatprep.subr.bf16.mxu0 0
        %2172 = vmatpush2.bf16.xpose.msra.mxu0 0
        %2173 = vmatprep.subr.bf16.mxu0 0
        %2174 = vmatpush2.bf16.xpose.msra.mxu0 0
        %2175 = vmatprep.subr.bf16.mxu0 0
        %2176 = vmatpush2.bf16.xpose.msra.mxu0 0
        %2177 = vmatprep.subr.bf16.mxu0 0
        %2178 = vmatpush2.bf16.xpose.msra.mxu0 0
        %2179 = vmatprep.subr.bf16.mxu0 0
        %2180 = vmatpush2.bf16.xpose.msra.mxu0 0
        %2181 = vmatprep.subr.bf16.mxu0 0
        %2182 = vmatpush2.bf16.xpose.msra.mxu0 0
        %2183 = vmatprep.subr.bf16.mxu0 0
        %2184 = vmatpush2.bf16.xpose.msra.mxu0 0
        %2185 = vmatprep.subr.bf16.mxu0 0
        %2186 = vmatpush2.bf16.xpose.msra.mxu0 0
        %2187 = vmatprep.mubr.bf16.mxu0 0
        %2188 = vmatmul.mubr.bf16.gmra.mxu0 %v2150
        %v2189 = vpop.f32.mrf.mxu0
        %v2190 = vadd.f32 0.0, %v2189
        %v2191 = vpop.f32.mrf.mxu0
        %v2192 = vpop.f32.mrf.mxu0
        %v2193 = vpop.f32.mrf.mxu0
        %2194 = vdwg.mxu0
        %v2195 = vmul.f32 %v2190, 0.17677669
        %v2196 = vsel %vm874, %v2195, -inf
        %2197 = vmax.xlane.f32.xlu0 %v2196
        %v2198 = vpop.xlane.xlu0 %2197
        %v2199 = vsub.f32 %v2195, %v2198
        %v2200 = vmul.f32 %v2199, 1.442695
        %v2201 = vpow.pop %v2200
        %v2202 = vsel %vm874, %v2201, 0.0
        %2203 = vadd.xlane.f32.xlu0 %v2202
        %v2204 = vpop.xlane.xlu0 %2203
        %v2205 = vrcp.pop %v2204
        %v2206 = vmul.f32 %v2201, %v2205
        %v2207 = vpack.c.bf16 %v2206, %v2206
        %v2209 = vsel %vm874, %v2207, 0
        %v2212 = vsel %vm890, %v2148, 0
        %2214 = vmatprep.subr.bf16.mxu0 0
        %2215 = vmatpush1.bf16.msra.mxu0 0
        %2216 = vmatprep.subr.bf16.mxu0 0
        %2217 = vmatpush1.bf16.msra.mxu0 0
        %2218 = vmatprep.subr.bf16.mxu0 0
        %2219 = vmatpush1.bf16.msra.mxu0 0
        %2220 = vmatprep.subr.bf16.mxu0 0
        %2221 = vmatpush1.bf16.msra.mxu0 0
        %2222 = vmatprep.subr.bf16.mxu0 0
        %2223 = vmatpush1.bf16.msra.mxu0 0
        %2224 = vmatprep.subr.bf16.mxu0 0
        %2225 = vmatpush1.bf16.msra.mxu0 0
        %2226 = vmatprep.subr.bf16.mxu0 0
        %2227 = vmatpush1.bf16.msra.mxu0 0
        %2228 = vmatprep.subr.bf16.mxu0 0
        %2229 = vmatpush1.bf16.msra.mxu0 %v2212
        %2230 = vmatprep.subr.bf16.mxu0 0
        %2231 = vmatpush2.bf16.msra.mxu0 0
        %2232 = vmatprep.subr.bf16.mxu0 0
        %2233 = vmatpush2.bf16.msra.mxu0 0
        %2234 = vmatprep.subr.bf16.mxu0 0
        %2235 = vmatpush2.bf16.msra.mxu0 0
        %2236 = vmatprep.subr.bf16.mxu0 0
        %2237 = vmatpush2.bf16.msra.mxu0 0
        %2238 = vmatprep.subr.bf16.mxu0 0
        %2239 = vmatpush2.bf16.msra.mxu0 0
        %2240 = vmatprep.subr.bf16.mxu0 0
        %2241 = vmatpush2.bf16.msra.mxu0 0
        %2242 = vmatprep.subr.bf16.mxu0 0
        %2243 = vmatpush2.bf16.msra.mxu0 0
        %2244 = vmatprep.subr.bf16.mxu0 0
        %2245 = vmatpush2.bf16.msra.mxu0 0
        %2246 = vmatprep.mubr.bf16.mxu0 0
        %2247 = vmatmul.mubr.bf16.gmra.mxu0 %v2209
        %v2248 = vpop.f32.mrf.mxu0
        %v2249 = vadd.f32 0.0, %v2248
        %v2250 = vpop.f32.mrf.mxu0
        %v2251 = vpop.f32.mrf.mxu0
        %v2252 = vpop.f32.mrf.mxu0
        %2253 = vdwg.mxu0
        %v2254 = vpack.c.bf16 %v2249, %v2249
        %2256 = vrot.lane.b32.xlu0 %v2146, 96
        %v2257 = vpop.permute.xlu0 %2256
        %2259 = vrot.lane.b32.xlu0 %v2147, 96
        %v2260 = vpop.permute.xlu0 %2259
        %v2262 = vsel %vm826, %v2257, 0
        %v2265 = vsel %vm826, %v2260, 0
        %2267 = vmatprep.subr.bf16.mxu0 0
        %2268 = vmatpush1.bf16.xpose.msra.mxu0 0
        %2269 = vmatprep.subr.bf16.mxu0 0
        %2270 = vmatpush1.bf16.xpose.msra.mxu0 0
        %2271 = vmatprep.subr.bf16.mxu0 0
        %2272 = vmatpush1.bf16.xpose.msra.mxu0 0
        %2273 = vmatprep.subr.bf16.mxu0 0
        %2274 = vmatpush1.bf16.xpose.msra.mxu0 0
        %2275 = vmatprep.subr.bf16.mxu0 0
        %2276 = vmatpush1.bf16.xpose.msra.mxu0 0
        %2277 = vmatprep.subr.bf16.mxu0 0
        %2278 = vmatpush1.bf16.xpose.msra.mxu0 0
        %2279 = vmatprep.subr.bf16.mxu0 0
        %2280 = vmatpush1.bf16.xpose.msra.mxu0 0
        %2281 = vmatprep.subr.bf16.mxu0 0
        %2282 = vmatpush1.bf16.xpose.msra.mxu0 %v2265
        %2283 = vmatprep.subr.bf16.mxu0 0
        %2284 = vmatpush2.bf16.xpose.msra.mxu0 0
        %2285 = vmatprep.subr.bf16.mxu0 0
        %2286 = vmatpush2.bf16.xpose.msra.mxu0 0
        %2287 = vmatprep.subr.bf16.mxu0 0
        %2288 = vmatpush2.bf16.xpose.msra.mxu0 0
        %2289 = vmatprep.subr.bf16.mxu0 0
        %2290 = vmatpush2.bf16.xpose.msra.mxu0 0
        %2291 = vmatprep.subr.bf16.mxu0 0
        %2292 = vmatpush2.bf16.xpose.msra.mxu0 0
        %2293 = vmatprep.subr.bf16.mxu0 0
        %2294 = vmatpush2.bf16.xpose.msra.mxu0 0
        %2295 = vmatprep.subr.bf16.mxu0 0
        %2296 = vmatpush2.bf16.xpose.msra.mxu0 0
        %2297 = vmatprep.subr.bf16.mxu0 0
        %2298 = vmatpush2.bf16.xpose.msra.mxu0 0
        %2299 = vmatprep.mubr.bf16.mxu0 0
        %2300 = vmatmul.mubr.bf16.gmra.mxu0 %v2262
        %v2301 = vpop.f32.mrf.mxu0
        %v2302 = vadd.f32 0.0, %v2301
        %v2303 = vpop.f32.mrf.mxu0
        %v2304 = vpop.f32.mrf.mxu0
        %v2305 = vpop.f32.mrf.mxu0
        %2306 = vdwg.mxu0
        %v2307 = vmul.f32 %v2302, 0.17677669
        %v2308 = vsel %vm874, %v2307, -inf
        %2309 = vmax.xlane.f32.xlu0 %v2308
        %v2310 = vpop.xlane.xlu0 %2309
        %v2311 = vsub.f32 %v2307, %v2310
        %v2312 = vmul.f32 %v2311, 1.442695
        %v2313 = vpow.pop %v2312
        %v2314 = vsel %vm874, %v2313, 0.0
        %2315 = vadd.xlane.f32.xlu0 %v2314
        %v2316 = vpop.xlane.xlu0 %2315
        %v2317 = vrcp.pop %v2316
        %v2318 = vmul.f32 %v2313, %v2317
        %v2319 = vpack.c.bf16 %v2318, %v2318
        %2321 = vrot.lane.b32.xlu0 %v2148, 96
        %v2322 = vpop.permute.xlu0 %2321
        %v2324 = vsel %vm874, %v2319, 0
        %v2327 = vsel %vm890, %v2322, 0
        %2329 = vmatprep.subr.bf16.mxu0 0
        %2330 = vmatpush1.bf16.msra.mxu0 0
        %2331 = vmatprep.subr.bf16.mxu0 0
        %2332 = vmatpush1.bf16.msra.mxu0 0
        %2333 = vmatprep.subr.bf16.mxu0 0
        %2334 = vmatpush1.bf16.msra.mxu0 0
        %2335 = vmatprep.subr.bf16.mxu0 0
        %2336 = vmatpush1.bf16.msra.mxu0 0
        %2337 = vmatprep.subr.bf16.mxu0 0
        %2338 = vmatpush1.bf16.msra.mxu0 0
        %2339 = vmatprep.subr.bf16.mxu0 0
        %2340 = vmatpush1.bf16.msra.mxu0 0
        %2341 = vmatprep.subr.bf16.mxu0 0
        %2342 = vmatpush1.bf16.msra.mxu0 0
        %2343 = vmatprep.subr.bf16.mxu0 0
        %2344 = vmatpush1.bf16.msra.mxu0 %v2327
        %2345 = vmatprep.subr.bf16.mxu0 0
        %2346 = vmatpush2.bf16.msra.mxu0 0
        %2347 = vmatprep.subr.bf16.mxu0 0
        %2348 = vmatpush2.bf16.msra.mxu0 0
        %2349 = vmatprep.subr.bf16.mxu0 0
        %2350 = vmatpush2.bf16.msra.mxu0 0
        %2351 = vmatprep.subr.bf16.mxu0 0
        %2352 = vmatpush2.bf16.msra.mxu0 0
        %2353 = vmatprep.subr.bf16.mxu0 0
        %2354 = vmatpush2.bf16.msra.mxu0 0
        %2355 = vmatprep.subr.bf16.mxu0 0
        %2356 = vmatpush2.bf16.msra.mxu0 0
        %2357 = vmatprep.subr.bf16.mxu0 0
        %2358 = vmatpush2.bf16.msra.mxu0 0
        %2359 = vmatprep.subr.bf16.mxu0 0
        %2360 = vmatpush2.bf16.msra.mxu0 0
        %2361 = vmatprep.mubr.bf16.mxu0 0
        %2362 = vmatmul.mubr.bf16.gmra.mxu0 %v2324
        %v2363 = vpop.f32.mrf.mxu0
        %v2364 = vadd.f32 0.0, %v2363
        %v2365 = vpop.f32.mrf.mxu0
        %v2366 = vpop.f32.mrf.mxu0
        %v2367 = vpop.f32.mrf.mxu0
        %2368 = vdwg.mxu0
        %v2369 = vpack.c.bf16 %v2364, %v2364
        %v2374 = vunpack.c.l.b16 %v1858
        %v2375 = vunpack.c.l.b16 %v1859
        %v2376 = vunpack.c.l.b16 %v1860
        %v2377 = vunpack.c.l.b16 %v1861
        %v2378 = vpack.c.b16 %v2375, %v2374
        %v2379 = vpack.c.b16 %v2377, %v2376
        %v2383 = vsel %vm826, %v2369, 0
        %2385 = vmatprep.subr.bf16.mxu0 0
        %2386 = vmatpush1.bf16.msra.mxu0 0
        %2387 = vmatprep.subr.bf16.mxu0 0
        %2388 = vmatpush1.bf16.msra.mxu0 0
        %2389 = vmatprep.subr.bf16.mxu0 0
        %2390 = vmatpush1.bf16.msra.mxu0 0
        %2391 = vmatprep.subr.bf16.mxu0 0
        %2392 = vmatpush1.bf16.msra.mxu0 0
        %2393 = vmatprep.subr.bf16.mxu0 0
        %2394 = vmatpush1.bf16.msra.mxu0 0
        %2395 = vmatprep.subr.bf16.mxu0 0
        %2396 = vmatpush1.bf16.msra.mxu0 0
        %2397 = vmatprep.subr.bf16.mxu0 0
        %2398 = vmatpush1.bf16.msra.mxu0 %v2379
        %2399 = vmatprep.subr.bf16.mxu0 0
        %2400 = vmatpush1.bf16.msra.mxu0 %v2378
        %2401 = vmatprep.subr.bf16.mxu0 0
        %2402 = vmatpush2.bf16.msra.mxu0 0
        %2403 = vmatprep.subr.bf16.mxu0 0
        %2404 = vmatpush2.bf16.msra.mxu0 0
        %2405 = vmatprep.subr.bf16.mxu0 0
        %2406 = vmatpush2.bf16.msra.mxu0 0
        %2407 = vmatprep.subr.bf16.mxu0 0
        %2408 = vmatpush2.bf16.msra.mxu0 0
        %2409 = vmatprep.subr.bf16.mxu0 0
        %2410 = vmatpush2.bf16.msra.mxu0 0
        %2411 = vmatprep.subr.bf16.mxu0 0
        %2412 = vmatpush2.bf16.msra.mxu0 0
        %2413 = vmatprep.subr.bf16.mxu0 0
        %2414 = vmatpush2.bf16.msra.mxu0 0
        %2415 = vmatprep.subr.bf16.mxu0 0
        %2416 = vmatpush2.bf16.msra.mxu0 0
        %2417 = vmatprep.mubr.bf16.mxu0 0
        %2418 = vmatmul.mubr.bf16.gmra.mxu0 %v2383
        %v2419 = vpop.f32.mrf.mxu0
        %v2420 = vadd.f32 0.0, %v2419
        %v2421 = vpop.f32.mrf.mxu0
        %v2422 = vpop.f32.mrf.mxu0
        %v2423 = vpop.f32.mrf.mxu0
        %2424 = vdwg.mxu0
        %v2429 = vunpack.c.l.b16 %v1854
        %v2430 = vunpack.c.l.b16 %v1855
        %v2431 = vunpack.c.l.b16 %v1856
        %v2432 = vunpack.c.l.b16 %v1857
        %v2433 = vpack.c.b16 %v2430, %v2429
        %v2434 = vpack.c.b16 %v2432, %v2431
        %v2438 = vsel %vm826, %v2254, 0
        %2440 = vmatprep.subr.bf16.mxu0 0
        %2441 = vmatpush1.bf16.msra.mxu0 0
        %2442 = vmatprep.subr.bf16.mxu0 0
        %2443 = vmatpush1.bf16.msra.mxu0 0
        %2444 = vmatprep.subr.bf16.mxu0 0
        %2445 = vmatpush1.bf16.msra.mxu0 0
        %2446 = vmatprep.subr.bf16.mxu0 0
        %2447 = vmatpush1.bf16.msra.mxu0 0
        %2448 = vmatprep.subr.bf16.mxu0 0
        %2449 = vmatpush1.bf16.msra.mxu0 0
        %2450 = vmatprep.subr.bf16.mxu0 0
        %2451 = vmatpush1.bf16.msra.mxu0 0
        %2452 = vmatprep.subr.bf16.mxu0 0
        %2453 = vmatpush1.bf16.msra.mxu0 %v2434
        %2454 = vmatprep.subr.bf16.mxu0 0
        %2455 = vmatpush1.bf16.msra.mxu0 %v2433
        %2456 = vmatprep.subr.bf16.mxu0 0
        %2457 = vmatpush2.bf16.msra.mxu0 0
        %2458 = vmatprep.subr.bf16.mxu0 0
        %2459 = vmatpush2.bf16.msra.mxu0 0
        %2460 = vmatprep.subr.bf16.mxu0 0
        %2461 = vmatpush2.bf16.msra.mxu0 0
        %2462 = vmatprep.subr.bf16.mxu0 0
        %2463 = vmatpush2.bf16.msra.mxu0 0
        %2464 = vmatprep.subr.bf16.mxu0 0
        %2465 = vmatpush2.bf16.msra.mxu0 0
        %2466 = vmatprep.subr.bf16.mxu0 0
        %2467 = vmatpush2.bf16.msra.mxu0 0
        %2468 = vmatprep.subr.bf16.mxu0 0
        %2469 = vmatpush2.bf16.msra.mxu0 0
        %2470 = vmatprep.subr.bf16.mxu0 0
        %2471 = vmatpush2.bf16.msra.mxu0 0
        %2472 = vmatprep.mubr.bf16.mxu0 0
        %2473 = vmatmul.mubr.bf16.gmra.mxu0 %v2438
        %v2474 = vpop.f32.mrf.mxu0
        %v2475 = vadd.f32 %v2420, %v2474
        %v2476 = vpop.f32.mrf.mxu0
        %v2477 = vpop.f32.mrf.mxu0
        %v2478 = vpop.f32.mrf.mxu0
        %2479 = vdwg.mxu0
        %2480 = vrot.lane.b32.xlu0 %v2146, 64
        %v2481 = vpop.permute.xlu0 %2480
        %2482 = vrot.lane.b32.xlu0 %v2147, 64
        %v2483 = vpop.permute.xlu0 %2482
        %v2485 = vsel %vm826, %v2481, 0
        %v2488 = vsel %vm826, %v2483, 0
        %2490 = vmatprep.subr.bf16.mxu0 0
        %2491 = vmatpush1.bf16.xpose.msra.mxu0 0
        %2492 = vmatprep.subr.bf16.mxu0 0
        %2493 = vmatpush1.bf16.xpose.msra.mxu0 0
        %2494 = vmatprep.subr.bf16.mxu0 0
        %2495 = vmatpush1.bf16.xpose.msra.mxu0 0
        %2496 = vmatprep.subr.bf16.mxu0 0
        %2497 = vmatpush1.bf16.xpose.msra.mxu0 0
        %2498 = vmatprep.subr.bf16.mxu0 0
        %2499 = vmatpush1.bf16.xpose.msra.mxu0 0
        %2500 = vmatprep.subr.bf16.mxu0 0
        %2501 = vmatpush1.bf16.xpose.msra.mxu0 0
        %2502 = vmatprep.subr.bf16.mxu0 0
        %2503 = vmatpush1.bf16.xpose.msra.mxu0 0
        %2504 = vmatprep.subr.bf16.mxu0 0
        %2505 = vmatpush1.bf16.xpose.msra.mxu0 %v2488
        %2506 = vmatprep.subr.bf16.mxu0 0
        %2507 = vmatpush2.bf16.xpose.msra.mxu0 0
        %2508 = vmatprep.subr.bf16.mxu0 0
        %2509 = vmatpush2.bf16.xpose.msra.mxu0 0
        %2510 = vmatprep.subr.bf16.mxu0 0
        %2511 = vmatpush2.bf16.xpose.msra.mxu0 0
        %2512 = vmatprep.subr.bf16.mxu0 0
        %2513 = vmatpush2.bf16.xpose.msra.mxu0 0
        %2514 = vmatprep.subr.bf16.mxu0 0
        %2515 = vmatpush2.bf16.xpose.msra.mxu0 0
        %2516 = vmatprep.subr.bf16.mxu0 0
        %2517 = vmatpush2.bf16.xpose.msra.mxu0 0
        %2518 = vmatprep.subr.bf16.mxu0 0
        %2519 = vmatpush2.bf16.xpose.msra.mxu0 0
        %2520 = vmatprep.subr.bf16.mxu0 0
        %2521 = vmatpush2.bf16.xpose.msra.mxu0 0
        %2522 = vmatprep.mubr.bf16.mxu0 0
        %2523 = vmatmul.mubr.bf16.gmra.mxu0 %v2485
        %v2524 = vpop.f32.mrf.mxu0
        %v2525 = vadd.f32 0.0, %v2524
        %v2526 = vpop.f32.mrf.mxu0
        %v2527 = vpop.f32.mrf.mxu0
        %v2528 = vpop.f32.mrf.mxu0
        %2529 = vdwg.mxu0
        %v2530 = vmul.f32 %v2525, 0.17677669
        %v2531 = vsel %vm874, %v2530, -inf
        %2532 = vmax.xlane.f32.xlu0 %v2531
        %v2533 = vpop.xlane.xlu0 %2532
        %v2534 = vsub.f32 %v2530, %v2533
        %v2535 = vmul.f32 %v2534, 1.442695
        %v2536 = vpow.pop %v2535
        %v2537 = vsel %vm874, %v2536, 0.0
        %2538 = vadd.xlane.f32.xlu0 %v2537
        %v2539 = vpop.xlane.xlu0 %2538
        %v2540 = vrcp.pop %v2539
        %v2541 = vmul.f32 %v2536, %v2540
        %v2542 = vpack.c.bf16 %v2541, %v2541
        %2543 = vrot.lane.b32.xlu0 %v2148, 64
        %v2544 = vpop.permute.xlu0 %2543
        %v2546 = vsel %vm874, %v2542, 0
        %v2549 = vsel %vm890, %v2544, 0
        %2551 = vmatprep.subr.bf16.mxu0 0
        %2552 = vmatpush1.bf16.msra.mxu0 0
        %2553 = vmatprep.subr.bf16.mxu0 0
        %2554 = vmatpush1.bf16.msra.mxu0 0
        %2555 = vmatprep.subr.bf16.mxu0 0
        %2556 = vmatpush1.bf16.msra.mxu0 0
        %2557 = vmatprep.subr.bf16.mxu0 0
        %2558 = vmatpush1.bf16.msra.mxu0 0
        %2559 = vmatprep.subr.bf16.mxu0 0
        %2560 = vmatpush1.bf16.msra.mxu0 0
        %2561 = vmatprep.subr.bf16.mxu0 0
        %2562 = vmatpush1.bf16.msra.mxu0 0
        %2563 = vmatprep.subr.bf16.mxu0 0
        %2564 = vmatpush1.bf16.msra.mxu0 0
        %2565 = vmatprep.subr.bf16.mxu0 0
        %2566 = vmatpush1.bf16.msra.mxu0 %v2549
        %2567 = vmatprep.subr.bf16.mxu0 0
        %2568 = vmatpush2.bf16.msra.mxu0 0
        %2569 = vmatprep.subr.bf16.mxu0 0
        %2570 = vmatpush2.bf16.msra.mxu0 0
        %2571 = vmatprep.subr.bf16.mxu0 0
        %2572 = vmatpush2.bf16.msra.mxu0 0
        %2573 = vmatprep.subr.bf16.mxu0 0
        %2574 = vmatpush2.bf16.msra.mxu0 0
        %2575 = vmatprep.subr.bf16.mxu0 0
        %2576 = vmatpush2.bf16.msra.mxu0 0
        %2577 = vmatprep.subr.bf16.mxu0 0
        %2578 = vmatpush2.bf16.msra.mxu0 0
        %2579 = vmatprep.subr.bf16.mxu0 0
        %2580 = vmatpush2.bf16.msra.mxu0 0
        %2581 = vmatprep.subr.bf16.mxu0 0
        %2582 = vmatpush2.bf16.msra.mxu0 0
        %2583 = vmatprep.mubr.bf16.mxu0 0
        %2584 = vmatmul.mubr.bf16.gmra.mxu0 %v2546
        %v2585 = vpop.f32.mrf.mxu0
        %v2586 = vadd.f32 0.0, %v2585
        %v2587 = vpop.f32.mrf.mxu0
        %v2588 = vpop.f32.mrf.mxu0
        %v2589 = vpop.f32.mrf.mxu0
        %2590 = vdwg.mxu0
        %v2591 = vpack.c.bf16 %v2586, %v2586
        %v2596 = vunpack.c.l.b16 %v1862
        %v2597 = vunpack.c.l.b16 %v1863
        %v2598 = vunpack.c.l.b16 %v1864
        %v2599 = vunpack.c.l.b16 %v1865
        %v2600 = vpack.c.b16 %v2597, %v2596
        %v2601 = vpack.c.b16 %v2599, %v2598
        %v2605 = vsel %vm826, %v2591, 0
        %2607 = vmatprep.subr.bf16.mxu0 0
        %2608 = vmatpush1.bf16.msra.mxu0 0
        %2609 = vmatprep.subr.bf16.mxu0 0
        %2610 = vmatpush1.bf16.msra.mxu0 0
        %2611 = vmatprep.subr.bf16.mxu0 0
        %2612 = vmatpush1.bf16.msra.mxu0 0
        %2613 = vmatprep.subr.bf16.mxu0 0
        %2614 = vmatpush1.bf16.msra.mxu0 0
        %2615 = vmatprep.subr.bf16.mxu0 0
        %2616 = vmatpush1.bf16.msra.mxu0 0
        %2617 = vmatprep.subr.bf16.mxu0 0
        %2618 = vmatpush1.bf16.msra.mxu0 0
        %2619 = vmatprep.subr.bf16.mxu0 0
        %2620 = vmatpush1.bf16.msra.mxu0 %v2601
        %2621 = vmatprep.subr.bf16.mxu0 0
        %2622 = vmatpush1.bf16.msra.mxu0 %v2600
        %2623 = vmatprep.subr.bf16.mxu0 0
        %2624 = vmatpush2.bf16.msra.mxu0 0
        %2625 = vmatprep.subr.bf16.mxu0 0
        %2626 = vmatpush2.bf16.msra.mxu0 0
        %2627 = vmatprep.subr.bf16.mxu0 0
        %2628 = vmatpush2.bf16.msra.mxu0 0
        %2629 = vmatprep.subr.bf16.mxu0 0
        %2630 = vmatpush2.bf16.msra.mxu0 0
        %2631 = vmatprep.subr.bf16.mxu0 0
        %2632 = vmatpush2.bf16.msra.mxu0 0
        %2633 = vmatprep.subr.bf16.mxu0 0
        %2634 = vmatpush2.bf16.msra.mxu0 0
        %2635 = vmatprep.subr.bf16.mxu0 0
        %2636 = vmatpush2.bf16.msra.mxu0 0
        %2637 = vmatprep.subr.bf16.mxu0 0
        %2638 = vmatpush2.bf16.msra.mxu0 0
        %2639 = vmatprep.mubr.bf16.mxu0 0
        %2640 = vmatmul.mubr.bf16.gmra.mxu0 %v2605
        %v2641 = vpop.f32.mrf.mxu0
        %v2642 = vadd.f32 0.0, %v2641
        %v2643 = vpop.f32.mrf.mxu0
        %v2644 = vpop.f32.mrf.mxu0
        %v2645 = vpop.f32.mrf.mxu0
        %2646 = vdwg.mxu0
        %v2647 = vadd.f32 %v2475, %v2642
        %2648 = vrot.lane.b32.xlu0 %v2146, 32
        %v2649 = vpop.permute.xlu0 %2648
        %2650 = vrot.lane.b32.xlu0 %v2147, 32
        %v2651 = vpop.permute.xlu0 %2650
        %v2653 = vsel %vm826, %v2649, 0
        %v2656 = vsel %vm826, %v2651, 0
        %2658 = vmatprep.subr.bf16.mxu0 0
        %2659 = vmatpush1.bf16.xpose.msra.mxu0 0
        %2660 = vmatprep.subr.bf16.mxu0 0
        %2661 = vmatpush1.bf16.xpose.msra.mxu0 0
        %2662 = vmatprep.subr.bf16.mxu0 0
        %2663 = vmatpush1.bf16.xpose.msra.mxu0 0
        %2664 = vmatprep.subr.bf16.mxu0 0
        %2665 = vmatpush1.bf16.xpose.msra.mxu0 0
        %2666 = vmatprep.subr.bf16.mxu0 0
        %2667 = vmatpush1.bf16.xpose.msra.mxu0 0
        %2668 = vmatprep.subr.bf16.mxu0 0
        %2669 = vmatpush1.bf16.xpose.msra.mxu0 0
        %2670 = vmatprep.subr.bf16.mxu0 0
        %2671 = vmatpush1.bf16.xpose.msra.mxu0 0
        %2672 = vmatprep.subr.bf16.mxu0 0
        %2673 = vmatpush1.bf16.xpose.msra.mxu0 %v2656
        %2674 = vmatprep.subr.bf16.mxu0 0
        %2675 = vmatpush2.bf16.xpose.msra.mxu0 0
        %2676 = vmatprep.subr.bf16.mxu0 0
        %2677 = vmatpush2.bf16.xpose.msra.mxu0 0
        %2678 = vmatprep.subr.bf16.mxu0 0
        %2679 = vmatpush2.bf16.xpose.msra.mxu0 0
        %2680 = vmatprep.subr.bf16.mxu0 0
        %2681 = vmatpush2.bf16.xpose.msra.mxu0 0
        %2682 = vmatprep.subr.bf16.mxu0 0
        %2683 = vmatpush2.bf16.xpose.msra.mxu0 0
        %2684 = vmatprep.subr.bf16.mxu0 0
        %2685 = vmatpush2.bf16.xpose.msra.mxu0 0
        %2686 = vmatprep.subr.bf16.mxu0 0
        %2687 = vmatpush2.bf16.xpose.msra.mxu0 0
        %2688 = vmatprep.subr.bf16.mxu0 0
        %2689 = vmatpush2.bf16.xpose.msra.mxu0 0
        %2690 = vmatprep.mubr.bf16.mxu0 0
        %2691 = vmatmul.mubr.bf16.gmra.mxu0 %v2653
        %v2692 = vpop.f32.mrf.mxu0
        %v2693 = vadd.f32 0.0, %v2692
        %v2694 = vpop.f32.mrf.mxu0
        %v2695 = vpop.f32.mrf.mxu0
        %v2696 = vpop.f32.mrf.mxu0
        %2697 = vdwg.mxu0
        %v2698 = vmul.f32 %v2693, 0.17677669
        %v2699 = vsel %vm874, %v2698, -inf
        %2700 = vmax.xlane.f32.xlu0 %v2699
        %v2701 = vpop.xlane.xlu0 %2700
        %v2702 = vsub.f32 %v2698, %v2701
        %v2703 = vmul.f32 %v2702, 1.442695
        %v2704 = vpow.pop %v2703
        %v2705 = vsel %vm874, %v2704, 0.0
        %2706 = vadd.xlane.f32.xlu0 %v2705
        %v2707 = vpop.xlane.xlu0 %2706
        %v2708 = vrcp.pop %v2707
        %v2709 = vmul.f32 %v2704, %v2708
        %v2710 = vpack.c.bf16 %v2709, %v2709
        %2711 = vrot.lane.b32.xlu0 %v2148, 32
        %v2712 = vpop.permute.xlu0 %2711
        %v2714 = vsel %vm874, %v2710, 0
        %v2717 = vsel %vm890, %v2712, 0
        %2719 = vmatprep.subr.bf16.mxu0 0
        %2720 = vmatpush1.bf16.msra.mxu0 0
        %2721 = vmatprep.subr.bf16.mxu0 0
        %2722 = vmatpush1.bf16.msra.mxu0 0
        %2723 = vmatprep.subr.bf16.mxu0 0
        %2724 = vmatpush1.bf16.msra.mxu0 0
        %2725 = vmatprep.subr.bf16.mxu0 0
        %2726 = vmatpush1.bf16.msra.mxu0 0
        %2727 = vmatprep.subr.bf16.mxu0 0
        %2728 = vmatpush1.bf16.msra.mxu0 0
        %2729 = vmatprep.subr.bf16.mxu0 0
        %2730 = vmatpush1.bf16.msra.mxu0 0
        %2731 = vmatprep.subr.bf16.mxu0 0
        %2732 = vmatpush1.bf16.msra.mxu0 0
        %2733 = vmatprep.subr.bf16.mxu0 0
        %2734 = vmatpush1.bf16.msra.mxu0 %v2717
        %2735 = vmatprep.subr.bf16.mxu0 0
        %2736 = vmatpush2.bf16.msra.mxu0 0
        %2737 = vmatprep.subr.bf16.mxu0 0
        %2738 = vmatpush2.bf16.msra.mxu0 0
        %2739 = vmatprep.subr.bf16.mxu0 0
        %2740 = vmatpush2.bf16.msra.mxu0 0
        %2741 = vmatprep.subr.bf16.mxu0 0
        %2742 = vmatpush2.bf16.msra.mxu0 0
        %2743 = vmatprep.subr.bf16.mxu0 0
        %2744 = vmatpush2.bf16.msra.mxu0 0
        %2745 = vmatprep.subr.bf16.mxu0 0
        %2746 = vmatpush2.bf16.msra.mxu0 0
        %2747 = vmatprep.subr.bf16.mxu0 0
        %2748 = vmatpush2.bf16.msra.mxu0 0
        %2749 = vmatprep.subr.bf16.mxu0 0
        %2750 = vmatpush2.bf16.msra.mxu0 0
        %2751 = vmatprep.mubr.bf16.mxu0 0
        %2752 = vmatmul.mubr.bf16.gmra.mxu0 %v2714
        %v2753 = vpop.f32.mrf.mxu0
        %v2754 = vadd.f32 0.0, %v2753
        %v2755 = vpop.f32.mrf.mxu0
        %v2756 = vpop.f32.mrf.mxu0
        %v2757 = vpop.f32.mrf.mxu0
        %2758 = vdwg.mxu0
        %v2759 = vpack.c.bf16 %v2754, %v2754
        %v2764 = vunpack.c.l.b16 %v1866
        %v2765 = vunpack.c.l.b16 %v1867
        %v2766 = vunpack.c.l.b16 %v1868
        %v2767 = vunpack.c.l.b16 %v1869
        %v2768 = vpack.c.b16 %v2765, %v2764
        %v2769 = vpack.c.b16 %v2767, %v2766
        %v2773 = vsel %vm826, %v2759, 0
        %2775 = vmatprep.subr.bf16.mxu0 0
        %2776 = vmatpush1.bf16.msra.mxu0 0
        %2777 = vmatprep.subr.bf16.mxu0 0
        %2778 = vmatpush1.bf16.msra.mxu0 0
        %2779 = vmatprep.subr.bf16.mxu0 0
        %2780 = vmatpush1.bf16.msra.mxu0 0
        %2781 = vmatprep.subr.bf16.mxu0 0
        %2782 = vmatpush1.bf16.msra.mxu0 0
        %2783 = vmatprep.subr.bf16.mxu0 0
        %2784 = vmatpush1.bf16.msra.mxu0 0
        %2785 = vmatprep.subr.bf16.mxu0 0
        %2786 = vmatpush1.bf16.msra.mxu0 0
        %2787 = vmatprep.subr.bf16.mxu0 0
        %2788 = vmatpush1.bf16.msra.mxu0 %v2769
        %2789 = vmatprep.subr.bf16.mxu0 0
        %2790 = vmatpush1.bf16.msra.mxu0 %v2768
        %2791 = vmatprep.subr.bf16.mxu0 0
        %2792 = vmatpush2.bf16.msra.mxu0 0
        %2793 = vmatprep.subr.bf16.mxu0 0
        %2794 = vmatpush2.bf16.msra.mxu0 0
        %2795 = vmatprep.subr.bf16.mxu0 0
        %2796 = vmatpush2.bf16.msra.mxu0 0
        %2797 = vmatprep.subr.bf16.mxu0 0
        %2798 = vmatpush2.bf16.msra.mxu0 0
        %2799 = vmatprep.subr.bf16.mxu0 0
        %2800 = vmatpush2.bf16.msra.mxu0 0
        %2801 = vmatprep.subr.bf16.mxu0 0
        %2802 = vmatpush2.bf16.msra.mxu0 0
        %2803 = vmatprep.subr.bf16.mxu0 0
        %2804 = vmatpush2.bf16.msra.mxu0 0
        %2805 = vmatprep.subr.bf16.mxu0 0
        %2806 = vmatpush2.bf16.msra.mxu0 0
        %2807 = vmatprep.mubr.bf16.mxu0 0
        %2808 = vmatmul.mubr.bf16.gmra.mxu0 %v2773
        %v2809 = vpop.f32.mrf.mxu0
        %v2810 = vadd.f32 0.0, %v2809
        %v2811 = vpop.f32.mrf.mxu0
        %v2812 = vpop.f32.mrf.mxu0
        %v2813 = vpop.f32.mrf.mxu0
        %2814 = vdwg.mxu0
        %v2815 = vadd.f32 %v2647, %v2810
        %v2816 = vlaneseq
        %v2817 = vshrl.u32 %v2816, 7
        %v2818 = vsub.s32 1, %v2817
        %v2819 = vrot.slane %v1921, %v2818
        %v2820 = vadd.f32 %v2815, %v2819
        %v2821 = vadd.f32 %v1819, %v2820
        %2822 = vadd.xlane.f32.xlu0 %v2821
        %v2823 = vpop.xlane.xlu0 %2822
        %v2824 = vmul.f32 %v2823, %v1504
        %v2825 = vsub.f32 %v2821, %v2824
        %v2826 = vmul.f32 %v2825, %v2825
        %2827 = vadd.xlane.f32.xlu0 %v2826
        %v2828 = vpop.xlane.xlu0 %2827
        %v2829 = vmul.f32 %v2828, %v1504
        %v2830 = vadd.f32 %v2829, 1e-05
        %v2831 = vrsqrt.pop %v2830
        %v2832 = vmul.f32 %v2825, %v2831
        %v2833 = vlaneseq
        %v2834 = vshrl.u32 %v2833, 7
        %v2835 = vsub.s32 4, %v2834
        %v2836 = vrot.slane %v1921, %v2835
        %v2837 = vmul.f32 %v2832, %v2836
        %v2838 = vlaneseq
        %v2839 = vshrl.u32 %v2838, 7
        %v2840 = vsub.s32 5, %v2839
        %v2841 = vrot.slane %v1921, %v2840
        %v2842 = vadd.f32 %v2837, %v2841
        %v2843 = vpack.c.bf16 %v2842, %v2842
        %v2844 = vlaneseq
        %v2845 = vshrl.u32 %v2844, 7
        %v2846 = vsub.s32 2, %v2845
        %v2847 = vrot.slane %v1921, %v2846
        %v2848 = vlaneseq
        %v2849 = vshrl.u32 %v2848, 7
        %v2850 = vsub.s32 2, %v2849
        %v2851 = vrot.slane %v1922, %v2850
        %v2868 = vunpack.c.l.b16 %v1871
        %v2869 = vunpack.c.h.b16 %v1871
        %v2870 = vunpack.c.l.b16 %v1872
        %v2871 = vunpack.c.h.b16 %v1872
        %v2872 = vunpack.c.l.b16 %v1873
        %v2873 = vunpack.c.h.b16 %v1873
        %v2874 = vunpack.c.l.b16 %v1874
        %v2875 = vunpack.c.h.b16 %v1874
        %v2876 = vunpack.c.l.b16 %v1875
        %v2877 = vunpack.c.h.b16 %v1875
        %v2878 = vunpack.c.l.b16 %v1876
        %v2879 = vunpack.c.h.b16 %v1876
        %v2880 = vunpack.c.l.b16 %v1877
        %v2881 = vunpack.c.h.b16 %v1877
        %v2882 = vunpack.c.l.b16 %v1878
        %v2883 = vunpack.c.h.b16 %v1878
        %v2884 = vunpack.c.l.b16 %v1879
        %v2885 = vunpack.c.h.b16 %v1879
        %v2886 = vunpack.c.l.b16 %v1880
        %v2887 = vunpack.c.h.b16 %v1880
        %v2888 = vunpack.c.l.b16 %v1881
        %v2889 = vunpack.c.h.b16 %v1881
        %v2890 = vunpack.c.l.b16 %v1882
        %v2891 = vunpack.c.h.b16 %v1882
        %v2892 = vunpack.c.l.b16 %v1883
        %v2893 = vunpack.c.h.b16 %v1883
        %v2894 = vunpack.c.l.b16 %v1884
        %v2895 = vunpack.c.h.b16 %v1884
        %v2896 = vunpack.c.l.b16 %v1885
        %v2897 = vunpack.c.h.b16 %v1885
        %v2898 = vunpack.c.l.b16 %v1886
        %v2899 = vunpack.c.h.b16 %v1886
        %v2900 = vpack.c.b16 %v2870, %v2868
        %v2901 = vpack.c.b16 %v2871, %v2869
        %v2902 = vpack.c.b16 %v2874, %v2872
        %v2903 = vpack.c.b16 %v2875, %v2873
        %v2904 = vpack.c.b16 %v2878, %v2876
        %v2905 = vpack.c.b16 %v2879, %v2877
        %v2906 = vpack.c.b16 %v2882, %v2880
        %v2907 = vpack.c.b16 %v2883, %v2881
        %v2908 = vpack.c.b16 %v2886, %v2884
        %v2909 = vpack.c.b16 %v2887, %v2885
        %v2910 = vpack.c.b16 %v2890, %v2888
        %v2911 = vpack.c.b16 %v2891, %v2889
        %v2912 = vpack.c.b16 %v2894, %v2892
        %v2913 = vpack.c.b16 %v2895, %v2893
        %v2914 = vpack.c.b16 %v2898, %v2896
        %v2915 = vpack.c.b16 %v2899, %v2897
        %2932 = vmatprep.subr.bf16.mxu0 %v2915
        %2933 = vmatpush1.bf16.msra.mxu0 %v2914
        %2934 = vmatprep.subr.bf16.mxu0 %v2913
        %2935 = vmatpush1.bf16.msra.mxu0 %v2912
        %2936 = vmatprep.subr.bf16.mxu0 %v2911
        %2937 = vmatpush1.bf16.msra.mxu0 %v2910
        %2938 = vmatprep.subr.bf16.mxu0 %v2909
        %2939 = vmatpush1.bf16.msra.mxu0 %v2908
        %2940 = vmatprep.subr.bf16.mxu0 %v2907
        %2941 = vmatpush1.bf16.msra.mxu0 %v2906
        %2942 = vmatprep.subr.bf16.mxu0 %v2905
        %2943 = vmatpush1.bf16.msra.mxu0 %v2904
        %2944 = vmatprep.subr.bf16.mxu0 %v2903
        %2945 = vmatpush1.bf16.msra.mxu0 %v2902
        %2946 = vmatprep.subr.bf16.mxu0 %v2901
        %2947 = vmatpush1.bf16.msra.mxu0 %v2900
        %2948 = vmatprep.subr.bf16.mxu0 0
        %2949 = vmatpush2.bf16.msra.mxu0 0
        %2950 = vmatprep.subr.bf16.mxu0 0
        %2951 = vmatpush2.bf16.msra.mxu0 0
        %2952 = vmatprep.subr.bf16.mxu0 0
        %2953 = vmatpush2.bf16.msra.mxu0 0
        %2954 = vmatprep.subr.bf16.mxu0 0
        %2955 = vmatpush2.bf16.msra.mxu0 0
        %2956 = vmatprep.subr.bf16.mxu0 0
        %2957 = vmatpush2.bf16.msra.mxu0 0
        %2958 = vmatprep.subr.bf16.mxu0 0
        %2959 = vmatpush2.bf16.msra.mxu0 0
        %2960 = vmatprep.subr.bf16.mxu0 0
        %2961 = vmatpush2.bf16.msra.mxu0 0
        %2962 = vmatprep.subr.bf16.mxu0 0
        %2963 = vmatpush2.bf16.msra.mxu0 0
        %2964 = vmatprep.mubr.bf16.mxu0 0
        %2965 = vmatmul.mubr.bf16.gmra.mxu0 %v2843
        %v2966 = vpop.f32.mrf.mxu0
        %v2967 = vadd.f32 %v2847, %v2966
        %v2968 = vpop.f32.mrf.mxu0
        %v2969 = vadd.f32 %v2851, %v2968
        %v2970 = vpop.f32.mrf.mxu0
        %v2971 = vpop.f32.mrf.mxu0
        %2972 = vdwg.mxu0
        %v2973 = vmax.f32 %v2967, 0.0
        %v2974 = vmax.f32 %v2969, 0.0
        %v2975 = vpack.c.bf16 %v2973, %v2973
        %v2976 = vpack.c.bf16 %v2974, %v2974
        %v2977 = vlaneseq
        %v2978 = vshrl.u32 %v2977, 7
        %v2979 = vsub.s32 3, %v2978
        %v2980 = vrot.slane %v1921, %v2979
        %v3013 = vunpack.c.l.b16 %v1888
        %v3014 = vunpack.c.l.b16 %v1889
        %v3015 = vunpack.c.l.b16 %v1890
        %v3016 = vunpack.c.l.b16 %v1891
        %v3017 = vunpack.c.l.b16 %v1892
        %v3018 = vunpack.c.l.b16 %v1893
        %v3019 = vunpack.c.l.b16 %v1894
        %v3020 = vunpack.c.l.b16 %v1895
        %v3021 = vunpack.c.l.b16 %v1896
        %v3022 = vunpack.c.l.b16 %v1897
        %v3023 = vunpack.c.l.b16 %v1898
        %v3024 = vunpack.c.l.b16 %v1899
        %v3025 = vunpack.c.l.b16 %v1900
        %v3026 = vunpack.c.l.b16 %v1901
        %v3027 = vunpack.c.l.b16 %v1902
        %v3028 = vunpack.c.l.b16 %v1903
        %v3029 = vunpack.c.l.b16 %v1904
        %v3030 = vunpack.c.l.b16 %v1905
        %v3031 = vunpack.c.l.b16 %v1906
        %v3032 = vunpack.c.l.b16 %v1907
        %v3033 = vunpack.c.l.b16 %v1908
        %v3034 = vunpack.c.l.b16 %v1909
        %v3035 = vunpack.c.l.b16 %v1910
        %v3036 = vunpack.c.l.b16 %v1911
        %v3037 = vunpack.c.l.b16 %v1912
        %v3038 = vunpack.c.l.b16 %v1913
        %v3039 = vunpack.c.l.b16 %v1914
        %v3040 = vunpack.c.l.b16 %v1915
        %v3041 = vunpack.c.l.b16 %v1916
        %v3042 = vunpack.c.l.b16 %v1917
        %v3043 = vunpack.c.l.b16 %v1918
        %v3044 = vunpack.c.l.b16 %v1919
        %v3045 = vpack.c.b16 %v3014, %v3013
        %v3046 = vpack.c.b16 %v3016, %v3015
        %v3047 = vpack.c.b16 %v3018, %v3017
        %v3048 = vpack.c.b16 %v3020, %v3019
        %v3049 = vpack.c.b16 %v3022, %v3021
        %v3050 = vpack.c.b16 %v3024, %v3023
        %v3051 = vpack.c.b16 %v3026, %v3025
        %v3052 = vpack.c.b16 %v3028, %v3027
        %v3053 = vpack.c.b16 %v3030, %v3029
        %v3054 = vpack.c.b16 %v3032, %v3031
        %v3055 = vpack.c.b16 %v3034, %v3033
        %v3056 = vpack.c.b16 %v3036, %v3035
        %v3057 = vpack.c.b16 %v3038, %v3037
        %v3058 = vpack.c.b16 %v3040, %v3039
        %v3059 = vpack.c.b16 %v3042, %v3041
        %v3060 = vpack.c.b16 %v3044, %v3043
        %3077 = vmatprep.subr.bf16.mxu0 0
        %3078 = vmatpush1.bf16.msra.mxu0 %v3052
        %3079 = vmatprep.subr.bf16.mxu0 0
        %3080 = vmatpush1.bf16.msra.mxu0 %v3051
        %3081 = vmatprep.subr.bf16.mxu0 0
        %3082 = vmatpush1.bf16.msra.mxu0 %v3050
        %3083 = vmatprep.subr.bf16.mxu0 0
        %3084 = vmatpush1.bf16.msra.mxu0 %v3049
        %3085 = vmatprep.subr.bf16.mxu0 0
        %3086 = vmatpush1.bf16.msra.mxu0 %v3048
        %3087 = vmatprep.subr.bf16.mxu0 0
        %3088 = vmatpush1.bf16.msra.mxu0 %v3047
        %3089 = vmatprep.subr.bf16.mxu0 0
        %3090 = vmatpush1.bf16.msra.mxu0 %v3046
        %3091 = vmatprep.subr.bf16.mxu0 0
        %3092 = vmatpush1.bf16.msra.mxu0 %v3045
        %3093 = vmatprep.subr.bf16.mxu0 0
        %3094 = vmatpush2.bf16.msra.mxu0 %v3060
        %3095 = vmatprep.subr.bf16.mxu0 0
        %3096 = vmatpush2.bf16.msra.mxu0 %v3059
        %3097 = vmatprep.subr.bf16.mxu0 0
        %3098 = vmatpush2.bf16.msra.mxu0 %v3058
        %3099 = vmatprep.subr.bf16.mxu0 0
        %3100 = vmatpush2.bf16.msra.mxu0 %v3057
        %3101 = vmatprep.subr.bf16.mxu0 0
        %3102 = vmatpush2.bf16.msra.mxu0 %v3056
        %3103 = vmatprep.subr.bf16.mxu0 0
        %3104 = vmatpush2.bf16.msra.mxu0 %v3055
        %3105 = vmatprep.subr.bf16.mxu0 0
        %3106 = vmatpush2.bf16.msra.mxu0 %v3054
        %3107 = vmatprep.subr.bf16.mxu0 0
        %3108 = vmatpush2.bf16.msra.mxu0 %v3053
        %3109 = vmatprep.mubr.bf16.mxu0 %v2976
        %3110 = vmatmul.mubr.bf16.gmra.mxu0 %v2975
        %v3111 = vpop.f32.mrf.mxu0
        %v3112 = vadd.f32 %v2980, %v3111
        %v3113 = vpop.f32.mrf.mxu0
        %v3114 = vpop.f32.mrf.mxu0
        %v3115 = vpop.f32.mrf.mxu0
        %3116 = vdwg.mxu0
        %v3117 = vadd.f32 %v2842, %v3112
        %3118 = vadd.xlane.f32.xlu0 %v3117
        %v3119 = vpop.xlane.xlu0 %3118
        %v3120 = vmul.f32 %v3119, %v1504
        %v3121 = vsub.f32 %v3117, %v3120
        %v3122 = vmul.f32 %v3121, %v3121
        %3123 = vadd.xlane.f32.xlu0 %v3122
        %v3124 = vpop.xlane.xlu0 %3123
        %v3125 = vmul.f32 %v3124, %v1504
        %v3126 = vadd.f32 %v3125, 1e-05
        %v3127 = vrsqrt.pop %v3126
        %v3128 = vmul.f32 %v3121, %v3127
        %v3129 = vlaneseq
        %v3130 = vshrl.u32 %v3129, 7
        %v3131 = vsub.s32 6, %v3130
        %v3132 = vrot.slane %v1921, %v3131
        %v3133 = vmul.f32 %v3128, %v3132
        %v3134 = vlaneseq
        %v3135 = vshrl.u32 %v3134, 7
        %v3136 = vsub.s32 7, %v3135
        %v3137 = vrot.slane %v1921, %v3136
        %v3138 = vadd.f32 %v3133, %v3137
        %v3139 = vrot.slane %v3138, 4
        %v3140 = vadd.f32 %v3138, %v3139
        %v3141 = vrot.slane %v3140, 2
        %v3142 = vadd.f32 %v3140, %v3141
        %v3143 = vrot.slane %v3142, 1
        %v3144 = vadd.f32 %v3142, %v3143
        %v3145 = vrcp.pop 8.0
        %v3146 = vmul.f32 %v3144, %v3145
        %v3147 = vld [vmem:[%s7] sm:$0xff]
        %v3148 = vmul.f32 %v3146, %v3147
        %vm3149 = vcmask 1040384
        %v3150 = vsel %vm3149, %v3148, 0.0
        %3151 = vadd.xlane.f32.xlu0 %v3150
        %v3152 = vpop.xlane.xlu0 %3151
        %v3154 = vrot.slane %v3147, 1
        %v3156 = vadd.f32 %v3152, %v3154
        %v3157 = vxor.u32 %v3156, 2147483648
        %v3158 = vmul.f32 %v3157, 1.442695
        %v3159 = vpow.pop %v3158
        %v3160 = vadd.f32 %v3159, 1.0
        %v3161 = vrcp.pop %v3160
        %v3162 = vmul.f32 1.0, %v3161
        %3164 = vset.pattern.permute.xlu0 0
        %3165 = vperm.xlu0 %3164, %v3162
        %v3166 = vpop.permute.xlu0 %3165
        %3168 = vst [vmem:[%s386] sm:$0x1] %v3166
        %p3169 = scmp.lt.s32.totalorder %s23, 1
        %s3170 = scalar_select %p3169, %s23, 1
        %s3171 = scalar_lea.vmem %s8, %s3170
        // Predicated region
        $region77: #{transformer_classifier_forward.1} parent=51 // pred_check
          %p3172 = pneg %p214
        $region78: #{transformer_classifier_forward.1} parent=51 // pred_check_branch
          %3174 = sbr.rel (%p3172) target = $region80
        $region79: #{transformer_classifier_forward.1} parent=51 // pred_region
          _
        $region80: #{transformer_classifier_forward.1} parent=51 // pred_fallthru
          _
      $region52: #{transformer_classifier_forward.1} parent=5 // pred_fallthru
        _
      %p3175 = scmp.le.s32.totalorder 2, %s18
      // Predicated region
      $region81: #{transformer_classifier_forward.1} parent=5 // pred_check
        %p3176 = pneg %p3175
      $region82: #{transformer_classifier_forward.1} parent=5 // pred_check_branch
        %3178 = sbr.rel (%p3176) target = $region84
      $region83: #{transformer_classifier_forward.1} parent=5 // pred_region
        %s3179 = ssub.s32 %s18, 2
        // Predicated region
        $region85: #{transformer_classifier_forward.1} parent=83 // pred_check
          %p3180 = pneg %p220
        $region86: #{transformer_classifier_forward.1} parent=83 // pred_check_branch
          %3182 = sbr.rel (%p3180) target = $region88
        $region87: #{transformer_classifier_forward.1} parent=83 // pred_region
          %p3183 = scmp.lt.s32.totalorder %s24, 1
          %s3184 = scalar_select %p3183, %s24, 1
          %s3185 = scalar_lea.vmem %s8, %s3184
        $region88: #{transformer_classifier_forward.1} parent=83 // pred_fallthru
          _
      $region84: #{transformer_classifier_forward.1} parent=5 // pred_fallthru
        _
    $region6: #{transformer_classifier_forward.1} parent=1 // loop_footer
      %s22 = sadd.s32 1, %s18
    $region7: #{transformer_classifier_forward.1} parent=1 // loop_footer_branch
      %17 = sbr.rel target = $region3
    $region8: #{transformer_classifier_forward.1} parent=1 // loop_exit
      _
    %3186 = vsyncpa [#allocation3], 1
    %s3187 = scalar_lea.sflag [#allocation3], 1
    %3188 = vsyncpa %s3187, 1
    %3189 = vsyncpa [#allocation5], 1
    %3190 = vsyncpa [#allocation8], 1
    %3191 = vsyncpa [#allocation11], 1

</llo_original>
